<compile_context>
chip_gen: v5e
topology: v5e:2x2
jax: 0.10.0
libtpu: 0.0.40
codegen_flags: <defaults>
</compile_context>

<pallas_src>
import numpy as np

import jax
import jax.numpy as jnp
from jax.experimental import pallas as pl
from jax.experimental.pallas import tpu as pltpu

EPS = 1e-5

PACK = 2                     # extra time-packing factor
V = 64 // PACK               # packed rows of every activation (= 32)
X_PACK = 8 * PACK            # input time steps per packed row (= 16)
LANES = 128                  # padded lane width of all hidden activations
N_HIDDEN = 40
N_CLASSES = 2
CHUNK_ROWS = 256             # activation rows per conv matmul chunk


# ----------------------------------------------------------------------------
# Fused Pallas kernel factory (one grid step = Bp samples)
# ----------------------------------------------------------------------------
def _make_kernel(Bp):
    VC = max(1, CHUNK_ROWS // Bp)      # packed rows per chunk
    CH = VC * Bp                       # activation rows per chunk
    NCH = V // VC                      # chunks per conv layer
    assert V % VC == 0

    def kernel(x_ref, w1_ref, a1_ref, w2_ref, a2_ref, w3_ref, a3_ref,
               w1h_ref, b1h_ref, w2h_ref, b2h_ref, o_ref, bufa, bufb):
        f32 = jnp.float32

        # Zero the Bp boundary rows on each side of the conv3 input scratch.
        # Done every step (cheap: 2*Bp rows) so correctness never depends on
        # which core / which grid step touched the scratch first.
        zrow = jnp.zeros((Bp, LANES), f32)
        bufb[pl.ds(0, Bp), :] = zrow
        bufb[pl.ds((V + 1) * Bp, Bp), :] = zrow

        # Broadcastable affine rows (bias / BN scale / BN shift), loaded once.
        b1 = a1_ref[0:1, :]; s1 = a1_ref[1:2, :]; t1 = a1_ref[2:3, :]
        b2 = a2_ref[0:1, :]; s2 = a2_ref[1:2, :]; t2 = a2_ref[2:3, :]
        s3 = a3_ref[0:1, :]; t3 = a3_ref[1:2, :]

        # ---- conv1 (1->15, k=5, s=2, p=2) + bias + ReLU + BN  -> bufa[0:V*Bp)
        # Input block already has Bp zero boundary rows on each side, so the
        # q = -1/0/+1 taps are reads at r, r+Bp, r+2*Bp (all 8-row aligned).
        for c in range(NCH):
            r = c * CH
            acc = jnp.dot(x_ref[0, pl.ds(r, CH), :], w1_ref[0],
                          preferred_element_type=f32)
            acc = acc + jnp.dot(x_ref[0, pl.ds(r + Bp, CH), :], w1_ref[1],
                                preferred_element_type=f32)
            acc = acc + jnp.dot(x_ref[0, pl.ds(r + 2 * Bp, CH), :], w1_ref[2],
                                preferred_element_type=f32)
            bufa[pl.ds(r, CH), :] = jnp.maximum(acc + b1, 0.0) * s1 + t1

        # ---- conv2 (15->30, k=2, s=2): single tap -> bufb[Bp : (V+1)*Bp)
        for c in range(NCH):
            r = c * CH
            h = jnp.dot(bufa[pl.ds(r, CH), :], w2_ref[...],
                        preferred_element_type=f32)
            bufb[pl.ds(Bp + r, CH), :] = jnp.maximum(h + b2, 0.0) * s2 + t2

        # ---- conv3 (30->60, k=5, s=2, p=2) + BN (bias folded, no ReLU)
        #      reads bufb (with zero boundaries), overwrites bufa.
        for c in range(NCH):
            r = c * CH
            acc = jnp.dot(bufb[pl.ds(r, CH), :], w3_ref[0],
                          preferred_element_type=f32)
            acc = acc + jnp.dot(bufb[pl.ds(r + Bp, CH), :], w3_ref[1],
                                preferred_element_type=f32)
            acc = acc + jnp.dot(bufb[pl.ds(r + 2 * Bp, CH), :], w3_ref[2],
                                preferred_element_type=f32)
            bufa[pl.ds(r, CH), :] = acc * s3 + t3

        # ---- head: Flatten + Linear(3840->40) + ReLU + Linear(40->2) + Softmax
        # The flatten never materializes: the 3840-long contraction is V taps
        # of (Bp,128)@(128,40) against the permuted FC1 weight, accumulated in
        # 4 independent partial sums.
        n_parts = 4
        per = V // n_parts
        parts = []
        for pidx in range(n_parts):
            v0 = pidx * per
            accp = jnp.dot(bufa[pl.ds(v0 * Bp, Bp), :], w1h_ref[v0],
                           preferred_element_type=f32)
            for v in range(v0 + 1, v0 + per):
                accp = accp + jnp.dot(bufa[pl.ds(v * Bp, Bp), :], w1h_ref[v],
                                      preferred_element_type=f32)
            parts.append(accp)
        hid = jnp.maximum(parts[0] + parts[1] + parts[2] + parts[3]
                          + b1h_ref[...], 0.0)
        # TODO(synk): nn.Dropout(p=0.2) is identity in eval mode; training-mode RNG masking omitted.
        logits = jnp.dot(hid, w2h_ref[...], preferred_element_type=f32) + b2h_ref[...]
        m = jnp.max(logits, axis=1, keepdims=True)
        e = jnp.exp(logits - m)
        o_ref[...] = e / jnp.sum(e, axis=1, keepdims=True)

    return kernel


# ----------------------------------------------------------------------------
# One-time weight preprocessing (hoisted out of the forward pass)
# ----------------------------------------------------------------------------
def _pack_conv_weight(w, stride, pad, pin, pout, in_lanes, out_lanes):
    """Fold a strided Conv1d into shifted matmuls on time-packed activations.

    Input packed as  A[v, r*Ci+ci] = a[v*pin + r, ci],
    output packed as Y[v, ro*Co+co] = y[v*pout + ro, co]; then
        Y[v] = sum_q A[v + q] @ W[q - qmin]   (out-of-range rows of A are zero)
    which the kernel evaluates with aligned shifted row slices.  Lane axes are
    zero-padded to in_lanes / out_lanes.
    """
    w = np.asarray(w, np.float32)                 # (Co, Ci, k), torch layout
    co, ci, k = w.shape
    assert stride * pout == pin
    assert in_lanes >= pin * ci and out_lanes >= pout * co
    qr = [(divmod(stride * ro + j - pad, pin), ro, j)
          for ro in range(pout) for j in range(k)]
    qmin = min(q for (q, _), _, _ in qr)
    qmax = max(q for (q, _), _, _ in qr)
    packed = np.zeros((qmax - qmin + 1, in_lanes, out_lanes), np.float32)
    for (q, r), ro, j in qr:
        packed[q - qmin, r * ci:(r + 1) * ci, ro * co:(ro + 1) * co] += w[:, :, j].T
    return packed, qmin, qmax


def _lane_tile(vec, reps, lanes=LANES):
    v = np.tile(np.asarray(vec, np.float32), reps)
    out = np.zeros((lanes,), np.float32)
    out[:v.shape[0]] = v
    return out


def prepare_params(p):
    """Run once: BN fold, conv-weight packing, FC permutation, lane padding."""
    def bn_fold(bn):
        gamma, beta, mean, var = (np.asarray(a, np.float32) for a in bn)
        scale = gamma / np.sqrt(var + EPS)
        return scale, beta - scale * mean

    s1, t1 = bn_fold(p["bn1"])
    s2, t2 = bn_fold(p["bn2"])
    s3, t3 = bn_fold(p["bn3"])
    b1 = np.asarray(p["b1"], np.float32)
    b2 = np.asarray(p["b2"], np.float32)
    b3 = np.asarray(p["b3"], np.float32)

    w1, q0, q1 = _pack_conv_weight(p["w1"], 2, 2, 8 * PACK, 4 * PACK, X_PACK, LANES)
    assert (q0, q1) == (-1, 1)
    w2, q0, q1 = _pack_conv_weight(p["w2"], 2, 0, 4 * PACK, 2 * PACK, LANES, LANES)
    assert (q0, q1) == (0, 0)
    w3, q0, q1 = _pack_conv_weight(p["w3"], 2, 2, 2 * PACK, PACK, LANES, LANES)
    assert (q0, q1) == (-1, 1)

    aff1 = np.stack([_lane_tile(b1, 4 * PACK), _lane_tile(s1, 4 * PACK),
                     _lane_tile(t1, 4 * PACK)])
    aff2 = np.stack([_lane_tile(b2, 2 * PACK), _lane_tile(s2, 2 * PACK),
                     _lane_tile(t2, 2 * PACK)])
    aff3 = np.stack([_lane_tile(s3, PACK), _lane_tile(s3 * b3 + t3, PACK)])

    # Linear(64*60 -> 40): permute so rows match the packed conv3 output
    # (PyTorch flatten feature = c*64 + t; packed rows hold t = PACK*v + r),
    # then pad the lane axis 120 -> 128 with zeros.
    w1h = (np.asarray(p["fcw1"], np.float32).reshape(N_HIDDEN, 60, 64)
           .transpose(2, 1, 0).reshape(V, PACK * 60, N_HIDDEN))
    w1h = np.pad(w1h, ((0, 0), (0, LANES - PACK * 60), (0, 0)))

    return {
        "w1": jnp.asarray(w1), "aff1": jnp.asarray(aff1),
        "w2": jnp.asarray(w2[0]), "aff2": jnp.asarray(aff2),
        "w3": jnp.asarray(w3), "aff3": jnp.asarray(aff3),
        "w1h": jnp.asarray(w1h),
        "b1h": jnp.asarray(np.asarray(p["fcb1"], np.float32).reshape(1, N_HIDDEN)),
        "w2h": jnp.asarray(np.asarray(p["fcw2"], np.float32).T),
        "b2h": jnp.asarray(np.asarray(p["fcb2"], np.float32).reshape(1, N_CLASSES)),
    }


# ----------------------------------------------------------------------------
# Forward wrapper: one pallas_call, grid over blocks of Bp samples
# ----------------------------------------------------------------------------
def _choose_bp(B, block_b):
    cap = min(max(8, block_b), 256, max(8, B))
    bp = 8
    while bp * 2 <= cap:
        bp *= 2
    return bp                    # power of two in [8, 256]


def crnn_cla_forward(x, pp, block_b=64):
    B = x.shape[0]
    assert x.shape[1:] == (1, 512)
    Bp = _choose_bp(B, block_b)
    G = -(-B // Bp)
    Bpad = G * Bp

    # Pack the raw input 16 time steps per row, lay it out sample-minor within
    # each packed-time row group (row = v*Bp + b), and add Bp zero boundary
    # rows on each side for the conv1 +-1 taps (cheap XLA reshape/pad; all
    # intermediates stay in VMEM).
    xp = x.reshape(B, V, X_PACK)
    if Bpad != B:
        xp = jnp.pad(xp, ((0, Bpad - B), (0, 0), (0, 0)))
    xp = xp.reshape(G, Bp, V, X_PACK).transpose(0, 2, 1, 3).reshape(G, V * Bp, X_PACK)
    xp = jnp.pad(xp, ((0, 0), (Bp, Bp), (0, 0)))
    rows_in = (V + 2) * Bp

    out = pl.pallas_call(
        _make_kernel(Bp),
        out_shape=jax.ShapeDtypeStruct((Bpad, N_CLASSES), jnp.float32),
        grid_spec=pltpu.PrefetchScalarGridSpec(
            num_scalar_prefetch=0,
            grid=(G,),
            in_specs=[
                pl.BlockSpec((1, rows_in, X_PACK), lambda g: (g, 0, 0)),
                pl.BlockSpec((3, X_PACK, LANES), lambda g: (0, 0, 0)),
                pl.BlockSpec((3, LANES), lambda g: (0, 0)),
                pl.BlockSpec((LANES, LANES), lambda g: (0, 0)),
                pl.BlockSpec((3, LANES), lambda g: (0, 0)),
                pl.BlockSpec((3, LANES, LANES), lambda g: (0, 0, 0)),
                pl.BlockSpec((2, LANES), lambda g: (0, 0)),
                pl.BlockSpec((V, LANES, N_HIDDEN), lambda g: (0, 0, 0)),
                pl.BlockSpec((1, N_HIDDEN), lambda g: (0, 0)),
                pl.BlockSpec((N_HIDDEN, N_CLASSES), lambda g: (0, 0)),
                pl.BlockSpec((1, N_CLASSES), lambda g: (0, 0)),
            ],
            out_specs=pl.BlockSpec((Bp, N_CLASSES), lambda g: (g, 0)),
            scratch_shapes=[
                pltpu.VMEM((V * Bp, LANES), jnp.float32),        # conv1/conv3 out
                pltpu.VMEM(((V + 2) * Bp, LANES), jnp.float32),  # conv2 out + zero halo
            ],
        ),
        # Grid steps are fully independent -> safe to shard across TensorCores.
        compiler_params=pltpu.CompilerParams(
            dimension_semantics=("parallel",)),
    )(xp, pp["w1"], pp["aff1"], pp["w2"], pp["aff2"], pp["w3"], pp["aff3"],
      pp["w1h"], pp["b1h"], pp["w2h"], pp["b2h"])
    return out[:B]


# ----------------------------------------------------------------------------
# Deterministic parameter init (shapes from CRNN_cla.__init__)
# ----------------------------------------------------------------------------
def init_params(key):
    ks = jax.random.split(key, 20)

    def uni(k, shape, fan_in):
        bound = 1.0 / jnp.sqrt(fan_in)
        return jax.random.uniform(k, shape, jnp.float32, -bound, bound)

    def bn(k, c):
        k1, k2, k3, k4 = jax.random.split(k, 4)
        gamma = 1.0 + 0.1 * jax.random.normal(k1, (c,), jnp.float32)
        beta = 0.1 * jax.random.normal(k2, (c,), jnp.float32)
        mean = 0.1 * jax.random.normal(k3, (c,), jnp.float32)
        var = 1.0 + 0.5 * jax.random.uniform(k4, (c,), jnp.float32)
        return (gamma, beta, mean, var)

    return {
        "w1": uni(ks[0], (15, 1, 5), 1 * 5),   "b1": uni(ks[1], (15,), 1 * 5),
        "bn1": bn(ks[2], 15),
        "w2": uni(ks[3], (30, 15, 2), 15 * 2), "b2": uni(ks[4], (30,), 15 * 2),
        "bn2": bn(ks[5], 30),
        "w3": uni(ks[6], (60, 30, 5), 30 * 5), "b3": uni(ks[7], (60,), 30 * 5),
        "bn3": bn(ks[8], 60),
        "fcw1": uni(ks[9], (40, 64 * 60), 64 * 60), "fcb1": uni(ks[10], (40,), 64 * 60),
        "fcw2": uni(ks[11], (2, 40), 40),            "fcb2": uni(ks[12], (2,), 40),
    }


# ----------------------------------------------------------------------------
# Pure-JAX reference (for verification)
# ----------------------------------------------------------------------------
def reference_forward(x, p):
    def conv1d(x, w, b, stride, pad):
        y = jax.lax.conv_general_dilated(
            x, w, window_strides=(stride,), padding=[(pad, pad)],
            dimension_numbers=("NCH", "OIH", "NCH"))
        return y + b[None, :, None]

    def bn(x, stats):
        g, be, m, v = stats
        return (x - m[None, :, None]) / jnp.sqrt(v[None, :, None] + EPS) * g[None, :, None] \
            + be[None, :, None]

    h = bn(jnp.maximum(conv1d(x, p["w1"], p["b1"], 2, 2), 0.0), p["bn1"])
    h = bn(jnp.maximum(conv1d(h, p["w2"], p["b2"], 2, 0), 0.0), p["bn2"])
    h = bn(conv1d(h, p["w3"], p["b3"], 2, 2), p["bn3"])
    f = h.reshape(h.shape[0], -1)
    g1 = jnp.maximum(f @ p["fcw1"].T + p["fcb1"], 0.0)
    logits = g1 @ p["fcw2"].T + p["fcb2"]
    return jax.nn.softmax(logits, axis=1)


if __name__ == "__main__":
    # Input length must be 512 so the flattened conv output is 64*60 = 3840,
    # as required by the first Linear layer.
    params = init_params(jax.random.PRNGKey(42))
    packed = prepare_params(params)            # one-time weight preprocessing

    fwd = jax.jit(crnn_cla_forward)

    # Small smoke test (B=2 -> Bp=8, grid=1) and a batched multi-block test
    # (B=80 -> Bp=64, grid=2, exercises batch padding and the big-matmul path).
    for batch in (2, 80):
        x = jax.random.normal(jax.random.PRNGKey(0), (batch, 1, 512), jnp.float32)
        out = jax.block_until_ready(fwd(x, packed))
        ref = jax.block_until_ready(reference_forward(x, params))
        assert out.shape == (batch, N_CLASSES)
        assert jnp.allclose(out, ref, rtol=1e-3, atol=1e-3), (batch, out[:4], ref[:4])
        assert jnp.allclose(jnp.sum(out, axis=1), 1.0, atol=1e-3)

    print("KERNEL_OK")
</pallas_src>

<mosaic_0001>
module attributes {stable_mosaic.version = 11 : i64} {
  func.func @kernel(%arg0: i32, %arg1: memref<1x272x16xf32, #tpu.memory_space<vmem>>, %arg2: memref<3x16x128xf32, #tpu.memory_space<vmem>>, %arg3: memref<3x128xf32, #tpu.memory_space<vmem>>, %arg4: memref<128x128xf32, #tpu.memory_space<vmem>>, %arg5: memref<3x128xf32, #tpu.memory_space<vmem>>, %arg6: memref<3x128x128xf32, #tpu.memory_space<vmem>>, %arg7: memref<2x128xf32, #tpu.memory_space<vmem>>, %arg8: memref<32x128x40xf32, #tpu.memory_space<vmem>>, %arg9: memref<1x40xf32, #tpu.memory_space<vmem>>, %arg10: memref<40x2xf32, #tpu.memory_space<vmem>>, %arg11: memref<1x2xf32, #tpu.memory_space<vmem>>, %arg12: memref<8x2xf32, #tpu.memory_space<vmem>>, %arg13: memref<256x128xf32, #tpu.memory_space<vmem>>, %arg14: memref<272x128xf32, #tpu.memory_space<vmem>>) attributes {dimension_semantics = [#tpu.dimension_semantics<parallel>], iteration_bounds = array<i64: 1>, scalar_prefetch = 0 : i64, scratch_operands = 2 : i64, tpu.core_type = #tpu.core_type<tc>, window_params = [{transform_indices = @transform_0, window_bounds = array<i64: 1, 272, 16>}, {pipeline_mode = #tpu.pipeline_mode<synchronous>, transform_indices = @transform_1, window_bounds = array<i64: 3, 16, 128>}, {pipeline_mode = #tpu.pipeline_mode<synchronous>, transform_indices = @transform_2, window_bounds = array<i64: 3, 128>}, {pipeline_mode = #tpu.pipeline_mode<synchronous>, transform_indices = @transform_3, window_bounds = array<i64: 128, 128>}, {pipeline_mode = #tpu.pipeline_mode<synchronous>, transform_indices = @transform_4, window_bounds = array<i64: 3, 128>}, {pipeline_mode = #tpu.pipeline_mode<synchronous>, transform_indices = @transform_5, window_bounds = array<i64: 3, 128, 128>}, {pipeline_mode = #tpu.pipeline_mode<synchronous>, transform_indices = @transform_6, window_bounds = array<i64: 2, 128>}, {pipeline_mode = #tpu.pipeline_mode<synchronous>, transform_indices = @transform_7, window_bounds = array<i64: 32, 128, 40>}, {pipeline_mode = #tpu.pipeline_mode<synchronous>, transform_indices = @transform_8, window_bounds = array<i64: 1, 40>}, {pipeline_mode = #tpu.pipeline_mode<synchronous>, transform_indices = @transform_9, window_bounds = array<i64: 40, 2>}, {pipeline_mode = #tpu.pipeline_mode<synchronous>, transform_indices = @transform_10, window_bounds = array<i64: 1, 2>}, {transform_indices = @transform_11, window_bounds = array<i64: 8, 2>}]} {
    %cst = arith.constant 0.000000e+00 : f32
    %0 = vector.broadcast %cst : f32 to vector<8x128xf32>
    %c0 = arith.constant 0 : index
    %c0_0 = arith.constant 0 : index
    %1 = vector.load %arg14[%c0, %c0_0] : memref<272x128xf32, #tpu.memory_space<vmem>>, vector<8x128xf32>
    tpu.vector_store %arg14[%c0, %c0_0], %0 {strides = array<i32>} : memref<272x128xf32, #tpu.memory_space<vmem>>, vector<8x128xf32>,
    %c264 = arith.constant 264 : index
    %c0_1 = arith.constant 0 : index
    %2 = vector.load %arg14[%c264, %c0_1] : memref<272x128xf32, #tpu.memory_space<vmem>>, vector<8x128xf32>
    tpu.vector_store %arg14[%c264, %c0_1], %0 {strides = array<i32>} : memref<272x128xf32, #tpu.memory_space<vmem>>, vector<8x128xf32>,
    %c0_2 = arith.constant 0 : index
    %c0_3 = arith.constant 0 : index
    %3 = vector.load %arg3[%c0_2, %c0_3] : memref<3x128xf32, #tpu.memory_space<vmem>>, vector<1x128xf32>
    %c1 = arith.constant 1 : index
    %c0_4 = arith.constant 0 : index
    %4 = vector.load %arg3[%c1, %c0_4] : memref<3x128xf32, #tpu.memory_space<vmem>>, vector<1x128xf32>
    %c2 = arith.constant 2 : index
    %c0_5 = arith.constant 0 : index
    %5 = vector.load %arg3[%c2, %c0_5] : memref<3x128xf32, #tpu.memory_space<vmem>>, vector<1x128xf32>
    %c0_6 = arith.constant 0 : index
    %c0_7 = arith.constant 0 : index
    %6 = vector.load %arg5[%c0_6, %c0_7] : memref<3x128xf32, #tpu.memory_space<vmem>>, vector<1x128xf32>
    %c1_8 = arith.constant 1 : index
    %c0_9 = arith.constant 0 : index
    %7 = vector.load %arg5[%c1_8, %c0_9] : memref<3x128xf32, #tpu.memory_space<vmem>>, vector<1x128xf32>
    %c2_10 = arith.constant 2 : index
    %c0_11 = arith.constant 0 : index
    %8 = vector.load %arg5[%c2_10, %c0_11] : memref<3x128xf32, #tpu.memory_space<vmem>>, vector<1x128xf32>
    %c0_12 = arith.constant 0 : index
    %c0_13 = arith.constant 0 : index
    %9 = vector.load %arg7[%c0_12, %c0_13] : memref<2x128xf32, #tpu.memory_space<vmem>>, vector<1x128xf32>
    %c1_14 = arith.constant 1 : index
    %c0_15 = arith.constant 0 : index
    %10 = vector.load %arg7[%c1_14, %c0_15] : memref<2x128xf32, #tpu.memory_space<vmem>>, vector<1x128xf32>
    %c0_16 = arith.constant 0 : index
    %c0_17 = arith.constant 0 : index
    %c0_18 = arith.constant 0 : index
    %11 = vector.load %arg1[%c0_16, %c0_17, %c0_18] : memref<1x272x16xf32, #tpu.memory_space<vmem>>, vector<1x256x16xf32>
    %12 = vector.shape_cast %11 : vector<1x256x16xf32> to vector<256x16xf32>
    %c0_19 = arith.constant 0 : index
    %c0_20 = arith.constant 0 : index
    %c0_21 = arith.constant 0 : index
    %13 = vector.load %arg2[%c0_19, %c0_20, %c0_21] : memref<3x16x128xf32, #tpu.memory_space<vmem>>, vector<1x16x128xf32>
    %14 = vector.shape_cast %13 : vector<1x16x128xf32> to vector<16x128xf32>
    %cst_22 = arith.constant dense<0.000000e+00> : vector<256x128xf32>
    %15 = tpu.matmul %12, %14, %cst_22 {dimension_numbers = #tpu.dot_dimension_numbers<[1], [0], [0], [1], [0, 0, 1, 1], [], []>} : vector<256x16xf32>, vector<16x128xf32>, vector<256x128xf32> -> vector<256x128xf32>
    %c0_23 = arith.constant 0 : index
    %c8 = arith.constant 8 : index
    %c0_24 = arith.constant 0 : index
    %16 = vector.load %arg1[%c0_23, %c8, %c0_24] : memref<1x272x16xf32, #tpu.memory_space<vmem>>, vector<1x256x16xf32>
    %17 = vector.shape_cast %16 : vector<1x256x16xf32> to vector<256x16xf32>
    %c1_25 = arith.constant 1 : index
    %c0_26 = arith.constant 0 : index
    %c0_27 = arith.constant 0 : index
    %18 = vector.load %arg2[%c1_25, %c0_26, %c0_27] : memref<3x16x128xf32, #tpu.memory_space<vmem>>, vector<1x16x128xf32>
    %19 = vector.shape_cast %18 : vector<1x16x128xf32> to vector<16x128xf32>
    %cst_28 = arith.constant dense<0.000000e+00> : vector<256x128xf32>
    %20 = tpu.matmul %17, %19, %cst_28 {dimension_numbers = #tpu.dot_dimension_numbers<[1], [0], [0], [1], [0, 0, 1, 1], [], []>} : vector<256x16xf32>, vector<16x128xf32>, vector<256x128xf32> -> vector<256x128xf32>
    %21 = arith.addf %15, %20 : vector<256x128xf32>
    %c0_29 = arith.constant 0 : index
    %c16 = arith.constant 16 : index
    %c0_30 = arith.constant 0 : index
    %22 = vector.load %arg1[%c0_29, %c16, %c0_30] : memref<1x272x16xf32, #tpu.memory_space<vmem>>, vector<1x256x16xf32>
    %23 = vector.shape_cast %22 : vector<1x256x16xf32> to vector<256x16xf32>
    %c2_31 = arith.constant 2 : index
    %c0_32 = arith.constant 0 : index
    %c0_33 = arith.constant 0 : index
    %24 = vector.load %arg2[%c2_31, %c0_32, %c0_33] : memref<3x16x128xf32, #tpu.memory_space<vmem>>, vector<1x16x128xf32>
    %25 = vector.shape_cast %24 : vector<1x16x128xf32> to vector<16x128xf32>
    %cst_34 = arith.constant dense<0.000000e+00> : vector<256x128xf32>
    %26 = tpu.matmul %23, %25, %cst_34 {dimension_numbers = #tpu.dot_dimension_numbers<[1], [0], [0], [1], [0, 0, 1, 1], [], []>} : vector<256x16xf32>, vector<16x128xf32>, vector<256x128xf32> -> vector<256x128xf32>
    %27 = arith.addf %21, %26 : vector<256x128xf32>
    %28 = vector.broadcast %3 : vector<1x128xf32> to vector<256x128xf32>
    %29 = arith.addf %27, %28 : vector<256x128xf32>
    %cst_35 = arith.constant 0.000000e+00 : f32
    %30 = vector.broadcast %cst_35 : f32 to vector<256x128xf32>
    %31 = arith.maximumf %29, %30 : vector<256x128xf32>
    %32 = vector.broadcast %4 : vector<1x128xf32> to vector<256x128xf32>
    %33 = arith.mulf %31, %32 : vector<256x128xf32>
    %34 = vector.broadcast %5 : vector<1x128xf32> to vector<256x128xf32>
    %35 = arith.addf %33, %34 : vector<256x128xf32>
    %c0_36 = arith.constant 0 : index
    %c0_37 = arith.constant 0 : index
    %36 = vector.load %arg13[%c0_36, %c0_37] : memref<256x128xf32, #tpu.memory_space<vmem>>, vector<256x128xf32>
    tpu.vector_store %arg13[%c0_36, %c0_37], %35 {strides = array<i32>} : memref<256x128xf32, #tpu.memory_space<vmem>>, vector<256x128xf32>,
    %c0_38 = arith.constant 0 : index
    %c0_39 = arith.constant 0 : index
    %37 = vector.load %arg13[%c0_38, %c0_39] : memref<256x128xf32, #tpu.memory_space<vmem>>, vector<256x128xf32>
    %c0_40 = arith.constant 0 : index
    %c0_41 = arith.constant 0 : index
    %38 = vector.load %arg4[%c0_40, %c0_41] : memref<128x128xf32, #tpu.memory_space<vmem>>, vector<128x128xf32>
    %cst_42 = arith.constant dense<0.000000e+00> : vector<256x128xf32>
    %39 = tpu.matmul %37, %38, %cst_42 {dimension_numbers = #tpu.dot_dimension_numbers<[1], [0], [0], [1], [0, 0, 1, 1], [], []>} : vector<256x128xf32>, vector<128x128xf32>, vector<256x128xf32> -> vector<256x128xf32>
    %40 = vector.broadcast %6 : vector<1x128xf32> to vector<256x128xf32>
    %41 = arith.addf %39, %40 : vector<256x128xf32>
    %cst_43 = arith.constant 0.000000e+00 : f32
    %42 = vector.broadcast %cst_43 : f32 to vector<256x128xf32>
    %43 = arith.maximumf %41, %42 : vector<256x128xf32>
    %44 = vector.broadcast %7 : vector<1x128xf32> to vector<256x128xf32>
    %45 = arith.mulf %43, %44 : vector<256x128xf32>
    %46 = vector.broadcast %8 : vector<1x128xf32> to vector<256x128xf32>
    %47 = arith.addf %45, %46 : vector<256x128xf32>
    %c8_44 = arith.constant 8 : index
    %c0_45 = arith.constant 0 : index
    %48 = vector.load %arg14[%c8_44, %c0_45] : memref<272x128xf32, #tpu.memory_space<vmem>>, vector<256x128xf32>
    tpu.vector_store %arg14[%c8_44, %c0_45], %47 {strides = array<i32>} : memref<272x128xf32, #tpu.memory_space<vmem>>, vector<256x128xf32>,
    %c0_46 = arith.constant 0 : index
    %c0_47 = arith.constant 0 : index
    %49 = vector.load %arg14[%c0_46, %c0_47] : memref<272x128xf32, #tpu.memory_space<vmem>>, vector<256x128xf32>
    %c0_48 = arith.constant 0 : index
    %c0_49 = arith.constant 0 : index
    %c0_50 = arith.constant 0 : index
    %50 = vector.load %arg6[%c0_48, %c0_49, %c0_50] : memref<3x128x128xf32, #tpu.memory_space<vmem>>, vector<1x128x128xf32>
    %51 = vector.shape_cast %50 : vector<1x128x128xf32> to vector<128x128xf32>
    %cst_51 = arith.constant dense<0.000000e+00> : vector<256x128xf32>
    %52 = tpu.matmul %49, %51, %cst_51 {dimension_numbers = #tpu.dot_dimension_numbers<[1], [0], [0], [1], [0, 0, 1, 1], [], []>} : vector<256x128xf32>, vector<128x128xf32>, vector<256x128xf32> -> vector<256x128xf32>
    %c8_52 = arith.constant 8 : index
    %c0_53 = arith.constant 0 : index
    %53 = vector.load %arg14[%c8_52, %c0_53] : memref<272x128xf32, #tpu.memory_space<vmem>>, vector<256x128xf32>
    %c1_54 = arith.constant 1 : index
    %c0_55 = arith.constant 0 : index
    %c0_56 = arith.constant 0 : index
    %54 = vector.load %arg6[%c1_54, %c0_55, %c0_56] : memref<3x128x128xf32, #tpu.memory_space<vmem>>, vector<1x128x128xf32>
    %55 = vector.shape_cast %54 : vector<1x128x128xf32> to vector<128x128xf32>
    %cst_57 = arith.constant dense<0.000000e+00> : vector<256x128xf32>
    %56 = tpu.matmul %53, %55, %cst_57 {dimension_numbers = #tpu.dot_dimension_numbers<[1], [0], [0], [1], [0, 0, 1, 1], [], []>} : vector<256x128xf32>, vector<128x128xf32>, vector<256x128xf32> -> vector<256x128xf32>
    %57 = arith.addf %52, %56 : vector<256x128xf32>
    %c16_58 = arith.constant 16 : index
    %c0_59 = arith.constant 0 : index
    %58 = vector.load %arg14[%c16_58, %c0_59] : memref<272x128xf32, #tpu.memory_space<vmem>>, vector<256x128xf32>
    %c2_60 = arith.constant 2 : index
    %c0_61 = arith.constant 0 : index
    %c0_62 = arith.constant 0 : index
    %59 = vector.load %arg6[%c2_60, %c0_61, %c0_62] : memref<3x128x128xf32, #tpu.memory_space<vmem>>, vector<1x128x128xf32>
    %60 = vector.shape_cast %59 : vector<1x128x128xf32> to vector<128x128xf32>
    %cst_63 = arith.constant dense<0.000000e+00> : vector<256x128xf32>
    %61 = tpu.matmul %58, %60, %cst_63 {dimension_numbers = #tpu.dot_dimension_numbers<[1], [0], [0], [1], [0, 0, 1, 1], [], []>} : vector<256x128xf32>, vector<128x128xf32>, vector<256x128xf32> -> vector<256x128xf32>
    %62 = arith.addf %57, %61 : vector<256x128xf32>
    %63 = vector.broadcast %9 : vector<1x128xf32> to vector<256x128xf32>
    %64 = arith.mulf %62, %63 : vector<256x128xf32>
    %65 = vector.broadcast %10 : vector<1x128xf32> to vector<256x128xf32>
    %66 = arith.addf %64, %65 : vector<256x128xf32>
    %c0_64 = arith.constant 0 : index
    %c0_65 = arith.constant 0 : index
    %67 = vector.load %arg13[%c0_64, %c0_65] : memref<256x128xf32, #tpu.memory_space<vmem>>, vector<256x128xf32>
    tpu.vector_store %arg13[%c0_64, %c0_65], %66 {strides = array<i32>} : memref<256x128xf32, #tpu.memory_space<vmem>>, vector<256x128xf32>,
    %c0_66 = arith.constant 0 : index
    %c0_67 = arith.constant 0 : index
    %68 = vector.load %arg13[%c0_66, %c0_67] : memref<256x128xf32, #tpu.memory_space<vmem>>, vector<8x128xf32>
    %c0_68 = arith.constant 0 : index
    %c0_69 = arith.constant 0 : index
    %c0_70 = arith.constant 0 : index
    %69 = vector.load %arg8[%c0_68, %c0_69, %c0_70] : memref<32x128x40xf32, #tpu.memory_space<vmem>>, vector<1x128x40xf32>
    %70 = vector.shape_cast %69 : vector<1x128x40xf32> to vector<128x40xf32>
    %cst_71 = arith.constant dense<0.000000e+00> : vector<8x40xf32>
    %71 = tpu.matmul %68, %70, %cst_71 {dimension_numbers = #tpu.dot_dimension_numbers<[1], [0], [0], [1], [0, 0, 1, 1], [], []>} : vector<8x128xf32>, vector<128x40xf32>, vector<8x40xf32> -> vector<8x40xf32>
    %c8_72 = arith.constant 8 : index
    %c0_73 = arith.constant 0 : index
    %72 = vector.load %arg13[%c8_72, %c0_73] : memref<256x128xf32, #tpu.memory_space<vmem>>, vector<8x128xf32>
    %c1_74 = arith.constant 1 : index
    %c0_75 = arith.constant 0 : index
    %c0_76 = arith.constant 0 : index
    %73 = vector.load %arg8[%c1_74, %c0_75, %c0_76] : memref<32x128x40xf32, #tpu.memory_space<vmem>>, vector<1x128x40xf32>
    %74 = vector.shape_cast %73 : vector<1x128x40xf32> to vector<128x40xf32>
    %cst_77 = arith.constant dense<0.000000e+00> : vector<8x40xf32>
    %75 = tpu.matmul %72, %74, %cst_77 {dimension_numbers = #tpu.dot_dimension_numbers<[1], [0], [0], [1], [0, 0, 1, 1], [], []>} : vector<8x128xf32>, vector<128x40xf32>, vector<8x40xf32> -> vector<8x40xf32>
    %76 = arith.addf %71, %75 : vector<8x40xf32>
    %c16_78 = arith.constant 16 : index
    %c0_79 = arith.constant 0 : index
    %77 = vector.load %arg13[%c16_78, %c0_79] : memref<256x128xf32, #tpu.memory_space<vmem>>, vector<8x128xf32>
    %c2_80 = arith.constant 2 : index
    %c0_81 = arith.constant 0 : index
    %c0_82 = arith.constant 0 : index
    %78 = vector.load %arg8[%c2_80, %c0_81, %c0_82] : memref<32x128x40xf32, #tpu.memory_space<vmem>>, vector<1x128x40xf32>
    %79 = vector.shape_cast %78 : vector<1x128x40xf32> to vector<128x40xf32>
    %cst_83 = arith.constant dense<0.000000e+00> : vector<8x40xf32>
    %80 = tpu.matmul %77, %79, %cst_83 {dimension_numbers = #tpu.dot_dimension_numbers<[1], [0], [0], [1], [0, 0, 1, 1], [], []>} : vector<8x128xf32>, vector<128x40xf32>, vector<8x40xf32> -> vector<8x40xf32>
    %81 = arith.addf %76, %80 : vector<8x40xf32>
    %c24 = arith.constant 24 : index
    %c0_84 = arith.constant 0 : index
    %82 = vector.load %arg13[%c24, %c0_84] : memref<256x128xf32, #tpu.memory_space<vmem>>, vector<8x128xf32>
    %c3 = arith.constant 3 : index
    %c0_85 = arith.constant 0 : index
    %c0_86 = arith.constant 0 : index
    %83 = vector.load %arg8[%c3, %c0_85, %c0_86] : memref<32x128x40xf32, #tpu.memory_space<vmem>>, vector<1x128x40xf32>
    %84 = vector.shape_cast %83 : vector<1x128x40xf32> to vector<128x40xf32>
    %cst_87 = arith.constant dense<0.000000e+00> : vector<8x40xf32>
    %85 = tpu.matmul %82, %84, %cst_87 {dimension_numbers = #tpu.dot_dimension_numbers<[1], [0], [0], [1], [0, 0, 1, 1], [], []>} : vector<8x128xf32>, vector<128x40xf32>, vector<8x40xf32> -> vector<8x40xf32>
    %86 = arith.addf %81, %85 : vector<8x40xf32>
    %c32 = arith.constant 32 : index
    %c0_88 = arith.constant 0 : index
    %87 = vector.load %arg13[%c32, %c0_88] : memref<256x128xf32, #tpu.memory_space<vmem>>, vector<8x128xf32>
    %c4 = arith.constant 4 : index
    %c0_89 = arith.constant 0 : index
    %c0_90 = arith.constant 0 : index
    %88 = vector.load %arg8[%c4, %c0_89, %c0_90] : memref<32x128x40xf32, #tpu.memory_space<vmem>>, vector<1x128x40xf32>
    %89 = vector.shape_cast %88 : vector<1x128x40xf32> to vector<128x40xf32>
    %cst_91 = arith.constant dense<0.000000e+00> : vector<8x40xf32>
    %90 = tpu.matmul %87, %89, %cst_91 {dimension_numbers = #tpu.dot_dimension_numbers<[1], [0], [0], [1], [0, 0, 1, 1], [], []>} : vector<8x128xf32>, vector<128x40xf32>, vector<8x40xf32> -> vector<8x40xf32>
    %91 = arith.addf %86, %90 : vector<8x40xf32>
    %c40 = arith.constant 40 : index
    %c0_92 = arith.constant 0 : index
    %92 = vector.load %arg13[%c40, %c0_92] : memref<256x128xf32, #tpu.memory_space<vmem>>, vector<8x128xf32>
    %c5 = arith.constant 5 : index
    %c0_93 = arith.constant 0 : index
    %c0_94 = arith.constant 0 : index
    %93 = vector.load %arg8[%c5, %c0_93, %c0_94] : memref<32x128x40xf32, #tpu.memory_space<vmem>>, vector<1x128x40xf32>
    %94 = vector.shape_cast %93 : vector<1x128x40xf32> to vector<128x40xf32>
    %cst_95 = arith.constant dense<0.000000e+00> : vector<8x40xf32>
    %95 = tpu.matmul %92, %94, %cst_95 {dimension_numbers = #tpu.dot_dimension_numbers<[1], [0], [0], [1], [0, 0, 1, 1], [], []>} : vector<8x128xf32>, vector<128x40xf32>, vector<8x40xf32> -> vector<8x40xf32>
    %96 = arith.addf %91, %95 : vector<8x40xf32>
    %c48 = arith.constant 48 : index
    %c0_96 = arith.constant 0 : index
    %97 = vector.load %arg13[%c48, %c0_96] : memref<256x128xf32, #tpu.memory_space<vmem>>, vector<8x128xf32>
    %c6 = arith.constant 6 : index
    %c0_97 = arith.constant 0 : index
    %c0_98 = arith.constant 0 : index
    %98 = vector.load %arg8[%c6, %c0_97, %c0_98] : memref<32x128x40xf32, #tpu.memory_space<vmem>>, vector<1x128x40xf32>
    %99 = vector.shape_cast %98 : vector<1x128x40xf32> to vector<128x40xf32>
    %cst_99 = arith.constant dense<0.000000e+00> : vector<8x40xf32>
    %100 = tpu.matmul %97, %99, %cst_99 {dimension_numbers = #tpu.dot_dimension_numbers<[1], [0], [0], [1], [0, 0, 1, 1], [], []>} : vector<8x128xf32>, vector<128x40xf32>, vector<8x40xf32> -> vector<8x40xf32>
    %101 = arith.addf %96, %100 : vector<8x40xf32>
    %c56 = arith.constant 56 : index
    %c0_100 = arith.constant 0 : index
    %102 = vector.load %arg13[%c56, %c0_100] : memref<256x128xf32, #tpu.memory_space<vmem>>, vector<8x128xf32>
    %c7 = arith.constant 7 : index
    %c0_101 = arith.constant 0 : index
    %c0_102 = arith.constant 0 : index
    %103 = vector.load %arg8[%c7, %c0_101, %c0_102] : memref<32x128x40xf32, #tpu.memory_space<vmem>>, vector<1x128x40xf32>
    %104 = vector.shape_cast %103 : vector<1x128x40xf32> to vector<128x40xf32>
    %cst_103 = arith.constant dense<0.000000e+00> : vector<8x40xf32>
    %105 = tpu.matmul %102, %104, %cst_103 {dimension_numbers = #tpu.dot_dimension_numbers<[1], [0], [0], [1], [0, 0, 1, 1], [], []>} : vector<8x128xf32>, vector<128x40xf32>, vector<8x40xf32> -> vector<8x40xf32>
    %106 = arith.addf %101, %105 : vector<8x40xf32>
    %c64 = arith.constant 64 : index
    %c0_104 = arith.constant 0 : index
    %107 = vector.load %arg13[%c64, %c0_104] : memref<256x128xf32, #tpu.memory_space<vmem>>, vector<8x128xf32>
    %c8_105 = arith.constant 8 : index
    %c0_106 = arith.constant 0 : index
    %c0_107 = arith.constant 0 : index
    %108 = vector.load %arg8[%c8_105, %c0_106, %c0_107] : memref<32x128x40xf32, #tpu.memory_space<vmem>>, vector<1x128x40xf32>
    %109 = vector.shape_cast %108 : vector<1x128x40xf32> to vector<128x40xf32>
    %cst_108 = arith.constant dense<0.000000e+00> : vector<8x40xf32>
    %110 = tpu.matmul %107, %109, %cst_108 {dimension_numbers = #tpu.dot_dimension_numbers<[1], [0], [0], [1], [0, 0, 1, 1], [], []>} : vector<8x128xf32>, vector<128x40xf32>, vector<8x40xf32> -> vector<8x40xf32>
    %c72 = arith.constant 72 : index
    %c0_109 = arith.constant 0 : index
    %111 = vector.load %arg13[%c72, %c0_109] : memref<256x128xf32, #tpu.memory_space<vmem>>, vector<8x128xf32>
    %c9 = arith.constant 9 : index
    %c0_110 = arith.constant 0 : index
    %c0_111 = arith.constant 0 : index
    %112 = vector.load %arg8[%c9, %c0_110, %c0_111] : memref<32x128x40xf32, #tpu.memory_space<vmem>>, vector<1x128x40xf32>
    %113 = vector.shape_cast %112 : vector<1x128x40xf32> to vector<128x40xf32>
    %cst_112 = arith.constant dense<0.000000e+00> : vector<8x40xf32>
    %114 = tpu.matmul %111, %113, %cst_112 {dimension_numbers = #tpu.dot_dimension_numbers<[1], [0], [0], [1], [0, 0, 1, 1], [], []>} : vector<8x128xf32>, vector<128x40xf32>, vector<8x40xf32> -> vector<8x40xf32>
    %115 = arith.addf %110, %114 : vector<8x40xf32>
    %c80 = arith.constant 80 : index
    %c0_113 = arith.constant 0 : index
    %116 = vector.load %arg13[%c80, %c0_113] : memref<256x128xf32, #tpu.memory_space<vmem>>, vector<8x128xf32>
    %c10 = arith.constant 10 : index
    %c0_114 = arith.constant 0 : index
    %c0_115 = arith.constant 0 : index
    %117 = vector.load %arg8[%c10, %c0_114, %c0_115] : memref<32x128x40xf32, #tpu.memory_space<vmem>>, vector<1x128x40xf32>
    %118 = vector.shape_cast %117 : vector<1x128x40xf32> to vector<128x40xf32>
    %cst_116 = arith.constant dense<0.000000e+00> : vector<8x40xf32>
    %119 = tpu.matmul %116, %118, %cst_116 {dimension_numbers = #tpu.dot_dimension_numbers<[1], [0], [0], [1], [0, 0, 1, 1], [], []>} : vector<8x128xf32>, vector<128x40xf32>, vector<8x40xf32> -> vector<8x40xf32>
    %120 = arith.addf %115, %119 : vector<8x40xf32>
    %c88 = arith.constant 88 : index
    %c0_117 = arith.constant 0 : index
    %121 = vector.load %arg13[%c88, %c0_117] : memref<256x128xf32, #tpu.memory_space<vmem>>, vector<8x128xf32>
    %c11 = arith.constant 11 : index
    %c0_118 = arith.constant 0 : index
    %c0_119 = arith.constant 0 : index
    %122 = vector.load %arg8[%c11, %c0_118, %c0_119] : memref<32x128x40xf32, #tpu.memory_space<vmem>>, vector<1x128x40xf32>
    %123 = vector.shape_cast %122 : vector<1x128x40xf32> to vector<128x40xf32>
    %cst_120 = arith.constant dense<0.000000e+00> : vector<8x40xf32>
    %124 = tpu.matmul %121, %123, %cst_120 {dimension_numbers = #tpu.dot_dimension_numbers<[1], [0], [0], [1], [0, 0, 1, 1], [], []>} : vector<8x128xf32>, vector<128x40xf32>, vector<8x40xf32> -> vector<8x40xf32>
    %125 = arith.addf %120, %124 : vector<8x40xf32>
    %c96 = arith.constant 96 : index
    %c0_121 = arith.constant 0 : index
    %126 = vector.load %arg13[%c96, %c0_121] : memref<256x128xf32, #tpu.memory_space<vmem>>, vector<8x128xf32>
    %c12 = arith.constant 12 : index
    %c0_122 = arith.constant 0 : index
    %c0_123 = arith.constant 0 : index
    %127 = vector.load %arg8[%c12, %c0_122, %c0_123] : memref<32x128x40xf32, #tpu.memory_space<vmem>>, vector<1x128x40xf32>
    %128 = vector.shape_cast %127 : vector<1x128x40xf32> to vector<128x40xf32>
    %cst_124 = arith.constant dense<0.000000e+00> : vector<8x40xf32>
    %129 = tpu.matmul %126, %128, %cst_124 {dimension_numbers = #tpu.dot_dimension_numbers<[1], [0], [0], [1], [0, 0, 1, 1], [], []>} : vector<8x128xf32>, vector<128x40xf32>, vector<8x40xf32> -> vector<8x40xf32>
    %130 = arith.addf %125, %129 : vector<8x40xf32>
    %c104 = arith.constant 104 : index
    %c0_125 = arith.constant 0 : index
    %131 = vector.load %arg13[%c104, %c0_125] : memref<256x128xf32, #tpu.memory_space<vmem>>, vector<8x128xf32>
    %c13 = arith.constant 13 : index
    %c0_126 = arith.constant 0 : index
    %c0_127 = arith.constant 0 : index
    %132 = vector.load %arg8[%c13, %c0_126, %c0_127] : memref<32x128x40xf32, #tpu.memory_space<vmem>>, vector<1x128x40xf32>
    %133 = vector.shape_cast %132 : vector<1x128x40xf32> to vector<128x40xf32>
    %cst_128 = arith.constant dense<0.000000e+00> : vector<8x40xf32>
    %134 = tpu.matmul %131, %133, %cst_128 {dimension_numbers = #tpu.dot_dimension_numbers<[1], [0], [0], [1], [0, 0, 1, 1], [], []>} : vector<8x128xf32>, vector<128x40xf32>, vector<8x40xf32> -> vector<8x40xf32>
    %135 = arith.addf %130, %134 : vector<8x40xf32>
    %c112 = arith.constant 112 : index
    %c0_129 = arith.constant 0 : index
    %136 = vector.load %arg13[%c112, %c0_129] : memref<256x128xf32, #tpu.memory_space<vmem>>, vector<8x128xf32>
    %c14 = arith.constant 14 : index
    %c0_130 = arith.constant 0 : index
    %c0_131 = arith.constant 0 : index
    %137 = vector.load %arg8[%c14, %c0_130, %c0_131] : memref<32x128x40xf32, #tpu.memory_space<vmem>>, vector<1x128x40xf32>
    %138 = vector.shape_cast %137 : vector<1x128x40xf32> to vector<128x40xf32>
    %cst_132 = arith.constant dense<0.000000e+00> : vector<8x40xf32>
    %139 = tpu.matmul %136, %138, %cst_132 {dimension_numbers = #tpu.dot_dimension_numbers<[1], [0], [0], [1], [0, 0, 1, 1], [], []>} : vector<8x128xf32>, vector<128x40xf32>, vector<8x40xf32> -> vector<8x40xf32>
    %140 = arith.addf %135, %139 : vector<8x40xf32>
    %c120 = arith.constant 120 : index
    %c0_133 = arith.constant 0 : index
    %141 = vector.load %arg13[%c120, %c0_133] : memref<256x128xf32, #tpu.memory_space<vmem>>, vector<8x128xf32>
    %c15 = arith.constant 15 : index
    %c0_134 = arith.constant 0 : index
    %c0_135 = arith.constant 0 : index
    %142 = vector.load %arg8[%c15, %c0_134, %c0_135] : memref<32x128x40xf32, #tpu.memory_space<vmem>>, vector<1x128x40xf32>
    %143 = vector.shape_cast %142 : vector<1x128x40xf32> to vector<128x40xf32>
    %cst_136 = arith.constant dense<0.000000e+00> : vector<8x40xf32>
    %144 = tpu.matmul %141, %143, %cst_136 {dimension_numbers = #tpu.dot_dimension_numbers<[1], [0], [0], [1], [0, 0, 1, 1], [], []>} : vector<8x128xf32>, vector<128x40xf32>, vector<8x40xf32> -> vector<8x40xf32>
    %145 = arith.addf %140, %144 : vector<8x40xf32>
    %c128 = arith.constant 128 : index
    %c0_137 = arith.constant 0 : index
    %146 = vector.load %arg13[%c128, %c0_137] : memref<256x128xf32, #tpu.memory_space<vmem>>, vector<8x128xf32>
    %c16_138 = arith.constant 16 : index
    %c0_139 = arith.constant 0 : index
    %c0_140 = arith.constant 0 : index
    %147 = vector.load %arg8[%c16_138, %c0_139, %c0_140] : memref<32x128x40xf32, #tpu.memory_space<vmem>>, vector<1x128x40xf32>
    %148 = vector.shape_cast %147 : vector<1x128x40xf32> to vector<128x40xf32>
    %cst_141 = arith.constant dense<0.000000e+00> : vector<8x40xf32>
    %149 = tpu.matmul %146, %148, %cst_141 {dimension_numbers = #tpu.dot_dimension_numbers<[1], [0], [0], [1], [0, 0, 1, 1], [], []>} : vector<8x128xf32>, vector<128x40xf32>, vector<8x40xf32> -> vector<8x40xf32>
    %c136 = arith.constant 136 : index
    %c0_142 = arith.constant 0 : index
    %150 = vector.load %arg13[%c136, %c0_142] : memref<256x128xf32, #tpu.memory_space<vmem>>, vector<8x128xf32>
    %c17 = arith.constant 17 : index
    %c0_143 = arith.constant 0 : index
    %c0_144 = arith.constant 0 : index
    %151 = vector.load %arg8[%c17, %c0_143, %c0_144] : memref<32x128x40xf32, #tpu.memory_space<vmem>>, vector<1x128x40xf32>
    %152 = vector.shape_cast %151 : vector<1x128x40xf32> to vector<128x40xf32>
    %cst_145 = arith.constant dense<0.000000e+00> : vector<8x40xf32>
    %153 = tpu.matmul %150, %152, %cst_145 {dimension_numbers = #tpu.dot_dimension_numbers<[1], [0], [0], [1], [0, 0, 1, 1], [], []>} : vector<8x128xf32>, vector<128x40xf32>, vector<8x40xf32> -> vector<8x40xf32>
    %154 = arith.addf %149, %153 : vector<8x40xf32>
    %c144 = arith.constant 144 : index
    %c0_146 = arith.constant 0 : index
    %155 = vector.load %arg13[%c144, %c0_146] : memref<256x128xf32, #tpu.memory_space<vmem>>, vector<8x128xf32>
    %c18 = arith.constant 18 : index
    %c0_147 = arith.constant 0 : index
    %c0_148 = arith.constant 0 : index
    %156 = vector.load %arg8[%c18, %c0_147, %c0_148] : memref<32x128x40xf32, #tpu.memory_space<vmem>>, vector<1x128x40xf32>
    %157 = vector.shape_cast %156 : vector<1x128x40xf32> to vector<128x40xf32>
    %cst_149 = arith.constant dense<0.000000e+00> : vector<8x40xf32>
    %158 = tpu.matmul %155, %157, %cst_149 {dimension_numbers = #tpu.dot_dimension_numbers<[1], [0], [0], [1], [0, 0, 1, 1], [], []>} : vector<8x128xf32>, vector<128x40xf32>, vector<8x40xf32> -> vector<8x40xf32>
    %159 = arith.addf %154, %158 : vector<8x40xf32>
    %c152 = arith.constant 152 : index
    %c0_150 = arith.constant 0 : index
    %160 = vector.load %arg13[%c152, %c0_150] : memref<256x128xf32, #tpu.memory_space<vmem>>, vector<8x128xf32>
    %c19 = arith.constant 19 : index
    %c0_151 = arith.constant 0 : index
    %c0_152 = arith.constant 0 : index
    %161 = vector.load %arg8[%c19, %c0_151, %c0_152] : memref<32x128x40xf32, #tpu.memory_space<vmem>>, vector<1x128x40xf32>
    %162 = vector.shape_cast %161 : vector<1x128x40xf32> to vector<128x40xf32>
    %cst_153 = arith.constant dense<0.000000e+00> : vector<8x40xf32>
    %163 = tpu.matmul %160, %162, %cst_153 {dimension_numbers = #tpu.dot_dimension_numbers<[1], [0], [0], [1], [0, 0, 1, 1], [], []>} : vector<8x128xf32>, vector<128x40xf32>, vector<8x40xf32> -> vector<8x40xf32>
    %164 = arith.addf %159, %163 : vector<8x40xf32>
    %c160 = arith.constant 160 : index
    %c0_154 = arith.constant 0 : index
    %165 = vector.load %arg13[%c160, %c0_154] : memref<256x128xf32, #tpu.memory_space<vmem>>, vector<8x128xf32>
    %c20 = arith.constant 20 : index
    %c0_155 = arith.constant 0 : index
    %c0_156 = arith.constant 0 : index
    %166 = vector.load %arg8[%c20, %c0_155, %c0_156] : memref<32x128x40xf32, #tpu.memory_space<vmem>>, vector<1x128x40xf32>
    %167 = vector.shape_cast %166 : vector<1x128x40xf32> to vector<128x40xf32>
    %cst_157 = arith.constant dense<0.000000e+00> : vector<8x40xf32>
    %168 = tpu.matmul %165, %167, %cst_157 {dimension_numbers = #tpu.dot_dimension_numbers<[1], [0], [0], [1], [0, 0, 1, 1], [], []>} : vector<8x128xf32>, vector<128x40xf32>, vector<8x40xf32> -> vector<8x40xf32>
    %169 = arith.addf %164, %168 : vector<8x40xf32>
    %c168 = arith.constant 168 : index
    %c0_158 = arith.constant 0 : index
    %170 = vector.load %arg13[%c168, %c0_158] : memref<256x128xf32, #tpu.memory_space<vmem>>, vector<8x128xf32>
    %c21 = arith.constant 21 : index
    %c0_159 = arith.constant 0 : index
    %c0_160 = arith.constant 0 : index
    %171 = vector.load %arg8[%c21, %c0_159, %c0_160] : memref<32x128x40xf32, #tpu.memory_space<vmem>>, vector<1x128x40xf32>
    %172 = vector.shape_cast %171 : vector<1x128x40xf32> to vector<128x40xf32>
    %cst_161 = arith.constant dense<0.000000e+00> : vector<8x40xf32>
    %173 = tpu.matmul %170, %172, %cst_161 {dimension_numbers = #tpu.dot_dimension_numbers<[1], [0], [0], [1], [0, 0, 1, 1], [], []>} : vector<8x128xf32>, vector<128x40xf32>, vector<8x40xf32> -> vector<8x40xf32>
    %174 = arith.addf %169, %173 : vector<8x40xf32>
    %c176 = arith.constant 176 : index
    %c0_162 = arith.constant 0 : index
    %175 = vector.load %arg13[%c176, %c0_162] : memref<256x128xf32, #tpu.memory_space<vmem>>, vector<8x128xf32>
    %c22 = arith.constant 22 : index
    %c0_163 = arith.constant 0 : index
    %c0_164 = arith.constant 0 : index
    %176 = vector.load %arg8[%c22, %c0_163, %c0_164] : memref<32x128x40xf32, #tpu.memory_space<vmem>>, vector<1x128x40xf32>
    %177 = vector.shape_cast %176 : vector<1x128x40xf32> to vector<128x40xf32>
    %cst_165 = arith.constant dense<0.000000e+00> : vector<8x40xf32>
    %178 = tpu.matmul %175, %177, %cst_165 {dimension_numbers = #tpu.dot_dimension_numbers<[1], [0], [0], [1], [0, 0, 1, 1], [], []>} : vector<8x128xf32>, vector<128x40xf32>, vector<8x40xf32> -> vector<8x40xf32>
    %179 = arith.addf %174, %178 : vector<8x40xf32>
    %c184 = arith.constant 184 : index
    %c0_166 = arith.constant 0 : index
    %180 = vector.load %arg13[%c184, %c0_166] : memref<256x128xf32, #tpu.memory_space<vmem>>, vector<8x128xf32>
    %c23 = arith.constant 23 : index
    %c0_167 = arith.constant 0 : index
    %c0_168 = arith.constant 0 : index
    %181 = vector.load %arg8[%c23, %c0_167, %c0_168] : memref<32x128x40xf32, #tpu.memory_space<vmem>>, vector<1x128x40xf32>
    %182 = vector.shape_cast %181 : vector<1x128x40xf32> to vector<128x40xf32>
    %cst_169 = arith.constant dense<0.000000e+00> : vector<8x40xf32>
    %183 = tpu.matmul %180, %182, %cst_169 {dimension_numbers = #tpu.dot_dimension_numbers<[1], [0], [0], [1], [0, 0, 1, 1], [], []>} : vector<8x128xf32>, vector<128x40xf32>, vector<8x40xf32> -> vector<8x40xf32>
    %184 = arith.addf %179, %183 : vector<8x40xf32>
    %c192 = arith.constant 192 : index
    %c0_170 = arith.constant 0 : index
    %185 = vector.load %arg13[%c192, %c0_170] : memref<256x128xf32, #tpu.memory_space<vmem>>, vector<8x128xf32>
    %c24_171 = arith.constant 24 : index
    %c0_172 = arith.constant 0 : index
    %c0_173 = arith.constant 0 : index
    %186 = vector.load %arg8[%c24_171, %c0_172, %c0_173] : memref<32x128x40xf32, #tpu.memory_space<vmem>>, vector<1x128x40xf32>
    %187 = vector.shape_cast %186 : vector<1x128x40xf32> to vector<128x40xf32>
    %cst_174 = arith.constant dense<0.000000e+00> : vector<8x40xf32>
    %188 = tpu.matmul %185, %187, %cst_174 {dimension_numbers = #tpu.dot_dimension_numbers<[1], [0], [0], [1], [0, 0, 1, 1], [], []>} : vector<8x128xf32>, vector<128x40xf32>, vector<8x40xf32> -> vector<8x40xf32>
    %c200 = arith.constant 200 : index
    %c0_175 = arith.constant 0 : index
    %189 = vector.load %arg13[%c200, %c0_175] : memref<256x128xf32, #tpu.memory_space<vmem>>, vector<8x128xf32>
    %c25 = arith.constant 25 : index
    %c0_176 = arith.constant 0 : index
    %c0_177 = arith.constant 0 : index
    %190 = vector.load %arg8[%c25, %c0_176, %c0_177] : memref<32x128x40xf32, #tpu.memory_space<vmem>>, vector<1x128x40xf32>
    %191 = vector.shape_cast %190 : vector<1x128x40xf32> to vector<128x40xf32>
    %cst_178 = arith.constant dense<0.000000e+00> : vector<8x40xf32>
    %192 = tpu.matmul %189, %191, %cst_178 {dimension_numbers = #tpu.dot_dimension_numbers<[1], [0], [0], [1], [0, 0, 1, 1], [], []>} : vector<8x128xf32>, vector<128x40xf32>, vector<8x40xf32> -> vector<8x40xf32>
    %193 = arith.addf %188, %192 : vector<8x40xf32>
    %c208 = arith.constant 208 : index
    %c0_179 = arith.constant 0 : index
    %194 = vector.load %arg13[%c208, %c0_179] : memref<256x128xf32, #tpu.memory_space<vmem>>, vector<8x128xf32>
    %c26 = arith.constant 26 : index
    %c0_180 = arith.constant 0 : index
    %c0_181 = arith.constant 0 : index
    %195 = vector.load %arg8[%c26, %c0_180, %c0_181] : memref<32x128x40xf32, #tpu.memory_space<vmem>>, vector<1x128x40xf32>
    %196 = vector.shape_cast %195 : vector<1x128x40xf32> to vector<128x40xf32>
    %cst_182 = arith.constant dense<0.000000e+00> : vector<8x40xf32>
    %197 = tpu.matmul %194, %196, %cst_182 {dimension_numbers = #tpu.dot_dimension_numbers<[1], [0], [0], [1], [0, 0, 1, 1], [], []>} : vector<8x128xf32>, vector<128x40xf32>, vector<8x40xf32> -> vector<8x40xf32>
    %198 = arith.addf %193, %197 : vector<8x40xf32>
    %c216 = arith.constant 216 : index
    %c0_183 = arith.constant 0 : index
    %199 = vector.load %arg13[%c216, %c0_183] : memref<256x128xf32, #tpu.memory_space<vmem>>, vector<8x128xf32>
    %c27 = arith.constant 27 : index
    %c0_184 = arith.constant 0 : index
    %c0_185 = arith.constant 0 : index
    %200 = vector.load %arg8[%c27, %c0_184, %c0_185] : memref<32x128x40xf32, #tpu.memory_space<vmem>>, vector<1x128x40xf32>
    %201 = vector.shape_cast %200 : vector<1x128x40xf32> to vector<128x40xf32>
    %cst_186 = arith.constant dense<0.000000e+00> : vector<8x40xf32>
    %202 = tpu.matmul %199, %201, %cst_186 {dimension_numbers = #tpu.dot_dimension_numbers<[1], [0], [0], [1], [0, 0, 1, 1], [], []>} : vector<8x128xf32>, vector<128x40xf32>, vector<8x40xf32> -> vector<8x40xf32>
    %203 = arith.addf %198, %202 : vector<8x40xf32>
    %c224 = arith.constant 224 : index
    %c0_187 = arith.constant 0 : index
    %204 = vector.load %arg13[%c224, %c0_187] : memref<256x128xf32, #tpu.memory_space<vmem>>, vector<8x128xf32>
    %c28 = arith.constant 28 : index
    %c0_188 = arith.constant 0 : index
    %c0_189 = arith.constant 0 : index
    %205 = vector.load %arg8[%c28, %c0_188, %c0_189] : memref<32x128x40xf32, #tpu.memory_space<vmem>>, vector<1x128x40xf32>
    %206 = vector.shape_cast %205 : vector<1x128x40xf32> to vector<128x40xf32>
    %cst_190 = arith.constant dense<0.000000e+00> : vector<8x40xf32>
    %207 = tpu.matmul %204, %206, %cst_190 {dimension_numbers = #tpu.dot_dimension_numbers<[1], [0], [0], [1], [0, 0, 1, 1], [], []>} : vector<8x128xf32>, vector<128x40xf32>, vector<8x40xf32> -> vector<8x40xf32>
    %208 = arith.addf %203, %207 : vector<8x40xf32>
    %c232 = arith.constant 232 : index
    %c0_191 = arith.constant 0 : index
    %209 = vector.load %arg13[%c232, %c0_191] : memref<256x128xf32, #tpu.memory_space<vmem>>, vector<8x128xf32>
    %c29 = arith.constant 29 : index
    %c0_192 = arith.constant 0 : index
    %c0_193 = arith.constant 0 : index
    %210 = vector.load %arg8[%c29, %c0_192, %c0_193] : memref<32x128x40xf32, #tpu.memory_space<vmem>>, vector<1x128x40xf32>
    %211 = vector.shape_cast %210 : vector<1x128x40xf32> to vector<128x40xf32>
    %cst_194 = arith.constant dense<0.000000e+00> : vector<8x40xf32>
    %212 = tpu.matmul %209, %211, %cst_194 {dimension_numbers = #tpu.dot_dimension_numbers<[1], [0], [0], [1], [0, 0, 1, 1], [], []>} : vector<8x128xf32>, vector<128x40xf32>, vector<8x40xf32> -> vector<8x40xf32>
    %213 = arith.addf %208, %212 : vector<8x40xf32>
    %c240 = arith.constant 240 : index
    %c0_195 = arith.constant 0 : index
    %214 = vector.load %arg13[%c240, %c0_195] : memref<256x128xf32, #tpu.memory_space<vmem>>, vector<8x128xf32>
    %c30 = arith.constant 30 : index
    %c0_196 = arith.constant 0 : index
    %c0_197 = arith.constant 0 : index
    %215 = vector.load %arg8[%c30, %c0_196, %c0_197] : memref<32x128x40xf32, #tpu.memory_space<vmem>>, vector<1x128x40xf32>
    %216 = vector.shape_cast %215 : vector<1x128x40xf32> to vector<128x40xf32>
    %cst_198 = arith.constant dense<0.000000e+00> : vector<8x40xf32>
    %217 = tpu.matmul %214, %216, %cst_198 {dimension_numbers = #tpu.dot_dimension_numbers<[1], [0], [0], [1], [0, 0, 1, 1], [], []>} : vector<8x128xf32>, vector<128x40xf32>, vector<8x40xf32> -> vector<8x40xf32>
    %218 = arith.addf %213, %217 : vector<8x40xf32>
    %c248 = arith.constant 248 : index
    %c0_199 = arith.constant 0 : index
    %219 = vector.load %arg13[%c248, %c0_199] : memref<256x128xf32, #tpu.memory_space<vmem>>, vector<8x128xf32>
    %c31 = arith.constant 31 : index
    %c0_200 = arith.constant 0 : index
    %c0_201 = arith.constant 0 : index
    %220 = vector.load %arg8[%c31, %c0_200, %c0_201] : memref<32x128x40xf32, #tpu.memory_space<vmem>>, vector<1x128x40xf32>
    %221 = vector.shape_cast %220 : vector<1x128x40xf32> to vector<128x40xf32>
    %cst_202 = arith.constant dense<0.000000e+00> : vector<8x40xf32>
    %222 = tpu.matmul %219, %221, %cst_202 {dimension_numbers = #tpu.dot_dimension_numbers<[1], [0], [0], [1], [0, 0, 1, 1], [], []>} : vector<8x128xf32>, vector<128x40xf32>, vector<8x40xf32> -> vector<8x40xf32>
    %223 = arith.addf %218, %222 : vector<8x40xf32>
    %224 = arith.addf %106, %145 : vector<8x40xf32>
    %225 = arith.addf %224, %184 : vector<8x40xf32>
    %226 = arith.addf %225, %223 : vector<8x40xf32>
    %c0_203 = arith.constant 0 : index
    %c0_204 = arith.constant 0 : index
    %227 = vector.load %arg9[%c0_203, %c0_204] : memref<1x40xf32, #tpu.memory_space<vmem>>, vector<1x40xf32>
    %228 = vector.broadcast %227 : vector<1x40xf32> to vector<8x40xf32>
    %229 = arith.addf %226, %228 : vector<8x40xf32>
    %cst_205 = arith.constant 0.000000e+00 : f32
    %230 = vector.broadcast %cst_205 : f32 to vector<8x40xf32>
    %231 = arith.maximumf %229, %230 : vector<8x40xf32>
    %c0_206 = arith.constant 0 : index
    %c0_207 = arith.constant 0 : index
    %232 = vector.load %arg10[%c0_206, %c0_207] : memref<40x2xf32, #tpu.memory_space<vmem>>, vector<40x2xf32>
    %cst_208 = arith.constant dense<0.000000e+00> : vector<8x2xf32>
    %233 = tpu.matmul %231, %232, %cst_208 {dimension_numbers = #tpu.dot_dimension_numbers<[1], [0], [0], [1], [0, 0, 1, 1], [], []>} : vector<8x40xf32>, vector<40x2xf32>, vector<8x2xf32> -> vector<8x2xf32>
    %c0_209 = arith.constant 0 : index
    %c0_210 = arith.constant 0 : index
    %234 = vector.load %arg11[%c0_209, %c0_210] : memref<1x2xf32, #tpu.memory_space<vmem>>, vector<1x2xf32>
    %235 = vector.broadcast %234 : vector<1x2xf32> to vector<8x2xf32>
    %236 = arith.addf %233, %235 : vector<8x2xf32>
    %cst_211 = arith.constant dense<0xFF800000> : vector<8xf32>
    %237 = vector.multi_reduction <maximumf>, %236, %cst_211 [1] : vector<8x2xf32> to vector<8xf32>
    %238 = vector.shape_cast %237 : vector<8xf32> to vector<8x1xf32>
    %239 = vector.broadcast %238 : vector<8x1xf32> to vector<8x2xf32>
    %240 = arith.subf %236, %239 : vector<8x2xf32>
    %241 = math.exp %240 : vector<8x2xf32>
    %cst_212 = arith.constant dense<0.000000e+00> : vector<8xf32>
    %242 = vector.multi_reduction <add>, %241, %cst_212 [1] : vector<8x2xf32> to vector<8xf32>
    %243 = vector.shape_cast %242 : vector<8xf32> to vector<8x1xf32>
    %244 = vector.broadcast %243 : vector<8x1xf32> to vector<8x2xf32>
    %245 = arith.divf %241, %244 : vector<8x2xf32>
    %c0_213 = arith.constant 0 : index
    %c0_214 = arith.constant 0 : index
    %246 = vector.load %arg12[%c0_213, %c0_214] : memref<8x2xf32, #tpu.memory_space<vmem>>, vector<8x2xf32>
    tpu.vector_store %arg12[%c0_213, %c0_214], %245 {strides = array<i32>} : memref<8x2xf32, #tpu.memory_space<vmem>>, vector<8x2xf32>,
    return
  }
  func.func @transform_0(%arg0: i32) -> (i32, i32, i32) {
    %c0_i32 = arith.constant 0 : i32
    %c0_i32_0 = arith.constant 0 : i32
    %c0_i32_1 = arith.constant 0 : i32
    return %arg0, %c0_i32, %c0_i32_0 : i32, i32, i32
  }
  func.func @transform_1(%arg0: i32) -> (i32, i32, i32) {
    %c0_i32 = arith.constant 0 : i32
    %c0_i32_0 = arith.constant 0 : i32
    %c0_i32_1 = arith.constant 0 : i32
    %c0_i32_2 = arith.constant 0 : i32
    return %c0_i32, %c0_i32_0, %c0_i32_1 : i32, i32, i32
  }
  func.func @transform_2(%arg0: i32) -> (i32, i32) {
    %c0_i32 = arith.constant 0 : i32
    %c0_i32_0 = arith.constant 0 : i32
    %c0_i32_1 = arith.constant 0 : i32
    return %c0_i32, %c0_i32_0 : i32, i32
  }
  func.func @transform_3(%arg0: i32) -> (i32, i32) {
    %c0_i32 = arith.constant 0 : i32
    %c0_i32_0 = arith.constant 0 : i32
    %c0_i32_1 = arith.constant 0 : i32
    return %c0_i32, %c0_i32_0 : i32, i32
  }
  func.func @transform_4(%arg0: i32) -> (i32, i32) {
    %c0_i32 = arith.constant 0 : i32
    %c0_i32_0 = arith.constant 0 : i32
    %c0_i32_1 = arith.constant 0 : i32
    return %c0_i32, %c0_i32_0 : i32, i32
  }
  func.func @transform_5(%arg0: i32) -> (i32, i32, i32) {
    %c0_i32 = arith.constant 0 : i32
    %c0_i32_0 = arith.constant 0 : i32
    %c0_i32_1 = arith.constant 0 : i32
    %c0_i32_2 = arith.constant 0 : i32
    return %c0_i32, %c0_i32_0, %c0_i32_1 : i32, i32, i32
  }
  func.func @transform_6(%arg0: i32) -> (i32, i32) {
    %c0_i32 = arith.constant 0 : i32
    %c0_i32_0 = arith.constant 0 : i32
    %c0_i32_1 = arith.constant 0 : i32
    return %c0_i32, %c0_i32_0 : i32, i32
  }
  func.func @transform_7(%arg0: i32) -> (i32, i32, i32) {
    %c0_i32 = arith.constant 0 : i32
    %c0_i32_0 = arith.constant 0 : i32
    %c0_i32_1 = arith.constant 0 : i32
    %c0_i32_2 = arith.constant 0 : i32
    return %c0_i32, %c0_i32_0, %c0_i32_1 : i32, i32, i32
  }
  func.func @transform_8(%arg0: i32) -> (i32, i32) {
    %c0_i32 = arith.constant 0 : i32
    %c0_i32_0 = arith.constant 0 : i32
    %c0_i32_1 = arith.constant 0 : i32
    return %c0_i32, %c0_i32_0 : i32, i32
  }
  func.func @transform_9(%arg0: i32) -> (i32, i32) {
    %c0_i32 = arith.constant 0 : i32
    %c0_i32_0 = arith.constant 0 : i32
    %c0_i32_1 = arith.constant 0 : i32
    return %c0_i32, %c0_i32_0 : i32, i32
  }
  func.func @transform_10(%arg0: i32) -> (i32, i32) {
    %c0_i32 = arith.constant 0 : i32
    %c0_i32_0 = arith.constant 0 : i32
    %c0_i32_1 = arith.constant 0 : i32
    return %c0_i32, %c0_i32_0 : i32, i32
  }
  func.func @transform_11(%arg0: i32) -> (i32, i32) {
    %c0_i32 = arith.constant 0 : i32
    %c0_i32_0 = arith.constant 0 : i32
    return %arg0, %c0_i32 : i32, i32
  }
}

</mosaic_0001>

<llo_original>
// kernel: crnn_cla_forward.1
$region0: #{crnn_cla_forward.1}
  #allocation0 [shape = 'u32[]', space=smem, size = 0x4, offset = 0x4, fixed_abs, tag = 'smem constant byte address 0x4 - core index']
  #allocation1 [shape = 'u32[72,128]{1,0:T(1,128)}', space=vmem, size = 0x9000, scoped, tag = 'internal scratch']
  #allocation2 [shape = 'f32[256,128]{1,0:T(8,128)}', space=vmem, size = 0x20000, scoped, tag = 'scratch operand']
  #allocation3 [shape = 'f32[272,128]{1,0:T(8,128)}', space=vmem, size = 0x22000, scoped, tag = 'scratch operand']
  %s0 = inlined_call_operand.vmem [shape: f32[1,272,16], index: 0, kind: input, shape index: {}]
  %s1 = inlined_call_operand.vmem [shape: f32[3,16,128], index: 1, kind: input, shape index: {}]
  %s2 = inlined_call_operand.vmem [shape: f32[3,128], index: 2, kind: input, shape index: {}]
  %s3 = inlined_call_operand.vmem [shape: f32[128,128], index: 3, kind: input, shape index: {}]
  %s4 = inlined_call_operand.vmem [shape: f32[3,128], index: 4, kind: input, shape index: {}]
  %s5 = inlined_call_operand.vmem [shape: f32[3,128,128], index: 5, kind: input, shape index: {}]
  %s6 = inlined_call_operand.vmem [shape: f32[2,128], index: 6, kind: input, shape index: {}]
  %s7 = inlined_call_operand.vmem [shape: f32[32,128,40], index: 7, kind: input, shape index: {}]
  %s8 = inlined_call_operand.vmem [shape: f32[1,40], index: 8, kind: input, shape index: {}]
  %s9 = inlined_call_operand.vmem [shape: f32[40,2], index: 9, kind: input, shape index: {}]
  %s10 = inlined_call_operand.vmem [shape: f32[1,2], index: 10, kind: input, shape index: {}]
  %s11 = inlined_call_operand.vmem [shape: f32[8,2], index: 11, kind: output, shape index: {}]
  %s12 = sld [smem:[#allocation0]]
  $region54: #{crnn_cla_forward.1} parent=0
    _
  %s14 = ssub.s32 1, %s12
  %s15 = scalar_select 0, %s14, %s12
  // Predicated region
  $region2: #{crnn_cla_forward.1} parent=0 // pred_check
    _
  $region3: #{crnn_cla_forward.1} parent=0 // pred_check_branch
    %17 = sbr.rel (0) target = $region5
  $region4: #{crnn_cla_forward.1} parent=0 // pred_region
    _
  $region5: #{crnn_cla_forward.1} parent=0 // pred_fallthru
    _
  // Predicated region
  $region6: #{crnn_cla_forward.1} parent=0 // pred_check
    _
  $region7: #{crnn_cla_forward.1} parent=0 // pred_check_branch
    %19 = sbr.rel (0) target = $region9
  $region8: #{crnn_cla_forward.1} parent=0 // pred_region
    _
  $region9: #{crnn_cla_forward.1} parent=0 // pred_fallthru
    _
  // Predicated region
  $region10: #{crnn_cla_forward.1} parent=0 // pred_check
    _
  $region11: #{crnn_cla_forward.1} parent=0 // pred_check_branch
    %21 = sbr.rel (0) target = $region13
  $region12: #{crnn_cla_forward.1} parent=0 // pred_region
    _
  $region13: #{crnn_cla_forward.1} parent=0 // pred_fallthru
    _
  // Predicated region
  $region14: #{crnn_cla_forward.1} parent=0 // pred_check
    _
  $region15: #{crnn_cla_forward.1} parent=0 // pred_check_branch
    %23 = sbr.rel (0) target = $region17
  $region16: #{crnn_cla_forward.1} parent=0 // pred_region
    _
  $region17: #{crnn_cla_forward.1} parent=0 // pred_fallthru
    _
  // Predicated region
  $region18: #{crnn_cla_forward.1} parent=0 // pred_check
    _
  $region19: #{crnn_cla_forward.1} parent=0 // pred_check_branch
    %25 = sbr.rel (0) target = $region21
  $region20: #{crnn_cla_forward.1} parent=0 // pred_region
    _
  $region21: #{crnn_cla_forward.1} parent=0 // pred_fallthru
    _
  // Predicated region
  $region22: #{crnn_cla_forward.1} parent=0 // pred_check
    _
  $region23: #{crnn_cla_forward.1} parent=0 // pred_check_branch
    %27 = sbr.rel (0) target = $region25
  $region24: #{crnn_cla_forward.1} parent=0 // pred_region
    _
  $region25: #{crnn_cla_forward.1} parent=0 // pred_fallthru
    _
  // Predicated region
  $region26: #{crnn_cla_forward.1} parent=0 // pred_check
    _
  $region27: #{crnn_cla_forward.1} parent=0 // pred_check_branch
    %29 = sbr.rel (0) target = $region29
  $region28: #{crnn_cla_forward.1} parent=0 // pred_region
    _
  $region29: #{crnn_cla_forward.1} parent=0 // pred_fallthru
    _
  // Predicated region
  $region30: #{crnn_cla_forward.1} parent=0 // pred_check
    _
  $region31: #{crnn_cla_forward.1} parent=0 // pred_check_branch
    %31 = sbr.rel (0) target = $region33
  $region32: #{crnn_cla_forward.1} parent=0 // pred_region
    _
  $region33: #{crnn_cla_forward.1} parent=0 // pred_fallthru
    _
  // Predicated region
  $region34: #{crnn_cla_forward.1} parent=0 // pred_check
    _
  $region35: #{crnn_cla_forward.1} parent=0 // pred_check_branch
    %33 = sbr.rel (0) target = $region37
  $region36: #{crnn_cla_forward.1} parent=0 // pred_region
    _
  $region37: #{crnn_cla_forward.1} parent=0 // pred_fallthru
    _
  // Predicated region
  $region38: #{crnn_cla_forward.1} parent=0 // pred_check
    _
  $region39: #{crnn_cla_forward.1} parent=0 // pred_check_branch
    %35 = sbr.rel (0) target = $region41
  $region40: #{crnn_cla_forward.1} parent=0 // pred_region
    _
  $region41: #{crnn_cla_forward.1} parent=0 // pred_fallthru
    _
  // Predicated region
  $region42: #{crnn_cla_forward.1} parent=0 // pred_check
    _
  $region43: #{crnn_cla_forward.1} parent=0 // pred_check_branch
    %37 = sbr.rel (0) target = $region45
  $region44: #{crnn_cla_forward.1} parent=0 // pred_region
    _
  $region45: #{crnn_cla_forward.1} parent=0 // pred_fallthru
    _
  %38 = vst [vmem:[#allocation3] sm:$0xff] 0.0
  %39 = vst [vmem:[#allocation3 + $0x108] sm:$0xff] 0.0
  %v40 = vld [vmem:[%s2] sm:$0x1]
  %v41 = vld [vmem:[%s2 + $0x1] sm:$0x1]
  %v42 = vld [vmem:[%s2 + $0x2] sm:$0x1]
  %v43 = vld [vmem:[%s4] sm:$0x1]
  %v44 = vld [vmem:[%s4 + $0x1] sm:$0x1]
  %v45 = vld [vmem:[%s4 + $0x2] sm:$0x1]
  %v46 = vld [vmem:[%s6] sm:$0x1]
  %v47 = vld [vmem:[%s6 + $0x1] sm:$0x1]
  %v48 = vld [vmem:[%s0] sm:$0xff]
  %v49 = vld [vmem:[%s0 + $0x8] sm:$0xff]
  %v50 = vld [vmem:[%s0 + $0x10] sm:$0xff]
  %v51 = vld [vmem:[%s0 + $0x18] sm:$0xff]
  %v52 = vld [vmem:[%s0 + $0x20] sm:$0xff]
  %v53 = vld [vmem:[%s0 + $0x28] sm:$0xff]
  %v54 = vld [vmem:[%s0 + $0x30] sm:$0xff]
  %v55 = vld [vmem:[%s0 + $0x38] sm:$0xff]
  %v56 = vld [vmem:[%s0 + $0x40] sm:$0xff]
  %v57 = vld [vmem:[%s0 + $0x48] sm:$0xff]
  %v58 = vld [vmem:[%s0 + $0x50] sm:$0xff]
  %v59 = vld [vmem:[%s0 + $0x58] sm:$0xff]
  %v60 = vld [vmem:[%s0 + $0x60] sm:$0xff]
  %v61 = vld [vmem:[%s0 + $0x68] sm:$0xff]
  %v62 = vld [vmem:[%s0 + $0x70] sm:$0xff]
  %v63 = vld [vmem:[%s0 + $0x78] sm:$0xff]
  %v64 = vld [vmem:[%s0 + $0x80] sm:$0xff]
  %v65 = vld [vmem:[%s0 + $0x88] sm:$0xff]
  %v66 = vld [vmem:[%s0 + $0x90] sm:$0xff]
  %v67 = vld [vmem:[%s0 + $0x98] sm:$0xff]
  %v68 = vld [vmem:[%s0 + $0xa0] sm:$0xff]
  %v69 = vld [vmem:[%s0 + $0xa8] sm:$0xff]
  %v70 = vld [vmem:[%s0 + $0xb0] sm:$0xff]
  %v71 = vld [vmem:[%s0 + $0xb8] sm:$0xff]
  %v72 = vld [vmem:[%s0 + $0xc0] sm:$0xff]
  %v73 = vld [vmem:[%s0 + $0xc8] sm:$0xff]
  %v74 = vld [vmem:[%s0 + $0xd0] sm:$0xff]
  %v75 = vld [vmem:[%s0 + $0xd8] sm:$0xff]
  %v76 = vld [vmem:[%s0 + $0xe0] sm:$0xff]
  %v77 = vld [vmem:[%s0 + $0xe8] sm:$0xff]
  %v78 = vld [vmem:[%s0 + $0xf0] sm:$0xff]
  %v79 = vld [vmem:[%s0 + $0xf8] sm:$0xff]
  %v80 = vld [vmem:[%s1] sm:$0xff]
  %v81 = vld [vmem:[%s1 + $0x8] sm:$0xff]
  %v82 = vld [vmem:[%s0 + $0x100] sm:$0xff]
  %s83 = scalar_lea.vmem %s1, 16
  %v84 = vld [vmem:[%s83] sm:$0xff]
  %v85 = vld [vmem:[%s83 + $0x8] sm:$0xff]
  %vm86 = vcmask 130048
  %v88 = vsel %vm86, %v49, 0
  %v91 = vsel %vm86, %v50, 0
  %v94 = vsel %vm86, %v51, 0
  %v97 = vsel %vm86, %v52, 0
  %v100 = vsel %vm86, %v53, 0
  %v103 = vsel %vm86, %v54, 0
  %v106 = vsel %vm86, %v55, 0
  %v109 = vsel %vm86, %v56, 0
  %v112 = vsel %vm86, %v57, 0
  %v115 = vsel %vm86, %v58, 0
  %v118 = vsel %vm86, %v59, 0
  %v121 = vsel %vm86, %v60, 0
  %v124 = vsel %vm86, %v61, 0
  %v127 = vsel %vm86, %v62, 0
  %v130 = vsel %vm86, %v63, 0
  %v133 = vsel %vm86, %v64, 0
  %v136 = vsel %vm86, %v65, 0
  %v139 = vsel %vm86, %v66, 0
  %v142 = vsel %vm86, %v67, 0
  %v145 = vsel %vm86, %v68, 0
  %v148 = vsel %vm86, %v69, 0
  %v151 = vsel %vm86, %v70, 0
  %v154 = vsel %vm86, %v71, 0
  %v157 = vsel %vm86, %v72, 0
  %v160 = vsel %vm86, %v73, 0
  %v163 = vsel %vm86, %v74, 0
  %v166 = vsel %vm86, %v75, 0
  %v169 = vsel %vm86, %v76, 0
  %v172 = vsel %vm86, %v77, 0
  %v175 = vsel %vm86, %v78, 0
  %v178 = vsel %vm86, %v79, 0
  %v181 = vsel %vm86, %v82, 0
  %183 = vmatpush.msra.mxu0 0.0
  %184 = vmatpush.msra.mxu0 0.0
  %185 = vmatpush.msra.mxu0 0.0
  %186 = vmatpush.msra.mxu0 0.0
  %187 = vmatpush.msra.mxu0 0.0
  %188 = vmatpush.msra.mxu0 0.0
  %189 = vmatpush.msra.mxu0 0.0
  %190 = vmatpush.msra.mxu0 0.0
  %191 = vmatpush.msra.mxu0 0.0
  %192 = vmatpush.msra.mxu0 0.0
  %193 = vmatpush.msra.mxu0 0.0
  %194 = vmatpush.msra.mxu0 0.0
  %195 = vmatpush.msra.mxu0 0.0
  %196 = vmatpush.msra.mxu0 0.0
  %197 = vmatpush.msra.mxu0 %v85
  %198 = vmatpush.msra.mxu0 %v84
  %199 = vmatmul.f32.gmra.mxu0 %v88
  %v200 = vpop.f32.mrf.mxu0
  %v201 = vadd.f32 0.0, %v200
  %202 = vmatmul.f32.gmra.mxu0 %v91
  %v203 = vpop.f32.mrf.mxu0
  %v204 = vadd.f32 0.0, %v203
  %205 = vmatmul.f32.gmra.mxu0 %v94
  %v206 = vpop.f32.mrf.mxu0
  %v207 = vadd.f32 0.0, %v206
  %208 = vmatmul.f32.gmra.mxu0 %v97
  %v209 = vpop.f32.mrf.mxu0
  %v210 = vadd.f32 0.0, %v209
  %211 = vmatmul.f32.gmra.mxu0 %v100
  %v212 = vpop.f32.mrf.mxu0
  %v213 = vadd.f32 0.0, %v212
  %214 = vmatmul.f32.gmra.mxu0 %v103
  %v215 = vpop.f32.mrf.mxu0
  %v216 = vadd.f32 0.0, %v215
  %217 = vmatmul.f32.gmra.mxu0 %v106
  %v218 = vpop.f32.mrf.mxu0
  %v219 = vadd.f32 0.0, %v218
  %220 = vmatmul.f32.gmra.mxu0 %v109
  %v221 = vpop.f32.mrf.mxu0
  %v222 = vadd.f32 0.0, %v221
  %223 = vmatmul.f32.gmra.mxu0 %v112
  %v224 = vpop.f32.mrf.mxu0
  %v225 = vadd.f32 0.0, %v224
  %226 = vmatmul.f32.gmra.mxu0 %v115
  %v227 = vpop.f32.mrf.mxu0
  %v228 = vadd.f32 0.0, %v227
  %229 = vmatmul.f32.gmra.mxu0 %v118
  %v230 = vpop.f32.mrf.mxu0
  %v231 = vadd.f32 0.0, %v230
  %232 = vmatmul.f32.gmra.mxu0 %v121
  %v233 = vpop.f32.mrf.mxu0
  %v234 = vadd.f32 0.0, %v233
  %235 = vmatmul.f32.gmra.mxu0 %v124
  %v236 = vpop.f32.mrf.mxu0
  %v237 = vadd.f32 0.0, %v236
  %238 = vmatmul.f32.gmra.mxu0 %v127
  %v239 = vpop.f32.mrf.mxu0
  %v240 = vadd.f32 0.0, %v239
  %241 = vmatmul.f32.gmra.mxu0 %v130
  %v242 = vpop.f32.mrf.mxu0
  %v243 = vadd.f32 0.0, %v242
  %244 = vmatmul.f32.gmra.mxu0 %v133
  %v245 = vpop.f32.mrf.mxu0
  %v246 = vadd.f32 0.0, %v245
  %247 = vmatmul.f32.gmra.mxu0 %v136
  %v248 = vpop.f32.mrf.mxu0
  %v249 = vadd.f32 0.0, %v248
  %250 = vmatmul.f32.gmra.mxu0 %v139
  %v251 = vpop.f32.mrf.mxu0
  %v252 = vadd.f32 0.0, %v251
  %253 = vmatmul.f32.gmra.mxu0 %v142
  %v254 = vpop.f32.mrf.mxu0
  %v255 = vadd.f32 0.0, %v254
  %256 = vmatmul.f32.gmra.mxu0 %v145
  %v257 = vpop.f32.mrf.mxu0
  %v258 = vadd.f32 0.0, %v257
  %259 = vmatmul.f32.gmra.mxu0 %v148
  %v260 = vpop.f32.mrf.mxu0
  %v261 = vadd.f32 0.0, %v260
  %262 = vmatmul.f32.gmra.mxu0 %v151
  %v263 = vpop.f32.mrf.mxu0
  %v264 = vadd.f32 0.0, %v263
  %265 = vmatmul.f32.gmra.mxu0 %v154
  %v266 = vpop.f32.mrf.mxu0
  %v267 = vadd.f32 0.0, %v266
  %268 = vmatmul.f32.gmra.mxu0 %v157
  %v269 = vpop.f32.mrf.mxu0
  %v270 = vadd.f32 0.0, %v269
  %271 = vmatmul.f32.gmra.mxu0 %v160
  %v272 = vpop.f32.mrf.mxu0
  %v273 = vadd.f32 0.0, %v272
  %274 = vmatmul.f32.gmra.mxu0 %v163
  %v275 = vpop.f32.mrf.mxu0
  %v276 = vadd.f32 0.0, %v275
  %277 = vmatmul.f32.gmra.mxu0 %v166
  %v278 = vpop.f32.mrf.mxu0
  %v279 = vadd.f32 0.0, %v278
  %280 = vmatmul.f32.gmra.mxu0 %v169
  %v281 = vpop.f32.mrf.mxu0
  %v282 = vadd.f32 0.0, %v281
  %283 = vmatmul.f32.gmra.mxu0 %v172
  %v284 = vpop.f32.mrf.mxu0
  %v285 = vadd.f32 0.0, %v284
  %286 = vmatmul.f32.gmra.mxu0 %v175
  %v287 = vpop.f32.mrf.mxu0
  %v288 = vadd.f32 0.0, %v287
  %289 = vmatmul.f32.gmra.mxu0 %v178
  %v290 = vpop.f32.mrf.mxu0
  %v291 = vadd.f32 0.0, %v290
  %292 = vmatmul.f32.gmra.mxu0 %v181
  %v293 = vpop.f32.mrf.mxu0
  %v294 = vadd.f32 0.0, %v293
  %295 = vdwg.mxu0
  %v297 = vsel %vm86, %v48, 0
  %299 = vmatpush.msra.mxu0 0.0
  %300 = vmatpush.msra.mxu0 0.0
  %301 = vmatpush.msra.mxu0 0.0
  %302 = vmatpush.msra.mxu0 0.0
  %303 = vmatpush.msra.mxu0 0.0
  %304 = vmatpush.msra.mxu0 0.0
  %305 = vmatpush.msra.mxu0 0.0
  %306 = vmatpush.msra.mxu0 0.0
  %307 = vmatpush.msra.mxu0 0.0
  %308 = vmatpush.msra.mxu0 0.0
  %309 = vmatpush.msra.mxu0 0.0
  %310 = vmatpush.msra.mxu0 0.0
  %311 = vmatpush.msra.mxu0 0.0
  %312 = vmatpush.msra.mxu0 0.0
  %313 = vmatpush.msra.mxu0 %v81
  %314 = vmatpush.msra.mxu0 %v80
  %315 = vmatmul.f32.gmra.mxu0 %v297
  %v316 = vpop.f32.mrf.mxu0
  %v317 = vadd.f32 %v201, %v316
  %318 = vmatmul.f32.gmra.mxu0 %v88
  %v319 = vpop.f32.mrf.mxu0
  %v320 = vadd.f32 %v204, %v319
  %321 = vmatmul.f32.gmra.mxu0 %v91
  %v322 = vpop.f32.mrf.mxu0
  %v323 = vadd.f32 %v207, %v322
  %324 = vmatmul.f32.gmra.mxu0 %v94
  %v325 = vpop.f32.mrf.mxu0
  %v326 = vadd.f32 %v210, %v325
  %327 = vmatmul.f32.gmra.mxu0 %v97
  %v328 = vpop.f32.mrf.mxu0
  %v329 = vadd.f32 %v213, %v328
  %330 = vmatmul.f32.gmra.mxu0 %v100
  %v331 = vpop.f32.mrf.mxu0
  %v332 = vadd.f32 %v216, %v331
  %333 = vmatmul.f32.gmra.mxu0 %v103
  %v334 = vpop.f32.mrf.mxu0
  %v335 = vadd.f32 %v219, %v334
  %336 = vmatmul.f32.gmra.mxu0 %v106
  %v337 = vpop.f32.mrf.mxu0
  %v338 = vadd.f32 %v222, %v337
  %339 = vmatmul.f32.gmra.mxu0 %v109
  %v340 = vpop.f32.mrf.mxu0
  %v341 = vadd.f32 %v225, %v340
  %342 = vmatmul.f32.gmra.mxu0 %v112
  %v343 = vpop.f32.mrf.mxu0
  %v344 = vadd.f32 %v228, %v343
  %345 = vmatmul.f32.gmra.mxu0 %v115
  %v346 = vpop.f32.mrf.mxu0
  %v347 = vadd.f32 %v231, %v346
  %348 = vmatmul.f32.gmra.mxu0 %v118
  %v349 = vpop.f32.mrf.mxu0
  %v350 = vadd.f32 %v234, %v349
  %351 = vmatmul.f32.gmra.mxu0 %v121
  %v352 = vpop.f32.mrf.mxu0
  %v353 = vadd.f32 %v237, %v352
  %354 = vmatmul.f32.gmra.mxu0 %v124
  %v355 = vpop.f32.mrf.mxu0
  %v356 = vadd.f32 %v240, %v355
  %357 = vmatmul.f32.gmra.mxu0 %v127
  %v358 = vpop.f32.mrf.mxu0
  %v359 = vadd.f32 %v243, %v358
  %360 = vmatmul.f32.gmra.mxu0 %v130
  %v361 = vpop.f32.mrf.mxu0
  %v362 = vadd.f32 %v246, %v361
  %363 = vmatmul.f32.gmra.mxu0 %v133
  %v364 = vpop.f32.mrf.mxu0
  %v365 = vadd.f32 %v249, %v364
  %366 = vmatmul.f32.gmra.mxu0 %v136
  %v367 = vpop.f32.mrf.mxu0
  %v368 = vadd.f32 %v252, %v367
  %369 = vmatmul.f32.gmra.mxu0 %v139
  %v370 = vpop.f32.mrf.mxu0
  %v371 = vadd.f32 %v255, %v370
  %372 = vmatmul.f32.gmra.mxu0 %v142
  %v373 = vpop.f32.mrf.mxu0
  %v374 = vadd.f32 %v258, %v373
  %375 = vmatmul.f32.gmra.mxu0 %v145
  %v376 = vpop.f32.mrf.mxu0
  %v377 = vadd.f32 %v261, %v376
  %378 = vmatmul.f32.gmra.mxu0 %v148
  %v379 = vpop.f32.mrf.mxu0
  %v380 = vadd.f32 %v264, %v379
  %381 = vmatmul.f32.gmra.mxu0 %v151
  %v382 = vpop.f32.mrf.mxu0
  %v383 = vadd.f32 %v267, %v382
  %384 = vmatmul.f32.gmra.mxu0 %v154
  %v385 = vpop.f32.mrf.mxu0
  %v386 = vadd.f32 %v270, %v385
  %387 = vmatmul.f32.gmra.mxu0 %v157
  %v388 = vpop.f32.mrf.mxu0
  %v389 = vadd.f32 %v273, %v388
  %390 = vmatmul.f32.gmra.mxu0 %v160
  %v391 = vpop.f32.mrf.mxu0
  %v392 = vadd.f32 %v276, %v391
  %393 = vmatmul.f32.gmra.mxu0 %v163
  %v394 = vpop.f32.mrf.mxu0
  %v395 = vadd.f32 %v279, %v394
  %396 = vmatmul.f32.gmra.mxu0 %v166
  %v397 = vpop.f32.mrf.mxu0
  %v398 = vadd.f32 %v282, %v397
  %399 = vmatmul.f32.gmra.mxu0 %v169
  %v400 = vpop.f32.mrf.mxu0
  %v401 = vadd.f32 %v285, %v400
  %402 = vmatmul.f32.gmra.mxu0 %v172
  %v403 = vpop.f32.mrf.mxu0
  %v404 = vadd.f32 %v288, %v403
  %405 = vmatmul.f32.gmra.mxu0 %v175
  %v406 = vpop.f32.mrf.mxu0
  %v407 = vadd.f32 %v291, %v406
  %408 = vmatmul.f32.gmra.mxu0 %v178
  %v409 = vpop.f32.mrf.mxu0
  %v410 = vadd.f32 %v294, %v409
  %411 = vdwg.mxu0
  %v412 = vld [vmem:[%s0 + $0x10] sm:$0xff]
  %v413 = vld [vmem:[%s0 + $0x18] sm:$0xff]
  %v414 = vld [vmem:[%s0 + $0x20] sm:$0xff]
  %v415 = vld [vmem:[%s0 + $0x28] sm:$0xff]
  %v416 = vld [vmem:[%s0 + $0x30] sm:$0xff]
  %v417 = vld [vmem:[%s0 + $0x38] sm:$0xff]
  %v418 = vld [vmem:[%s0 + $0x40] sm:$0xff]
  %v419 = vld [vmem:[%s0 + $0x48] sm:$0xff]
  %v420 = vld [vmem:[%s0 + $0x50] sm:$0xff]
  %v421 = vld [vmem:[%s0 + $0x58] sm:$0xff]
  %v422 = vld [vmem:[%s0 + $0x60] sm:$0xff]
  %v423 = vld [vmem:[%s0 + $0x68] sm:$0xff]
  %v424 = vld [vmem:[%s0 + $0x70] sm:$0xff]
  %v425 = vld [vmem:[%s0 + $0x78] sm:$0xff]
  %v426 = vld [vmem:[%s0 + $0x80] sm:$0xff]
  %v427 = vld [vmem:[%s0 + $0x88] sm:$0xff]
  %v428 = vld [vmem:[%s0 + $0x90] sm:$0xff]
  %v429 = vld [vmem:[%s0 + $0x98] sm:$0xff]
  %v430 = vld [vmem:[%s0 + $0xa0] sm:$0xff]
  %v431 = vld [vmem:[%s0 + $0xa8] sm:$0xff]
  %v432 = vld [vmem:[%s0 + $0xb0] sm:$0xff]
  %v433 = vld [vmem:[%s0 + $0xb8] sm:$0xff]
  %v434 = vld [vmem:[%s0 + $0xc0] sm:$0xff]
  %v435 = vld [vmem:[%s0 + $0xc8] sm:$0xff]
  %v436 = vld [vmem:[%s0 + $0xd0] sm:$0xff]
  %v437 = vld [vmem:[%s0 + $0xd8] sm:$0xff]
  %v438 = vld [vmem:[%s0 + $0xe0] sm:$0xff]
  %v439 = vld [vmem:[%s0 + $0xe8] sm:$0xff]
  %v440 = vld [vmem:[%s0 + $0xf0] sm:$0xff]
  %v441 = vld [vmem:[%s0 + $0xf8] sm:$0xff]
  %v442 = vld [vmem:[%s0 + $0x100] sm:$0xff]
  %v443 = vld [vmem:[%s0 + $0x108] sm:$0xff]
  %s444 = scalar_lea.vmem %s1, 32
  %v445 = vld [vmem:[%s444] sm:$0xff]
  %v446 = vld [vmem:[%s444 + $0x8] sm:$0xff]
  %v448 = vsel %vm86, %v412, 0
  %v451 = vsel %vm86, %v413, 0
  %v454 = vsel %vm86, %v414, 0
  %v457 = vsel %vm86, %v415, 0
  %v460 = vsel %vm86, %v416, 0
  %v463 = vsel %vm86, %v417, 0
  %v466 = vsel %vm86, %v418, 0
  %v469 = vsel %vm86, %v419, 0
  %v472 = vsel %vm86, %v420, 0
  %v475 = vsel %vm86, %v421, 0
  %v478 = vsel %vm86, %v422, 0
  %v481 = vsel %vm86, %v423, 0
  %v484 = vsel %vm86, %v424, 0
  %v487 = vsel %vm86, %v425, 0
  %v490 = vsel %vm86, %v426, 0
  %v493 = vsel %vm86, %v427, 0
  %v496 = vsel %vm86, %v428, 0
  %v499 = vsel %vm86, %v429, 0
  %v502 = vsel %vm86, %v430, 0
  %v505 = vsel %vm86, %v431, 0
  %v508 = vsel %vm86, %v432, 0
  %v511 = vsel %vm86, %v433, 0
  %v514 = vsel %vm86, %v434, 0
  %v517 = vsel %vm86, %v435, 0
  %v520 = vsel %vm86, %v436, 0
  %v523 = vsel %vm86, %v437, 0
  %v526 = vsel %vm86, %v438, 0
  %v529 = vsel %vm86, %v439, 0
  %v532 = vsel %vm86, %v440, 0
  %v535 = vsel %vm86, %v441, 0
  %v538 = vsel %vm86, %v442, 0
  %v541 = vsel %vm86, %v443, 0
  %543 = vmatpush.msra.mxu0 0.0
  %544 = vmatpush.msra.mxu0 0.0
  %545 = vmatpush.msra.mxu0 0.0
  %546 = vmatpush.msra.mxu0 0.0
  %547 = vmatpush.msra.mxu0 0.0
  %548 = vmatpush.msra.mxu0 0.0
  %549 = vmatpush.msra.mxu0 0.0
  %550 = vmatpush.msra.mxu0 0.0
  %551 = vmatpush.msra.mxu0 0.0
  %552 = vmatpush.msra.mxu0 0.0
  %553 = vmatpush.msra.mxu0 0.0
  %554 = vmatpush.msra.mxu0 0.0
  %555 = vmatpush.msra.mxu0 0.0
  %556 = vmatpush.msra.mxu0 0.0
  %557 = vmatpush.msra.mxu0 %v446
  %558 = vmatpush.msra.mxu0 %v445
  %559 = vmatmul.f32.gmra.mxu0 %v448
  %v560 = vpop.f32.mrf.mxu0
  %v561 = vadd.f32 0.0, %v560
  %562 = vmatmul.f32.gmra.mxu0 %v451
  %v563 = vpop.f32.mrf.mxu0
  %v564 = vadd.f32 0.0, %v563
  %565 = vmatmul.f32.gmra.mxu0 %v454
  %v566 = vpop.f32.mrf.mxu0
  %v567 = vadd.f32 0.0, %v566
  %568 = vmatmul.f32.gmra.mxu0 %v457
  %v569 = vpop.f32.mrf.mxu0
  %v570 = vadd.f32 0.0, %v569
  %571 = vmatmul.f32.gmra.mxu0 %v460
  %v572 = vpop.f32.mrf.mxu0
  %v573 = vadd.f32 0.0, %v572
  %574 = vmatmul.f32.gmra.mxu0 %v463
  %v575 = vpop.f32.mrf.mxu0
  %v576 = vadd.f32 0.0, %v575
  %577 = vmatmul.f32.gmra.mxu0 %v466
  %v578 = vpop.f32.mrf.mxu0
  %v579 = vadd.f32 0.0, %v578
  %580 = vmatmul.f32.gmra.mxu0 %v469
  %v581 = vpop.f32.mrf.mxu0
  %v582 = vadd.f32 0.0, %v581
  %583 = vmatmul.f32.gmra.mxu0 %v472
  %v584 = vpop.f32.mrf.mxu0
  %v585 = vadd.f32 0.0, %v584
  %586 = vmatmul.f32.gmra.mxu0 %v475
  %v587 = vpop.f32.mrf.mxu0
  %v588 = vadd.f32 0.0, %v587
  %589 = vmatmul.f32.gmra.mxu0 %v478
  %v590 = vpop.f32.mrf.mxu0
  %v591 = vadd.f32 0.0, %v590
  %592 = vmatmul.f32.gmra.mxu0 %v481
  %v593 = vpop.f32.mrf.mxu0
  %v594 = vadd.f32 0.0, %v593
  %595 = vmatmul.f32.gmra.mxu0 %v484
  %v596 = vpop.f32.mrf.mxu0
  %v597 = vadd.f32 0.0, %v596
  %598 = vmatmul.f32.gmra.mxu0 %v487
  %v599 = vpop.f32.mrf.mxu0
  %v600 = vadd.f32 0.0, %v599
  %601 = vmatmul.f32.gmra.mxu0 %v490
  %v602 = vpop.f32.mrf.mxu0
  %v603 = vadd.f32 0.0, %v602
  %604 = vmatmul.f32.gmra.mxu0 %v493
  %v605 = vpop.f32.mrf.mxu0
  %v606 = vadd.f32 0.0, %v605
  %607 = vmatmul.f32.gmra.mxu0 %v496
  %v608 = vpop.f32.mrf.mxu0
  %v609 = vadd.f32 0.0, %v608
  %610 = vmatmul.f32.gmra.mxu0 %v499
  %v611 = vpop.f32.mrf.mxu0
  %v612 = vadd.f32 0.0, %v611
  %613 = vmatmul.f32.gmra.mxu0 %v502
  %v614 = vpop.f32.mrf.mxu0
  %v615 = vadd.f32 0.0, %v614
  %616 = vmatmul.f32.gmra.mxu0 %v505
  %v617 = vpop.f32.mrf.mxu0
  %v618 = vadd.f32 0.0, %v617
  %619 = vmatmul.f32.gmra.mxu0 %v508
  %v620 = vpop.f32.mrf.mxu0
  %v621 = vadd.f32 0.0, %v620
  %622 = vmatmul.f32.gmra.mxu0 %v511
  %v623 = vpop.f32.mrf.mxu0
  %v624 = vadd.f32 0.0, %v623
  %625 = vmatmul.f32.gmra.mxu0 %v514
  %v626 = vpop.f32.mrf.mxu0
  %v627 = vadd.f32 0.0, %v626
  %628 = vmatmul.f32.gmra.mxu0 %v517
  %v629 = vpop.f32.mrf.mxu0
  %v630 = vadd.f32 0.0, %v629
  %631 = vmatmul.f32.gmra.mxu0 %v520
  %v632 = vpop.f32.mrf.mxu0
  %v633 = vadd.f32 0.0, %v632
  %634 = vmatmul.f32.gmra.mxu0 %v523
  %v635 = vpop.f32.mrf.mxu0
  %v636 = vadd.f32 0.0, %v635
  %637 = vmatmul.f32.gmra.mxu0 %v526
  %v638 = vpop.f32.mrf.mxu0
  %v639 = vadd.f32 0.0, %v638
  %640 = vmatmul.f32.gmra.mxu0 %v529
  %v641 = vpop.f32.mrf.mxu0
  %v642 = vadd.f32 0.0, %v641
  %643 = vmatmul.f32.gmra.mxu0 %v532
  %v644 = vpop.f32.mrf.mxu0
  %v645 = vadd.f32 0.0, %v644
  %646 = vmatmul.f32.gmra.mxu0 %v535
  %v647 = vpop.f32.mrf.mxu0
  %v648 = vadd.f32 0.0, %v647
  %649 = vmatmul.f32.gmra.mxu0 %v538
  %v650 = vpop.f32.mrf.mxu0
  %v651 = vadd.f32 0.0, %v650
  %652 = vmatmul.f32.gmra.mxu0 %v541
  %v653 = vpop.f32.mrf.mxu0
  %v654 = vadd.f32 0.0, %v653
  %655 = vdwg.mxu0
  %v656 = vadd.f32 %v317, %v561
  %v657 = vadd.f32 %v320, %v564
  %v658 = vadd.f32 %v323, %v567
  %v659 = vadd.f32 %v326, %v570
  %v660 = vadd.f32 %v329, %v573
  %v661 = vadd.f32 %v332, %v576
  %v662 = vadd.f32 %v335, %v579
  %v663 = vadd.f32 %v338, %v582
  %v664 = vadd.f32 %v341, %v585
  %v665 = vadd.f32 %v344, %v588
  %v666 = vadd.f32 %v347, %v591
  %v667 = vadd.f32 %v350, %v594
  %v668 = vadd.f32 %v353, %v597
  %v669 = vadd.f32 %v356, %v600
  %v670 = vadd.f32 %v359, %v603
  %v671 = vadd.f32 %v362, %v606
  %v672 = vadd.f32 %v365, %v609
  %v673 = vadd.f32 %v368, %v612
  %v674 = vadd.f32 %v371, %v615
  %v675 = vadd.f32 %v374, %v618
  %v676 = vadd.f32 %v377, %v621
  %v677 = vadd.f32 %v380, %v624
  %v678 = vadd.f32 %v383, %v627
  %v679 = vadd.f32 %v386, %v630
  %v680 = vadd.f32 %v389, %v633
  %v681 = vadd.f32 %v392, %v636
  %v682 = vadd.f32 %v395, %v639
  %v683 = vadd.f32 %v398, %v642
  %v684 = vadd.f32 %v401, %v645
  %v685 = vadd.f32 %v404, %v648
  %v686 = vadd.f32 %v407, %v651
  %v687 = vadd.f32 %v410, %v654
  %v688 = vperm.slane %v40, 0
  %v689 = vadd.f32 %v656, %v688
  %v690 = vadd.f32 %v657, %v688
  %v691 = vadd.f32 %v658, %v688
  %v692 = vadd.f32 %v659, %v688
  %v693 = vadd.f32 %v660, %v688
  %v694 = vadd.f32 %v661, %v688
  %v695 = vadd.f32 %v662, %v688
  %v696 = vadd.f32 %v663, %v688
  %v697 = vadd.f32 %v664, %v688
  %v698 = vadd.f32 %v665, %v688
  %v699 = vadd.f32 %v666, %v688
  %v700 = vadd.f32 %v667, %v688
  %v701 = vadd.f32 %v668, %v688
  %v702 = vadd.f32 %v669, %v688
  %v703 = vadd.f32 %v670, %v688
  %v704 = vadd.f32 %v671, %v688
  %v705 = vadd.f32 %v672, %v688
  %v706 = vadd.f32 %v673, %v688
  %v707 = vadd.f32 %v674, %v688
  %v708 = vadd.f32 %v675, %v688
  %v709 = vadd.f32 %v676, %v688
  %v710 = vadd.f32 %v677, %v688
  %v711 = vadd.f32 %v678, %v688
  %v712 = vadd.f32 %v679, %v688
  %v713 = vadd.f32 %v680, %v688
  %v714 = vadd.f32 %v681, %v688
  %v715 = vadd.f32 %v682, %v688
  %v716 = vadd.f32 %v683, %v688
  %v717 = vadd.f32 %v684, %v688
  %v718 = vadd.f32 %v685, %v688
  %v719 = vadd.f32 %v686, %v688
  %v720 = vadd.f32 %v687, %v688
  %v721 = vmax.f32 %v689, 0.0
  %v722 = vmax.f32 %v690, 0.0
  %v723 = vmax.f32 %v691, 0.0
  %v724 = vmax.f32 %v692, 0.0
  %v725 = vmax.f32 %v693, 0.0
  %v726 = vmax.f32 %v694, 0.0
  %v727 = vmax.f32 %v695, 0.0
  %v728 = vmax.f32 %v696, 0.0
  %v729 = vmax.f32 %v697, 0.0
  %v730 = vmax.f32 %v698, 0.0
  %v731 = vmax.f32 %v699, 0.0
  %v732 = vmax.f32 %v700, 0.0
  %v733 = vmax.f32 %v701, 0.0
  %v734 = vmax.f32 %v702, 0.0
  %v735 = vmax.f32 %v703, 0.0
  %v736 = vmax.f32 %v704, 0.0
  %v737 = vmax.f32 %v705, 0.0
  %v738 = vmax.f32 %v706, 0.0
  %v739 = vmax.f32 %v707, 0.0
  %v740 = vmax.f32 %v708, 0.0
  %v741 = vmax.f32 %v709, 0.0
  %v742 = vmax.f32 %v710, 0.0
  %v743 = vmax.f32 %v711, 0.0
  %v744 = vmax.f32 %v712, 0.0
  %v745 = vmax.f32 %v713, 0.0
  %v746 = vmax.f32 %v714, 0.0
  %v747 = vmax.f32 %v715, 0.0
  %v748 = vmax.f32 %v716, 0.0
  %v749 = vmax.f32 %v717, 0.0
  %v750 = vmax.f32 %v718, 0.0
  %v751 = vmax.f32 %v719, 0.0
  %v752 = vmax.f32 %v720, 0.0
  %v753 = vperm.slane %v41, 0
  %v754 = vmul.f32 %v721, %v753
  %v755 = vmul.f32 %v722, %v753
  %v756 = vmul.f32 %v723, %v753
  %v757 = vmul.f32 %v724, %v753
  %v758 = vmul.f32 %v725, %v753
  %v759 = vmul.f32 %v726, %v753
  %v760 = vmul.f32 %v727, %v753
  %v761 = vmul.f32 %v728, %v753
  %v762 = vmul.f32 %v729, %v753
  %v763 = vmul.f32 %v730, %v753
  %v764 = vmul.f32 %v731, %v753
  %v765 = vmul.f32 %v732, %v753
  %v766 = vmul.f32 %v733, %v753
  %v767 = vmul.f32 %v734, %v753
  %v768 = vmul.f32 %v735, %v753
  %v769 = vmul.f32 %v736, %v753
  %v770 = vmul.f32 %v737, %v753
  %v771 = vmul.f32 %v738, %v753
  %v772 = vmul.f32 %v739, %v753
  %v773 = vmul.f32 %v740, %v753
  %v774 = vmul.f32 %v741, %v753
  %v775 = vmul.f32 %v742, %v753
  %v776 = vmul.f32 %v743, %v753
  %v777 = vmul.f32 %v744, %v753
  %v778 = vmul.f32 %v745, %v753
  %v779 = vmul.f32 %v746, %v753
  %v780 = vmul.f32 %v747, %v753
  %v781 = vmul.f32 %v748, %v753
  %v782 = vmul.f32 %v749, %v753
  %v783 = vmul.f32 %v750, %v753
  %v784 = vmul.f32 %v751, %v753
  %v785 = vmul.f32 %v752, %v753
  %v786 = vperm.slane %v42, 0
  %v787 = vadd.f32 %v754, %v786
  %v788 = vadd.f32 %v755, %v786
  %v789 = vadd.f32 %v756, %v786
  %v790 = vadd.f32 %v757, %v786
  %v791 = vadd.f32 %v758, %v786
  %v792 = vadd.f32 %v759, %v786
  %v793 = vadd.f32 %v760, %v786
  %v794 = vadd.f32 %v761, %v786
  %v795 = vadd.f32 %v762, %v786
  %v796 = vadd.f32 %v763, %v786
  %v797 = vadd.f32 %v764, %v786
  %v798 = vadd.f32 %v765, %v786
  %v799 = vadd.f32 %v766, %v786
  %v800 = vadd.f32 %v767, %v786
  %v801 = vadd.f32 %v768, %v786
  %v802 = vadd.f32 %v769, %v786
  %v803 = vadd.f32 %v770, %v786
  %v804 = vadd.f32 %v771, %v786
  %v805 = vadd.f32 %v772, %v786
  %v806 = vadd.f32 %v773, %v786
  %v807 = vadd.f32 %v774, %v786
  %v808 = vadd.f32 %v775, %v786
  %v809 = vadd.f32 %v776, %v786
  %v810 = vadd.f32 %v777, %v786
  %v811 = vadd.f32 %v778, %v786
  %v812 = vadd.f32 %v779, %v786
  %v813 = vadd.f32 %v780, %v786
  %v814 = vadd.f32 %v781, %v786
  %v815 = vadd.f32 %v782, %v786
  %v816 = vadd.f32 %v783, %v786
  %v817 = vadd.f32 %v784, %v786
  %v818 = vadd.f32 %v785, %v786
  %819 = vst [vmem:[#allocation2] sm:$0xff] %v787
  %820 = vst [vmem:[#allocation2 + $0x8] sm:$0xff] %v788
  %821 = vst [vmem:[#allocation2 + $0x10] sm:$0xff] %v789
  %822 = vst [vmem:[#allocation2 + $0x18] sm:$0xff] %v790
  %823 = vst [vmem:[#allocation2 + $0x20] sm:$0xff] %v791
  %824 = vst [vmem:[#allocation2 + $0x28] sm:$0xff] %v792
  %825 = vst [vmem:[#allocation2 + $0x30] sm:$0xff] %v793
  %826 = vst [vmem:[#allocation2 + $0x38] sm:$0xff] %v794
  %827 = vst [vmem:[#allocation2 + $0x40] sm:$0xff] %v795
  %828 = vst [vmem:[#allocation2 + $0x48] sm:$0xff] %v796
  %829 = vst [vmem:[#allocation2 + $0x50] sm:$0xff] %v797
  %830 = vst [vmem:[#allocation2 + $0x58] sm:$0xff] %v798
  %831 = vst [vmem:[#allocation2 + $0x60] sm:$0xff] %v799
  %832 = vst [vmem:[#allocation2 + $0x68] sm:$0xff] %v800
  %833 = vst [vmem:[#allocation2 + $0x70] sm:$0xff] %v801
  %834 = vst [vmem:[#allocation2 + $0x78] sm:$0xff] %v802
  %835 = vst [vmem:[#allocation2 + $0x80] sm:$0xff] %v803
  %836 = vst [vmem:[#allocation2 + $0x88] sm:$0xff] %v804
  %837 = vst [vmem:[#allocation2 + $0x90] sm:$0xff] %v805
  %838 = vst [vmem:[#allocation2 + $0x98] sm:$0xff] %v806
  %839 = vst [vmem:[#allocation2 + $0xa0] sm:$0xff] %v807
  %840 = vst [vmem:[#allocation2 + $0xa8] sm:$0xff] %v808
  %841 = vst [vmem:[#allocation2 + $0xb0] sm:$0xff] %v809
  %842 = vst [vmem:[#allocation2 + $0xb8] sm:$0xff] %v810
  %843 = vst [vmem:[#allocation2 + $0xc0] sm:$0xff] %v811
  %844 = vst [vmem:[#allocation2 + $0xc8] sm:$0xff] %v812
  %845 = vst [vmem:[#allocation2 + $0xd0] sm:$0xff] %v813
  %846 = vst [vmem:[#allocation2 + $0xd8] sm:$0xff] %v814
  %847 = vst [vmem:[#allocation2 + $0xe0] sm:$0xff] %v815
  %848 = vst [vmem:[#allocation2 + $0xe8] sm:$0xff] %v816
  %849 = vst [vmem:[#allocation2 + $0xf0] sm:$0xff] %v817
  %850 = vst [vmem:[#allocation2 + $0xf8] sm:$0xff] %v818
  %v851 = vld [vmem:[#allocation2] sm:$0xff]
  %v852 = vld [vmem:[#allocation2 + $0x8] sm:$0xff]
  %v853 = vld [vmem:[#allocation2 + $0x10] sm:$0xff]
  %v854 = vld [vmem:[#allocation2 + $0x18] sm:$0xff]
  %v855 = vld [vmem:[#allocation2 + $0x20] sm:$0xff]
  %v856 = vld [vmem:[#allocation2 + $0x28] sm:$0xff]
  %v857 = vld [vmem:[#allocation2 + $0x30] sm:$0xff]
  %v858 = vld [vmem:[#allocation2 + $0x38] sm:$0xff]
  %v859 = vld [vmem:[#allocation2 + $0x40] sm:$0xff]
  %v860 = vld [vmem:[#allocation2 + $0x48] sm:$0xff]
  %v861 = vld [vmem:[#allocation2 + $0x50] sm:$0xff]
  %v862 = vld [vmem:[#allocation2 + $0x58] sm:$0xff]
  %v863 = vld [vmem:[#allocation2 + $0x60] sm:$0xff]
  %v864 = vld [vmem:[#allocation2 + $0x68] sm:$0xff]
  %v865 = vld [vmem:[#allocation2 + $0x70] sm:$0xff]
  %v866 = vld [vmem:[#allocation2 + $0x78] sm:$0xff]
  %v867 = vld [vmem:[#allocation2 + $0x80] sm:$0xff]
  %v868 = vld [vmem:[#allocation2 + $0x88] sm:$0xff]
  %v869 = vld [vmem:[#allocation2 + $0x90] sm:$0xff]
  %v870 = vld [vmem:[#allocation2 + $0x98] sm:$0xff]
  %v871 = vld [vmem:[#allocation2 + $0xa0] sm:$0xff]
  %v872 = vld [vmem:[#allocation2 + $0xa8] sm:$0xff]
  %v873 = vld [vmem:[#allocation2 + $0xb0] sm:$0xff]
  %v874 = vld [vmem:[#allocation2 + $0xb8] sm:$0xff]
  %v875 = vld [vmem:[#allocation2 + $0xc0] sm:$0xff]
  %v876 = vld [vmem:[#allocation2 + $0xc8] sm:$0xff]
  %v877 = vld [vmem:[#allocation2 + $0xd0] sm:$0xff]
  %v878 = vld [vmem:[#allocation2 + $0xd8] sm:$0xff]
  %v879 = vld [vmem:[#allocation2 + $0xe0] sm:$0xff]
  %v880 = vld [vmem:[#allocation2 + $0xe8] sm:$0xff]
  %v881 = vld [vmem:[#allocation2 + $0xf0] sm:$0xff]
  %v882 = vld [vmem:[#allocation2 + $0xf8] sm:$0xff]
  %v883 = vld [vmem:[%s3] sm:$0xff]
  %v884 = vld [vmem:[%s3 + $0x8] sm:$0xff]
  %v885 = vld [vmem:[%s3 + $0x10] sm:$0xff]
  %v886 = vld [vmem:[%s3 + $0x18] sm:$0xff]
  %v887 = vld [vmem:[%s3 + $0x20] sm:$0xff]
  %v888 = vld [vmem:[%s3 + $0x28] sm:$0xff]
  %v889 = vld [vmem:[%s3 + $0x30] sm:$0xff]
  %v890 = vld [vmem:[%s3 + $0x38] sm:$0xff]
  %v891 = vld [vmem:[%s3 + $0x40] sm:$0xff]
  %v892 = vld [vmem:[%s3 + $0x48] sm:$0xff]
  %v893 = vld [vmem:[%s3 + $0x50] sm:$0xff]
  %v894 = vld [vmem:[%s3 + $0x58] sm:$0xff]
  %v895 = vld [vmem:[%s3 + $0x60] sm:$0xff]
  %v896 = vld [vmem:[%s3 + $0x68] sm:$0xff]
  %v897 = vld [vmem:[%s3 + $0x70] sm:$0xff]
  %v898 = vld [vmem:[%s3 + $0x78] sm:$0xff]
  %v899 = vperm.slane %v43, 0
  %900 = vmatpush.msra.mxu0 %v898
  %901 = vmatpush.msra.mxu0 %v897
  %902 = vmatpush.msra.mxu0 %v896
  %903 = vmatpush.msra.mxu0 %v895
  %904 = vmatpush.msra.mxu0 %v894
  %905 = vmatpush.msra.mxu0 %v893
  %906 = vmatpush.msra.mxu0 %v892
  %907 = vmatpush.msra.mxu0 %v891
  %908 = vmatpush.msra.mxu0 %v890
  %909 = vmatpush.msra.mxu0 %v889
  %910 = vmatpush.msra.mxu0 %v888
  %911 = vmatpush.msra.mxu0 %v887
  %912 = vmatpush.msra.mxu0 %v886
  %913 = vmatpush.msra.mxu0 %v885
  %914 = vmatpush.msra.mxu0 %v884
  %915 = vmatpush.msra.mxu0 %v883
  %916 = vmatmul.f32.gmra.mxu0 %v851
  %v917 = vpop.f32.mrf.mxu0
  %v918 = vadd.f32 %v899, %v917
  %919 = vmatmul.f32.gmra.mxu0 %v852
  %v920 = vpop.f32.mrf.mxu0
  %v921 = vadd.f32 %v899, %v920
  %922 = vmatmul.f32.gmra.mxu0 %v853
  %v923 = vpop.f32.mrf.mxu0
  %v924 = vadd.f32 %v899, %v923
  %925 = vmatmul.f32.gmra.mxu0 %v854
  %v926 = vpop.f32.mrf.mxu0
  %v927 = vadd.f32 %v899, %v926
  %928 = vmatmul.f32.gmra.mxu0 %v855
  %v929 = vpop.f32.mrf.mxu0
  %v930 = vadd.f32 %v899, %v929
  %931 = vmatmul.f32.gmra.mxu0 %v856
  %v932 = vpop.f32.mrf.mxu0
  %v933 = vadd.f32 %v899, %v932
  %934 = vmatmul.f32.gmra.mxu0 %v857
  %v935 = vpop.f32.mrf.mxu0
  %v936 = vadd.f32 %v899, %v935
  %937 = vmatmul.f32.gmra.mxu0 %v858
  %v938 = vpop.f32.mrf.mxu0
  %v939 = vadd.f32 %v899, %v938
  %940 = vmatmul.f32.gmra.mxu0 %v859
  %v941 = vpop.f32.mrf.mxu0
  %v942 = vadd.f32 %v899, %v941
  %943 = vmatmul.f32.gmra.mxu0 %v860
  %v944 = vpop.f32.mrf.mxu0
  %v945 = vadd.f32 %v899, %v944
  %946 = vmatmul.f32.gmra.mxu0 %v861
  %v947 = vpop.f32.mrf.mxu0
  %v948 = vadd.f32 %v899, %v947
  %949 = vmatmul.f32.gmra.mxu0 %v862
  %v950 = vpop.f32.mrf.mxu0
  %v951 = vadd.f32 %v899, %v950
  %952 = vmatmul.f32.gmra.mxu0 %v863
  %v953 = vpop.f32.mrf.mxu0
  %v954 = vadd.f32 %v899, %v953
  %955 = vmatmul.f32.gmra.mxu0 %v864
  %v956 = vpop.f32.mrf.mxu0
  %v957 = vadd.f32 %v899, %v956
  %958 = vmatmul.f32.gmra.mxu0 %v865
  %v959 = vpop.f32.mrf.mxu0
  %v960 = vadd.f32 %v899, %v959
  %961 = vmatmul.f32.gmra.mxu0 %v866
  %v962 = vpop.f32.mrf.mxu0
  %v963 = vadd.f32 %v899, %v962
  %964 = vmatmul.f32.gmra.mxu0 %v867
  %v965 = vpop.f32.mrf.mxu0
  %v966 = vadd.f32 %v899, %v965
  %967 = vmatmul.f32.gmra.mxu0 %v868
  %v968 = vpop.f32.mrf.mxu0
  %v969 = vadd.f32 %v899, %v968
  %970 = vmatmul.f32.gmra.mxu0 %v869
  %v971 = vpop.f32.mrf.mxu0
  %v972 = vadd.f32 %v899, %v971
  %973 = vmatmul.f32.gmra.mxu0 %v870
  %v974 = vpop.f32.mrf.mxu0
  %v975 = vadd.f32 %v899, %v974
  %976 = vmatmul.f32.gmra.mxu0 %v871
  %v977 = vpop.f32.mrf.mxu0
  %v978 = vadd.f32 %v899, %v977
  %979 = vmatmul.f32.gmra.mxu0 %v872
  %v980 = vpop.f32.mrf.mxu0
  %v981 = vadd.f32 %v899, %v980
  %982 = vmatmul.f32.gmra.mxu0 %v873
  %v983 = vpop.f32.mrf.mxu0
  %v984 = vadd.f32 %v899, %v983
  %985 = vmatmul.f32.gmra.mxu0 %v874
  %v986 = vpop.f32.mrf.mxu0
  %v987 = vadd.f32 %v899, %v986
  %988 = vmatmul.f32.gmra.mxu0 %v875
  %v989 = vpop.f32.mrf.mxu0
  %v990 = vadd.f32 %v899, %v989
  %991 = vmatmul.f32.gmra.mxu0 %v876
  %v992 = vpop.f32.mrf.mxu0
  %v993 = vadd.f32 %v899, %v992
  %994 = vmatmul.f32.gmra.mxu0 %v877
  %v995 = vpop.f32.mrf.mxu0
  %v996 = vadd.f32 %v899, %v995
  %997 = vmatmul.f32.gmra.mxu0 %v878
  %v998 = vpop.f32.mrf.mxu0
  %v999 = vadd.f32 %v899, %v998
  %1000 = vmatmul.f32.gmra.mxu0 %v879
  %v1001 = vpop.f32.mrf.mxu0
  %v1002 = vadd.f32 %v899, %v1001
  %1003 = vmatmul.f32.gmra.mxu0 %v880
  %v1004 = vpop.f32.mrf.mxu0
  %v1005 = vadd.f32 %v899, %v1004
  %1006 = vmatmul.f32.gmra.mxu0 %v881
  %v1007 = vpop.f32.mrf.mxu0
  %v1008 = vadd.f32 %v899, %v1007
  %1009 = vmatmul.f32.gmra.mxu0 %v882
  %v1010 = vpop.f32.mrf.mxu0
  %v1011 = vadd.f32 %v899, %v1010
  %1012 = vdwg.mxu0
  %v1013 = vmax.f32 %v918, 0.0
  %v1014 = vmax.f32 %v921, 0.0
  %v1015 = vmax.f32 %v924, 0.0
  %v1016 = vmax.f32 %v927, 0.0
  %v1017 = vmax.f32 %v930, 0.0
  %v1018 = vmax.f32 %v933, 0.0
  %v1019 = vmax.f32 %v936, 0.0
  %v1020 = vmax.f32 %v939, 0.0
  %v1021 = vmax.f32 %v942, 0.0
  %v1022 = vmax.f32 %v945, 0.0
  %v1023 = vmax.f32 %v948, 0.0
  %v1024 = vmax.f32 %v951, 0.0
  %v1025 = vmax.f32 %v954, 0.0
  %v1026 = vmax.f32 %v957, 0.0
  %v1027 = vmax.f32 %v960, 0.0
  %v1028 = vmax.f32 %v963, 0.0
  %v1029 = vmax.f32 %v966, 0.0
  %v1030 = vmax.f32 %v969, 0.0
  %v1031 = vmax.f32 %v972, 0.0
  %v1032 = vmax.f32 %v975, 0.0
  %v1033 = vmax.f32 %v978, 0.0
  %v1034 = vmax.f32 %v981, 0.0
  %v1035 = vmax.f32 %v984, 0.0
  %v1036 = vmax.f32 %v987, 0.0
  %v1037 = vmax.f32 %v990, 0.0
  %v1038 = vmax.f32 %v993, 0.0
  %v1039 = vmax.f32 %v996, 0.0
  %v1040 = vmax.f32 %v999, 0.0
  %v1041 = vmax.f32 %v1002, 0.0
  %v1042 = vmax.f32 %v1005, 0.0
  %v1043 = vmax.f32 %v1008, 0.0
  %v1044 = vmax.f32 %v1011, 0.0
  %v1045 = vperm.slane %v44, 0
  %v1046 = vmul.f32 %v1013, %v1045
  %v1047 = vmul.f32 %v1014, %v1045
  %v1048 = vmul.f32 %v1015, %v1045
  %v1049 = vmul.f32 %v1016, %v1045
  %v1050 = vmul.f32 %v1017, %v1045
  %v1051 = vmul.f32 %v1018, %v1045
  %v1052 = vmul.f32 %v1019, %v1045
  %v1053 = vmul.f32 %v1020, %v1045
  %v1054 = vmul.f32 %v1021, %v1045
  %v1055 = vmul.f32 %v1022, %v1045
  %v1056 = vmul.f32 %v1023, %v1045
  %v1057 = vmul.f32 %v1024, %v1045
  %v1058 = vmul.f32 %v1025, %v1045
  %v1059 = vmul.f32 %v1026, %v1045
  %v1060 = vmul.f32 %v1027, %v1045
  %v1061 = vmul.f32 %v1028, %v1045
  %v1062 = vmul.f32 %v1029, %v1045
  %v1063 = vmul.f32 %v1030, %v1045
  %v1064 = vmul.f32 %v1031, %v1045
  %v1065 = vmul.f32 %v1032, %v1045
  %v1066 = vmul.f32 %v1033, %v1045
  %v1067 = vmul.f32 %v1034, %v1045
  %v1068 = vmul.f32 %v1035, %v1045
  %v1069 = vmul.f32 %v1036, %v1045
  %v1070 = vmul.f32 %v1037, %v1045
  %v1071 = vmul.f32 %v1038, %v1045
  %v1072 = vmul.f32 %v1039, %v1045
  %v1073 = vmul.f32 %v1040, %v1045
  %v1074 = vmul.f32 %v1041, %v1045
  %v1075 = vmul.f32 %v1042, %v1045
  %v1076 = vmul.f32 %v1043, %v1045
  %v1077 = vmul.f32 %v1044, %v1045
  %v1078 = vperm.slane %v45, 0
  %v1079 = vadd.f32 %v1046, %v1078
  %v1080 = vadd.f32 %v1047, %v1078
  %v1081 = vadd.f32 %v1048, %v1078
  %v1082 = vadd.f32 %v1049, %v1078
  %v1083 = vadd.f32 %v1050, %v1078
  %v1084 = vadd.f32 %v1051, %v1078
  %v1085 = vadd.f32 %v1052, %v1078
  %v1086 = vadd.f32 %v1053, %v1078
  %v1087 = vadd.f32 %v1054, %v1078
  %v1088 = vadd.f32 %v1055, %v1078
  %v1089 = vadd.f32 %v1056, %v1078
  %v1090 = vadd.f32 %v1057, %v1078
  %v1091 = vadd.f32 %v1058, %v1078
  %v1092 = vadd.f32 %v1059, %v1078
  %v1093 = vadd.f32 %v1060, %v1078
  %v1094 = vadd.f32 %v1061, %v1078
  %v1095 = vadd.f32 %v1062, %v1078
  %v1096 = vadd.f32 %v1063, %v1078
  %v1097 = vadd.f32 %v1064, %v1078
  %v1098 = vadd.f32 %v1065, %v1078
  %v1099 = vadd.f32 %v1066, %v1078
  %v1100 = vadd.f32 %v1067, %v1078
  %v1101 = vadd.f32 %v1068, %v1078
  %v1102 = vadd.f32 %v1069, %v1078
  %v1103 = vadd.f32 %v1070, %v1078
  %v1104 = vadd.f32 %v1071, %v1078
  %v1105 = vadd.f32 %v1072, %v1078
  %v1106 = vadd.f32 %v1073, %v1078
  %v1107 = vadd.f32 %v1074, %v1078
  %v1108 = vadd.f32 %v1075, %v1078
  %v1109 = vadd.f32 %v1076, %v1078
  %v1110 = vadd.f32 %v1077, %v1078
  %1111 = vst [vmem:[#allocation3 + $0x8] sm:$0xff] %v1079
  %1112 = vst [vmem:[#allocation3 + $0x10] sm:$0xff] %v1080
  %1113 = vst [vmem:[#allocation3 + $0x18] sm:$0xff] %v1081
  %1114 = vst [vmem:[#allocation3 + $0x20] sm:$0xff] %v1082
  %1115 = vst [vmem:[#allocation3 + $0x28] sm:$0xff] %v1083
  %1116 = vst [vmem:[#allocation3 + $0x30] sm:$0xff] %v1084
  %1117 = vst [vmem:[#allocation3 + $0x38] sm:$0xff] %v1085
  %1118 = vst [vmem:[#allocation3 + $0x40] sm:$0xff] %v1086
  %1119 = vst [vmem:[#allocation3 + $0x48] sm:$0xff] %v1087
  %1120 = vst [vmem:[#allocation3 + $0x50] sm:$0xff] %v1088
  %1121 = vst [vmem:[#allocation3 + $0x58] sm:$0xff] %v1089
  %1122 = vst [vmem:[#allocation3 + $0x60] sm:$0xff] %v1090
  %1123 = vst [vmem:[#allocation3 + $0x68] sm:$0xff] %v1091
  %1124 = vst [vmem:[#allocation3 + $0x70] sm:$0xff] %v1092
  %1125 = vst [vmem:[#allocation3 + $0x78] sm:$0xff] %v1093
  %1126 = vst [vmem:[#allocation3 + $0x80] sm:$0xff] %v1094
  %1127 = vst [vmem:[#allocation3 + $0x88] sm:$0xff] %v1095
  %1128 = vst [vmem:[#allocation3 + $0x90] sm:$0xff] %v1096
  %1129 = vst [vmem:[#allocation3 + $0x98] sm:$0xff] %v1097
  %1130 = vst [vmem:[#allocation3 + $0xa0] sm:$0xff] %v1098
  %1131 = vst [vmem:[#allocation3 + $0xa8] sm:$0xff] %v1099
  %1132 = vst [vmem:[#allocation3 + $0xb0] sm:$0xff] %v1100
  %1133 = vst [vmem:[#allocation3 + $0xb8] sm:$0xff] %v1101
  %1134 = vst [vmem:[#allocation3 + $0xc0] sm:$0xff] %v1102
  %1135 = vst [vmem:[#allocation3 + $0xc8] sm:$0xff] %v1103
  %1136 = vst [vmem:[#allocation3 + $0xd0] sm:$0xff] %v1104
  %1137 = vst [vmem:[#allocation3 + $0xd8] sm:$0xff] %v1105
  %1138 = vst [vmem:[#allocation3 + $0xe0] sm:$0xff] %v1106
  %1139 = vst [vmem:[#allocation3 + $0xe8] sm:$0xff] %v1107
  %1140 = vst [vmem:[#allocation3 + $0xf0] sm:$0xff] %v1108
  %1141 = vst [vmem:[#allocation3 + $0xf8] sm:$0xff] %v1109
  %1142 = vst [vmem:[#allocation3 + $0x100] sm:$0xff] %v1110
  %v1143 = vld [vmem:[#allocation3] sm:$0xff]
  %v1144 = vld [vmem:[#allocation3 + $0x8] sm:$0xff]
  %v1145 = vld [vmem:[#allocation3 + $0x10] sm:$0xff]
  %v1146 = vld [vmem:[#allocation3 + $0x18] sm:$0xff]
  %v1147 = vld [vmem:[#allocation3 + $0x20] sm:$0xff]
  %v1148 = vld [vmem:[#allocation3 + $0x28] sm:$0xff]
  %v1149 = vld [vmem:[#allocation3 + $0x30] sm:$0xff]
  %v1150 = vld [vmem:[#allocation3 + $0x38] sm:$0xff]
  %v1151 = vld [vmem:[#allocation3 + $0x40] sm:$0xff]
  %v1152 = vld [vmem:[#allocation3 + $0x48] sm:$0xff]
  %v1153 = vld [vmem:[#allocation3 + $0x50] sm:$0xff]
  %v1154 = vld [vmem:[#allocation3 + $0x58] sm:$0xff]
  %v1155 = vld [vmem:[#allocation3 + $0x60] sm:$0xff]
  %v1156 = vld [vmem:[#allocation3 + $0x68] sm:$0xff]
  %v1157 = vld [vmem:[#allocation3 + $0x70] sm:$0xff]
  %v1158 = vld [vmem:[#allocation3 + $0x78] sm:$0xff]
  %v1159 = vld [vmem:[#allocation3 + $0x80] sm:$0xff]
  %v1160 = vld [vmem:[#allocation3 + $0x88] sm:$0xff]
  %v1161 = vld [vmem:[#allocation3 + $0x90] sm:$0xff]
  %v1162 = vld [vmem:[#allocation3 + $0x98] sm:$0xff]
  %v1163 = vld [vmem:[#allocation3 + $0xa0] sm:$0xff]
  %v1164 = vld [vmem:[#allocation3 + $0xa8] sm:$0xff]
  %v1165 = vld [vmem:[#allocation3 + $0xb0] sm:$0xff]
  %v1166 = vld [vmem:[#allocation3 + $0xb8] sm:$0xff]
  %v1167 = vld [vmem:[#allocation3 + $0xc0] sm:$0xff]
  %v1168 = vld [vmem:[#allocation3 + $0xc8] sm:$0xff]
  %v1169 = vld [vmem:[#allocation3 + $0xd0] sm:$0xff]
  %v1170 = vld [vmem:[#allocation3 + $0xd8] sm:$0xff]
  %v1171 = vld [vmem:[#allocation3 + $0xe0] sm:$0xff]
  %v1172 = vld [vmem:[#allocation3 + $0xe8] sm:$0xff]
  %v1173 = vld [vmem:[#allocation3 + $0xf0] sm:$0xff]
  %v1174 = vld [vmem:[#allocation3 + $0xf8] sm:$0xff]
  %v1175 = vld [vmem:[%s5] sm:$0xff]
  %v1176 = vld [vmem:[%s5 + $0x8] sm:$0xff]
  %v1177 = vld [vmem:[%s5 + $0x10] sm:$0xff]
  %v1178 = vld [vmem:[%s5 + $0x18] sm:$0xff]
  %v1179 = vld [vmem:[%s5 + $0x20] sm:$0xff]
  %v1180 = vld [vmem:[%s5 + $0x28] sm:$0xff]
  %v1181 = vld [vmem:[%s5 + $0x30] sm:$0xff]
  %v1182 = vld [vmem:[%s5 + $0x38] sm:$0xff]
  %v1183 = vld [vmem:[%s5 + $0x40] sm:$0xff]
  %v1184 = vld [vmem:[%s5 + $0x48] sm:$0xff]
  %v1185 = vld [vmem:[%s5 + $0x50] sm:$0xff]
  %v1186 = vld [vmem:[%s5 + $0x58] sm:$0xff]
  %v1187 = vld [vmem:[%s5 + $0x60] sm:$0xff]
  %v1188 = vld [vmem:[%s5 + $0x68] sm:$0xff]
  %v1189 = vld [vmem:[%s5 + $0x70] sm:$0xff]
  %v1190 = vld [vmem:[%s5 + $0x78] sm:$0xff]
  %v1191 = vld [vmem:[#allocation3 + $0x100] sm:$0xff]
  %s1192 = scalar_lea.vmem %s5, 128
  %v1193 = vld [vmem:[%s1192] sm:$0xff]
  %v1194 = vld [vmem:[%s1192 + $0x8] sm:$0xff]
  %v1195 = vld [vmem:[%s1192 + $0x10] sm:$0xff]
  %v1196 = vld [vmem:[%s1192 + $0x18] sm:$0xff]
  %v1197 = vld [vmem:[%s1192 + $0x20] sm:$0xff]
  %v1198 = vld [vmem:[%s1192 + $0x28] sm:$0xff]
  %v1199 = vld [vmem:[%s1192 + $0x30] sm:$0xff]
  %v1200 = vld [vmem:[%s1192 + $0x38] sm:$0xff]
  %v1201 = vld [vmem:[%s1192 + $0x40] sm:$0xff]
  %v1202 = vld [vmem:[%s1192 + $0x48] sm:$0xff]
  %v1203 = vld [vmem:[%s1192 + $0x50] sm:$0xff]
  %v1204 = vld [vmem:[%s1192 + $0x58] sm:$0xff]
  %v1205 = vld [vmem:[%s1192 + $0x60] sm:$0xff]
  %v1206 = vld [vmem:[%s1192 + $0x68] sm:$0xff]
  %v1207 = vld [vmem:[%s1192 + $0x70] sm:$0xff]
  %v1208 = vld [vmem:[%s1192 + $0x78] sm:$0xff]
  %1209 = vmatpush.msra.mxu0 %v1208
  %1210 = vmatpush.msra.mxu0 %v1207
  %1211 = vmatpush.msra.mxu0 %v1206
  %1212 = vmatpush.msra.mxu0 %v1205
  %1213 = vmatpush.msra.mxu0 %v1204
  %1214 = vmatpush.msra.mxu0 %v1203
  %1215 = vmatpush.msra.mxu0 %v1202
  %1216 = vmatpush.msra.mxu0 %v1201
  %1217 = vmatpush.msra.mxu0 %v1200
  %1218 = vmatpush.msra.mxu0 %v1199
  %1219 = vmatpush.msra.mxu0 %v1198
  %1220 = vmatpush.msra.mxu0 %v1197
  %1221 = vmatpush.msra.mxu0 %v1196
  %1222 = vmatpush.msra.mxu0 %v1195
  %1223 = vmatpush.msra.mxu0 %v1194
  %1224 = vmatpush.msra.mxu0 %v1193
  %1225 = vmatmul.f32.gmra.mxu0 %v1144
  %v1226 = vpop.f32.mrf.mxu0
  %v1227 = vadd.f32 0.0, %v1226
  %1228 = vmatmul.f32.gmra.mxu0 %v1145
  %v1229 = vpop.f32.mrf.mxu0
  %v1230 = vadd.f32 0.0, %v1229
  %1231 = vmatmul.f32.gmra.mxu0 %v1146
  %v1232 = vpop.f32.mrf.mxu0
  %v1233 = vadd.f32 0.0, %v1232
  %1234 = vmatmul.f32.gmra.mxu0 %v1147
  %v1235 = vpop.f32.mrf.mxu0
  %v1236 = vadd.f32 0.0, %v1235
  %1237 = vmatmul.f32.gmra.mxu0 %v1148
  %v1238 = vpop.f32.mrf.mxu0
  %v1239 = vadd.f32 0.0, %v1238
  %1240 = vmatmul.f32.gmra.mxu0 %v1149
  %v1241 = vpop.f32.mrf.mxu0
  %v1242 = vadd.f32 0.0, %v1241
  %1243 = vmatmul.f32.gmra.mxu0 %v1150
  %v1244 = vpop.f32.mrf.mxu0
  %v1245 = vadd.f32 0.0, %v1244
  %1246 = vmatmul.f32.gmra.mxu0 %v1151
  %v1247 = vpop.f32.mrf.mxu0
  %v1248 = vadd.f32 0.0, %v1247
  %1249 = vmatmul.f32.gmra.mxu0 %v1152
  %v1250 = vpop.f32.mrf.mxu0
  %v1251 = vadd.f32 0.0, %v1250
  %1252 = vmatmul.f32.gmra.mxu0 %v1153
  %v1253 = vpop.f32.mrf.mxu0
  %v1254 = vadd.f32 0.0, %v1253
  %1255 = vmatmul.f32.gmra.mxu0 %v1154
  %v1256 = vpop.f32.mrf.mxu0
  %v1257 = vadd.f32 0.0, %v1256
  %1258 = vmatmul.f32.gmra.mxu0 %v1155
  %v1259 = vpop.f32.mrf.mxu0
  %v1260 = vadd.f32 0.0, %v1259
  %1261 = vmatmul.f32.gmra.mxu0 %v1156
  %v1262 = vpop.f32.mrf.mxu0
  %v1263 = vadd.f32 0.0, %v1262
  %1264 = vmatmul.f32.gmra.mxu0 %v1157
  %v1265 = vpop.f32.mrf.mxu0
  %v1266 = vadd.f32 0.0, %v1265
  %1267 = vmatmul.f32.gmra.mxu0 %v1158
  %v1268 = vpop.f32.mrf.mxu0
  %v1269 = vadd.f32 0.0, %v1268
  %1270 = vmatmul.f32.gmra.mxu0 %v1159
  %v1271 = vpop.f32.mrf.mxu0
  %v1272 = vadd.f32 0.0, %v1271
  %1273 = vmatmul.f32.gmra.mxu0 %v1160
  %v1274 = vpop.f32.mrf.mxu0
  %v1275 = vadd.f32 0.0, %v1274
  %1276 = vmatmul.f32.gmra.mxu0 %v1161
  %v1277 = vpop.f32.mrf.mxu0
  %v1278 = vadd.f32 0.0, %v1277
  %1279 = vmatmul.f32.gmra.mxu0 %v1162
  %v1280 = vpop.f32.mrf.mxu0
  %v1281 = vadd.f32 0.0, %v1280
  %1282 = vmatmul.f32.gmra.mxu0 %v1163
  %v1283 = vpop.f32.mrf.mxu0
  %v1284 = vadd.f32 0.0, %v1283
  %1285 = vmatmul.f32.gmra.mxu0 %v1164
  %v1286 = vpop.f32.mrf.mxu0
  %v1287 = vadd.f32 0.0, %v1286
  %1288 = vmatmul.f32.gmra.mxu0 %v1165
  %v1289 = vpop.f32.mrf.mxu0
  %v1290 = vadd.f32 0.0, %v1289
  %1291 = vmatmul.f32.gmra.mxu0 %v1166
  %v1292 = vpop.f32.mrf.mxu0
  %v1293 = vadd.f32 0.0, %v1292
  %1294 = vmatmul.f32.gmra.mxu0 %v1167
  %v1295 = vpop.f32.mrf.mxu0
  %v1296 = vadd.f32 0.0, %v1295
  %1297 = vmatmul.f32.gmra.mxu0 %v1168
  %v1298 = vpop.f32.mrf.mxu0
  %v1299 = vadd.f32 0.0, %v1298
  %1300 = vmatmul.f32.gmra.mxu0 %v1169
  %v1301 = vpop.f32.mrf.mxu0
  %v1302 = vadd.f32 0.0, %v1301
  %1303 = vmatmul.f32.gmra.mxu0 %v1170
  %v1304 = vpop.f32.mrf.mxu0
  %v1305 = vadd.f32 0.0, %v1304
  %1306 = vmatmul.f32.gmra.mxu0 %v1171
  %v1307 = vpop.f32.mrf.mxu0
  %v1308 = vadd.f32 0.0, %v1307
  %1309 = vmatmul.f32.gmra.mxu0 %v1172
  %v1310 = vpop.f32.mrf.mxu0
  %v1311 = vadd.f32 0.0, %v1310
  %1312 = vmatmul.f32.gmra.mxu0 %v1173
  %v1313 = vpop.f32.mrf.mxu0
  %v1314 = vadd.f32 0.0, %v1313
  %1315 = vmatmul.f32.gmra.mxu0 %v1174
  %v1316 = vpop.f32.mrf.mxu0
  %v1317 = vadd.f32 0.0, %v1316
  %1318 = vmatmul.f32.gmra.mxu0 %v1191
  %v1319 = vpop.f32.mrf.mxu0
  %v1320 = vadd.f32 0.0, %v1319
  %1321 = vdwg.mxu0
  %1322 = vmatpush.msra.mxu0 %v1190
  %1323 = vmatpush.msra.mxu0 %v1189
  %1324 = vmatpush.msra.mxu0 %v1188
  %1325 = vmatpush.msra.mxu0 %v1187
  %1326 = vmatpush.msra.mxu0 %v1186
  %1327 = vmatpush.msra.mxu0 %v1185
  %1328 = vmatpush.msra.mxu0 %v1184
  %1329 = vmatpush.msra.mxu0 %v1183
  %1330 = vmatpush.msra.mxu0 %v1182
  %1331 = vmatpush.msra.mxu0 %v1181
  %1332 = vmatpush.msra.mxu0 %v1180
  %1333 = vmatpush.msra.mxu0 %v1179
  %1334 = vmatpush.msra.mxu0 %v1178
  %1335 = vmatpush.msra.mxu0 %v1177
  %1336 = vmatpush.msra.mxu0 %v1176
  %1337 = vmatpush.msra.mxu0 %v1175
  %1338 = vmatmul.f32.gmra.mxu0 %v1143
  %v1339 = vpop.f32.mrf.mxu0
  %v1340 = vadd.f32 %v1227, %v1339
  %1341 = vmatmul.f32.gmra.mxu0 %v1144
  %v1342 = vpop.f32.mrf.mxu0
  %v1343 = vadd.f32 %v1230, %v1342
  %1344 = vmatmul.f32.gmra.mxu0 %v1145
  %v1345 = vpop.f32.mrf.mxu0
  %v1346 = vadd.f32 %v1233, %v1345
  %1347 = vmatmul.f32.gmra.mxu0 %v1146
  %v1348 = vpop.f32.mrf.mxu0
  %v1349 = vadd.f32 %v1236, %v1348
  %1350 = vmatmul.f32.gmra.mxu0 %v1147
  %v1351 = vpop.f32.mrf.mxu0
  %v1352 = vadd.f32 %v1239, %v1351
  %1353 = vmatmul.f32.gmra.mxu0 %v1148
  %v1354 = vpop.f32.mrf.mxu0
  %v1355 = vadd.f32 %v1242, %v1354
  %1356 = vmatmul.f32.gmra.mxu0 %v1149
  %v1357 = vpop.f32.mrf.mxu0
  %v1358 = vadd.f32 %v1245, %v1357
  %1359 = vmatmul.f32.gmra.mxu0 %v1150
  %v1360 = vpop.f32.mrf.mxu0
  %v1361 = vadd.f32 %v1248, %v1360
  %1362 = vmatmul.f32.gmra.mxu0 %v1151
  %v1363 = vpop.f32.mrf.mxu0
  %v1364 = vadd.f32 %v1251, %v1363
  %1365 = vmatmul.f32.gmra.mxu0 %v1152
  %v1366 = vpop.f32.mrf.mxu0
  %v1367 = vadd.f32 %v1254, %v1366
  %1368 = vmatmul.f32.gmra.mxu0 %v1153
  %v1369 = vpop.f32.mrf.mxu0
  %v1370 = vadd.f32 %v1257, %v1369
  %1371 = vmatmul.f32.gmra.mxu0 %v1154
  %v1372 = vpop.f32.mrf.mxu0
  %v1373 = vadd.f32 %v1260, %v1372
  %1374 = vmatmul.f32.gmra.mxu0 %v1155
  %v1375 = vpop.f32.mrf.mxu0
  %v1376 = vadd.f32 %v1263, %v1375
  %1377 = vmatmul.f32.gmra.mxu0 %v1156
  %v1378 = vpop.f32.mrf.mxu0
  %v1379 = vadd.f32 %v1266, %v1378
  %1380 = vmatmul.f32.gmra.mxu0 %v1157
  %v1381 = vpop.f32.mrf.mxu0
  %v1382 = vadd.f32 %v1269, %v1381
  %1383 = vmatmul.f32.gmra.mxu0 %v1158
  %v1384 = vpop.f32.mrf.mxu0
  %v1385 = vadd.f32 %v1272, %v1384
  %1386 = vmatmul.f32.gmra.mxu0 %v1159
  %v1387 = vpop.f32.mrf.mxu0
  %v1388 = vadd.f32 %v1275, %v1387
  %1389 = vmatmul.f32.gmra.mxu0 %v1160
  %v1390 = vpop.f32.mrf.mxu0
  %v1391 = vadd.f32 %v1278, %v1390
  %1392 = vmatmul.f32.gmra.mxu0 %v1161
  %v1393 = vpop.f32.mrf.mxu0
  %v1394 = vadd.f32 %v1281, %v1393
  %1395 = vmatmul.f32.gmra.mxu0 %v1162
  %v1396 = vpop.f32.mrf.mxu0
  %v1397 = vadd.f32 %v1284, %v1396
  %1398 = vmatmul.f32.gmra.mxu0 %v1163
  %v1399 = vpop.f32.mrf.mxu0
  %v1400 = vadd.f32 %v1287, %v1399
  %1401 = vmatmul.f32.gmra.mxu0 %v1164
  %v1402 = vpop.f32.mrf.mxu0
  %v1403 = vadd.f32 %v1290, %v1402
  %1404 = vmatmul.f32.gmra.mxu0 %v1165
  %v1405 = vpop.f32.mrf.mxu0
  %v1406 = vadd.f32 %v1293, %v1405
  %1407 = vmatmul.f32.gmra.mxu0 %v1166
  %v1408 = vpop.f32.mrf.mxu0
  %v1409 = vadd.f32 %v1296, %v1408
  %1410 = vmatmul.f32.gmra.mxu0 %v1167
  %v1411 = vpop.f32.mrf.mxu0
  %v1412 = vadd.f32 %v1299, %v1411
  %1413 = vmatmul.f32.gmra.mxu0 %v1168
  %v1414 = vpop.f32.mrf.mxu0
  %v1415 = vadd.f32 %v1302, %v1414
  %1416 = vmatmul.f32.gmra.mxu0 %v1169
  %v1417 = vpop.f32.mrf.mxu0
  %v1418 = vadd.f32 %v1305, %v1417
  %1419 = vmatmul.f32.gmra.mxu0 %v1170
  %v1420 = vpop.f32.mrf.mxu0
  %v1421 = vadd.f32 %v1308, %v1420
  %1422 = vmatmul.f32.gmra.mxu0 %v1171
  %v1423 = vpop.f32.mrf.mxu0
  %v1424 = vadd.f32 %v1311, %v1423
  %1425 = vmatmul.f32.gmra.mxu0 %v1172
  %v1426 = vpop.f32.mrf.mxu0
  %v1427 = vadd.f32 %v1314, %v1426
  %1428 = vmatmul.f32.gmra.mxu0 %v1173
  %v1429 = vpop.f32.mrf.mxu0
  %v1430 = vadd.f32 %v1317, %v1429
  %1431 = vmatmul.f32.gmra.mxu0 %v1174
  %v1432 = vpop.f32.mrf.mxu0
  %v1433 = vadd.f32 %v1320, %v1432
  %1434 = vdwg.mxu0
  %v1435 = vld [vmem:[#allocation3 + $0x10] sm:$0xff]
  %v1436 = vld [vmem:[#allocation3 + $0x18] sm:$0xff]
  %v1437 = vld [vmem:[#allocation3 + $0x20] sm:$0xff]
  %v1438 = vld [vmem:[#allocation3 + $0x28] sm:$0xff]
  %v1439 = vld [vmem:[#allocation3 + $0x30] sm:$0xff]
  %v1440 = vld [vmem:[#allocation3 + $0x38] sm:$0xff]
  %v1441 = vld [vmem:[#allocation3 + $0x40] sm:$0xff]
  %v1442 = vld [vmem:[#allocation3 + $0x48] sm:$0xff]
  %v1443 = vld [vmem:[#allocation3 + $0x50] sm:$0xff]
  %v1444 = vld [vmem:[#allocation3 + $0x58] sm:$0xff]
  %v1445 = vld [vmem:[#allocation3 + $0x60] sm:$0xff]
  %v1446 = vld [vmem:[#allocation3 + $0x68] sm:$0xff]
  %v1447 = vld [vmem:[#allocation3 + $0x70] sm:$0xff]
  %v1448 = vld [vmem:[#allocation3 + $0x78] sm:$0xff]
  %v1449 = vld [vmem:[#allocation3 + $0x80] sm:$0xff]
  %v1450 = vld [vmem:[#allocation3 + $0x88] sm:$0xff]
  %v1451 = vld [vmem:[#allocation3 + $0x90] sm:$0xff]
  %v1452 = vld [vmem:[#allocation3 + $0x98] sm:$0xff]
  %v1453 = vld [vmem:[#allocation3 + $0xa0] sm:$0xff]
  %v1454 = vld [vmem:[#allocation3 + $0xa8] sm:$0xff]
  %v1455 = vld [vmem:[#allocation3 + $0xb0] sm:$0xff]
  %v1456 = vld [vmem:[#allocation3 + $0xb8] sm:$0xff]
  %v1457 = vld [vmem:[#allocation3 + $0xc0] sm:$0xff]
  %v1458 = vld [vmem:[#allocation3 + $0xc8] sm:$0xff]
  %v1459 = vld [vmem:[#allocation3 + $0xd0] sm:$0xff]
  %v1460 = vld [vmem:[#allocation3 + $0xd8] sm:$0xff]
  %v1461 = vld [vmem:[#allocation3 + $0xe0] sm:$0xff]
  %v1462 = vld [vmem:[#allocation3 + $0xe8] sm:$0xff]
  %v1463 = vld [vmem:[#allocation3 + $0xf0] sm:$0xff]
  %v1464 = vld [vmem:[#allocation3 + $0xf8] sm:$0xff]
  %v1465 = vld [vmem:[#allocation3 + $0x100] sm:$0xff]
  %v1466 = vld [vmem:[#allocation3 + $0x108] sm:$0xff]
  %s1467 = scalar_lea.vmem %s5, 256
  %v1468 = vld [vmem:[%s1467] sm:$0xff]
  %v1469 = vld [vmem:[%s1467 + $0x8] sm:$0xff]
  %v1470 = vld [vmem:[%s1467 + $0x10] sm:$0xff]
  %v1471 = vld [vmem:[%s1467 + $0x18] sm:$0xff]
  %v1472 = vld [vmem:[%s1467 + $0x20] sm:$0xff]
  %v1473 = vld [vmem:[%s1467 + $0x28] sm:$0xff]
  %v1474 = vld [vmem:[%s1467 + $0x30] sm:$0xff]
  %v1475 = vld [vmem:[%s1467 + $0x38] sm:$0xff]
  %v1476 = vld [vmem:[%s1467 + $0x40] sm:$0xff]
  %v1477 = vld [vmem:[%s1467 + $0x48] sm:$0xff]
  %v1478 = vld [vmem:[%s1467 + $0x50] sm:$0xff]
  %v1479 = vld [vmem:[%s1467 + $0x58] sm:$0xff]
  %v1480 = vld [vmem:[%s1467 + $0x60] sm:$0xff]
  %v1481 = vld [vmem:[%s1467 + $0x68] sm:$0xff]
  %v1482 = vld [vmem:[%s1467 + $0x70] sm:$0xff]
  %v1483 = vld [vmem:[%s1467 + $0x78] sm:$0xff]
  %1484 = vmatpush.msra.mxu0 %v1483
  %1485 = vmatpush.msra.mxu0 %v1482
  %1486 = vmatpush.msra.mxu0 %v1481
  %1487 = vmatpush.msra.mxu0 %v1480
  %1488 = vmatpush.msra.mxu0 %v1479
  %1489 = vmatpush.msra.mxu0 %v1478
  %1490 = vmatpush.msra.mxu0 %v1477
  %1491 = vmatpush.msra.mxu0 %v1476
  %1492 = vmatpush.msra.mxu0 %v1475
  %1493 = vmatpush.msra.mxu0 %v1474
  %1494 = vmatpush.msra.mxu0 %v1473
  %1495 = vmatpush.msra.mxu0 %v1472
  %1496 = vmatpush.msra.mxu0 %v1471
  %1497 = vmatpush.msra.mxu0 %v1470
  %1498 = vmatpush.msra.mxu0 %v1469
  %1499 = vmatpush.msra.mxu0 %v1468
  %1500 = vmatmul.f32.gmra.mxu0 %v1435
  %v1501 = vpop.f32.mrf.mxu0
  %v1502 = vadd.f32 0.0, %v1501
  %1503 = vmatmul.f32.gmra.mxu0 %v1436
  %v1504 = vpop.f32.mrf.mxu0
  %v1505 = vadd.f32 0.0, %v1504
  %1506 = vmatmul.f32.gmra.mxu0 %v1437
  %v1507 = vpop.f32.mrf.mxu0
  %v1508 = vadd.f32 0.0, %v1507
  %1509 = vmatmul.f32.gmra.mxu0 %v1438
  %v1510 = vpop.f32.mrf.mxu0
  %v1511 = vadd.f32 0.0, %v1510
  %1512 = vmatmul.f32.gmra.mxu0 %v1439
  %v1513 = vpop.f32.mrf.mxu0
  %v1514 = vadd.f32 0.0, %v1513
  %1515 = vmatmul.f32.gmra.mxu0 %v1440
  %v1516 = vpop.f32.mrf.mxu0
  %v1517 = vadd.f32 0.0, %v1516
  %1518 = vmatmul.f32.gmra.mxu0 %v1441
  %v1519 = vpop.f32.mrf.mxu0
  %v1520 = vadd.f32 0.0, %v1519
  %1521 = vmatmul.f32.gmra.mxu0 %v1442
  %v1522 = vpop.f32.mrf.mxu0
  %v1523 = vadd.f32 0.0, %v1522
  %1524 = vmatmul.f32.gmra.mxu0 %v1443
  %v1525 = vpop.f32.mrf.mxu0
  %v1526 = vadd.f32 0.0, %v1525
  %1527 = vmatmul.f32.gmra.mxu0 %v1444
  %v1528 = vpop.f32.mrf.mxu0
  %v1529 = vadd.f32 0.0, %v1528
  %1530 = vmatmul.f32.gmra.mxu0 %v1445
  %v1531 = vpop.f32.mrf.mxu0
  %v1532 = vadd.f32 0.0, %v1531
  %1533 = vmatmul.f32.gmra.mxu0 %v1446
  %v1534 = vpop.f32.mrf.mxu0
  %v1535 = vadd.f32 0.0, %v1534
  %1536 = vmatmul.f32.gmra.mxu0 %v1447
  %v1537 = vpop.f32.mrf.mxu0
  %v1538 = vadd.f32 0.0, %v1537
  %1539 = vmatmul.f32.gmra.mxu0 %v1448
  %v1540 = vpop.f32.mrf.mxu0
  %v1541 = vadd.f32 0.0, %v1540
  %1542 = vmatmul.f32.gmra.mxu0 %v1449
  %v1543 = vpop.f32.mrf.mxu0
  %v1544 = vadd.f32 0.0, %v1543
  %1545 = vmatmul.f32.gmra.mxu0 %v1450
  %v1546 = vpop.f32.mrf.mxu0
  %v1547 = vadd.f32 0.0, %v1546
  %1548 = vmatmul.f32.gmra.mxu0 %v1451
  %v1549 = vpop.f32.mrf.mxu0
  %v1550 = vadd.f32 0.0, %v1549
  %1551 = vmatmul.f32.gmra.mxu0 %v1452
  %v1552 = vpop.f32.mrf.mxu0
  %v1553 = vadd.f32 0.0, %v1552
  %1554 = vmatmul.f32.gmra.mxu0 %v1453
  %v1555 = vpop.f32.mrf.mxu0
  %v1556 = vadd.f32 0.0, %v1555
  %1557 = vmatmul.f32.gmra.mxu0 %v1454
  %v1558 = vpop.f32.mrf.mxu0
  %v1559 = vadd.f32 0.0, %v1558
  %1560 = vmatmul.f32.gmra.mxu0 %v1455
  %v1561 = vpop.f32.mrf.mxu0
  %v1562 = vadd.f32 0.0, %v1561
  %1563 = vmatmul.f32.gmra.mxu0 %v1456
  %v1564 = vpop.f32.mrf.mxu0
  %v1565 = vadd.f32 0.0, %v1564
  %1566 = vmatmul.f32.gmra.mxu0 %v1457
  %v1567 = vpop.f32.mrf.mxu0
  %v1568 = vadd.f32 0.0, %v1567
  %1569 = vmatmul.f32.gmra.mxu0 %v1458
  %v1570 = vpop.f32.mrf.mxu0
  %v1571 = vadd.f32 0.0, %v1570
  %1572 = vmatmul.f32.gmra.mxu0 %v1459
  %v1573 = vpop.f32.mrf.mxu0
  %v1574 = vadd.f32 0.0, %v1573
  %1575 = vmatmul.f32.gmra.mxu0 %v1460
  %v1576 = vpop.f32.mrf.mxu0
  %v1577 = vadd.f32 0.0, %v1576
  %1578 = vmatmul.f32.gmra.mxu0 %v1461
  %v1579 = vpop.f32.mrf.mxu0
  %v1580 = vadd.f32 0.0, %v1579
  %1581 = vmatmul.f32.gmra.mxu0 %v1462
  %v1582 = vpop.f32.mrf.mxu0
  %v1583 = vadd.f32 0.0, %v1582
  %1584 = vmatmul.f32.gmra.mxu0 %v1463
  %v1585 = vpop.f32.mrf.mxu0
  %v1586 = vadd.f32 0.0, %v1585
  %1587 = vmatmul.f32.gmra.mxu0 %v1464
  %v1588 = vpop.f32.mrf.mxu0
  %v1589 = vadd.f32 0.0, %v1588
  %1590 = vmatmul.f32.gmra.mxu0 %v1465
  %v1591 = vpop.f32.mrf.mxu0
  %v1592 = vadd.f32 0.0, %v1591
  %1593 = vmatmul.f32.gmra.mxu0 %v1466
  %v1594 = vpop.f32.mrf.mxu0
  %v1595 = vadd.f32 0.0, %v1594
  %1596 = vdwg.mxu0
  %v1597 = vadd.f32 %v1340, %v1502
  %v1598 = vadd.f32 %v1343, %v1505
  %v1599 = vadd.f32 %v1346, %v1508
  %v1600 = vadd.f32 %v1349, %v1511
  %v1601 = vadd.f32 %v1352, %v1514
  %v1602 = vadd.f32 %v1355, %v1517
  %v1603 = vadd.f32 %v1358, %v1520
  %v1604 = vadd.f32 %v1361, %v1523
  %v1605 = vadd.f32 %v1364, %v1526
  %v1606 = vadd.f32 %v1367, %v1529
  %v1607 = vadd.f32 %v1370, %v1532
  %v1608 = vadd.f32 %v1373, %v1535
  %v1609 = vadd.f32 %v1376, %v1538
  %v1610 = vadd.f32 %v1379, %v1541
  %v1611 = vadd.f32 %v1382, %v1544
  %v1612 = vadd.f32 %v1385, %v1547
  %v1613 = vadd.f32 %v1388, %v1550
  %v1614 = vadd.f32 %v1391, %v1553
  %v1615 = vadd.f32 %v1394, %v1556
  %v1616 = vadd.f32 %v1397, %v1559
  %v1617 = vadd.f32 %v1400, %v1562
  %v1618 = vadd.f32 %v1403, %v1565
  %v1619 = vadd.f32 %v1406, %v1568
  %v1620 = vadd.f32 %v1409, %v1571
  %v1621 = vadd.f32 %v1412, %v1574
  %v1622 = vadd.f32 %v1415, %v1577
  %v1623 = vadd.f32 %v1418, %v1580
  %v1624 = vadd.f32 %v1421, %v1583
  %v1625 = vadd.f32 %v1424, %v1586
  %v1626 = vadd.f32 %v1427, %v1589
  %v1627 = vadd.f32 %v1430, %v1592
  %v1628 = vadd.f32 %v1433, %v1595
  %v1629 = vperm.slane %v46, 0
  %v1630 = vmul.f32 %v1597, %v1629
  %v1631 = vmul.f32 %v1598, %v1629
  %v1632 = vmul.f32 %v1599, %v1629
  %v1633 = vmul.f32 %v1600, %v1629
  %v1634 = vmul.f32 %v1601, %v1629
  %v1635 = vmul.f32 %v1602, %v1629
  %v1636 = vmul.f32 %v1603, %v1629
  %v1637 = vmul.f32 %v1604, %v1629
  %v1638 = vmul.f32 %v1605, %v1629
  %v1639 = vmul.f32 %v1606, %v1629
  %v1640 = vmul.f32 %v1607, %v1629
  %v1641 = vmul.f32 %v1608, %v1629
  %v1642 = vmul.f32 %v1609, %v1629
  %v1643 = vmul.f32 %v1610, %v1629
  %v1644 = vmul.f32 %v1611, %v1629
  %v1645 = vmul.f32 %v1612, %v1629
  %v1646 = vmul.f32 %v1613, %v1629
  %v1647 = vmul.f32 %v1614, %v1629
  %v1648 = vmul.f32 %v1615, %v1629
  %v1649 = vmul.f32 %v1616, %v1629
  %v1650 = vmul.f32 %v1617, %v1629
  %v1651 = vmul.f32 %v1618, %v1629
  %v1652 = vmul.f32 %v1619, %v1629
  %v1653 = vmul.f32 %v1620, %v1629
  %v1654 = vmul.f32 %v1621, %v1629
  %v1655 = vmul.f32 %v1622, %v1629
  %v1656 = vmul.f32 %v1623, %v1629
  %v1657 = vmul.f32 %v1624, %v1629
  %v1658 = vmul.f32 %v1625, %v1629
  %v1659 = vmul.f32 %v1626, %v1629
  %v1660 = vmul.f32 %v1627, %v1629
  %v1661 = vmul.f32 %v1628, %v1629
  %v1662 = vperm.slane %v47, 0
  %v1663 = vadd.f32 %v1630, %v1662
  %v1664 = vadd.f32 %v1631, %v1662
  %v1665 = vadd.f32 %v1632, %v1662
  %v1666 = vadd.f32 %v1633, %v1662
  %v1667 = vadd.f32 %v1634, %v1662
  %v1668 = vadd.f32 %v1635, %v1662
  %v1669 = vadd.f32 %v1636, %v1662
  %v1670 = vadd.f32 %v1637, %v1662
  %v1671 = vadd.f32 %v1638, %v1662
  %v1672 = vadd.f32 %v1639, %v1662
  %v1673 = vadd.f32 %v1640, %v1662
  %v1674 = vadd.f32 %v1641, %v1662
  %v1675 = vadd.f32 %v1642, %v1662
  %v1676 = vadd.f32 %v1643, %v1662
  %v1677 = vadd.f32 %v1644, %v1662
  %v1678 = vadd.f32 %v1645, %v1662
  %v1679 = vadd.f32 %v1646, %v1662
  %v1680 = vadd.f32 %v1647, %v1662
  %v1681 = vadd.f32 %v1648, %v1662
  %v1682 = vadd.f32 %v1649, %v1662
  %v1683 = vadd.f32 %v1650, %v1662
  %v1684 = vadd.f32 %v1651, %v1662
  %v1685 = vadd.f32 %v1652, %v1662
  %v1686 = vadd.f32 %v1653, %v1662
  %v1687 = vadd.f32 %v1654, %v1662
  %v1688 = vadd.f32 %v1655, %v1662
  %v1689 = vadd.f32 %v1656, %v1662
  %v1690 = vadd.f32 %v1657, %v1662
  %v1691 = vadd.f32 %v1658, %v1662
  %v1692 = vadd.f32 %v1659, %v1662
  %v1693 = vadd.f32 %v1660, %v1662
  %v1694 = vadd.f32 %v1661, %v1662
  %1695 = vst [vmem:[#allocation2] sm:$0xff] %v1663
  %1696 = vst [vmem:[#allocation2 + $0x8] sm:$0xff] %v1664
  %1697 = vst [vmem:[#allocation2 + $0x10] sm:$0xff] %v1665
  %1698 = vst [vmem:[#allocation2 + $0x18] sm:$0xff] %v1666
  %1699 = vst [vmem:[#allocation2 + $0x20] sm:$0xff] %v1667
  %1700 = vst [vmem:[#allocation2 + $0x28] sm:$0xff] %v1668
  %1701 = vst [vmem:[#allocation2 + $0x30] sm:$0xff] %v1669
  %1702 = vst [vmem:[#allocation2 + $0x38] sm:$0xff] %v1670
  %1703 = vst [vmem:[#allocation2 + $0x40] sm:$0xff] %v1671
  %1704 = vst [vmem:[#allocation2 + $0x48] sm:$0xff] %v1672
  %1705 = vst [vmem:[#allocation2 + $0x50] sm:$0xff] %v1673
  %1706 = vst [vmem:[#allocation2 + $0x58] sm:$0xff] %v1674
  %1707 = vst [vmem:[#allocation2 + $0x60] sm:$0xff] %v1675
  %1708 = vst [vmem:[#allocation2 + $0x68] sm:$0xff] %v1676
  %1709 = vst [vmem:[#allocation2 + $0x70] sm:$0xff] %v1677
  %1710 = vst [vmem:[#allocation2 + $0x78] sm:$0xff] %v1678
  %1711 = vst [vmem:[#allocation2 + $0x80] sm:$0xff] %v1679
  %1712 = vst [vmem:[#allocation2 + $0x88] sm:$0xff] %v1680
  %1713 = vst [vmem:[#allocation2 + $0x90] sm:$0xff] %v1681
  %1714 = vst [vmem:[#allocation2 + $0x98] sm:$0xff] %v1682
  %1715 = vst [vmem:[#allocation2 + $0xa0] sm:$0xff] %v1683
  %1716 = vst [vmem:[#allocation2 + $0xa8] sm:$0xff] %v1684
  %1717 = vst [vmem:[#allocation2 + $0xb0] sm:$0xff] %v1685
  %1718 = vst [vmem:[#allocation2 + $0xb8] sm:$0xff] %v1686
  %1719 = vst [vmem:[#allocation2 + $0xc0] sm:$0xff] %v1687
  %1720 = vst [vmem:[#allocation2 + $0xc8] sm:$0xff] %v1688
  %1721 = vst [vmem:[#allocation2 + $0xd0] sm:$0xff] %v1689
  %1722 = vst [vmem:[#allocation2 + $0xd8] sm:$0xff] %v1690
  %1723 = vst [vmem:[#allocation2 + $0xe0] sm:$0xff] %v1691
  %1724 = vst [vmem:[#allocation2 + $0xe8] sm:$0xff] %v1692
  %1725 = vst [vmem:[#allocation2 + $0xf0] sm:$0xff] %v1693
  %1726 = vst [vmem:[#allocation2 + $0xf8] sm:$0xff] %v1694
  %v1727 = vld [vmem:[#allocation2] sm:$0xff]
  %v1728 = vld [vmem:[%s7] sm:$0xff]
  %v1729 = vld [vmem:[%s7 + $0x8] sm:$0xff]
  %v1730 = vld [vmem:[%s7 + $0x10] sm:$0xff]
  %v1731 = vld [vmem:[%s7 + $0x18] sm:$0xff]
  %v1732 = vld [vmem:[%s7 + $0x20] sm:$0xff]
  %v1733 = vld [vmem:[%s7 + $0x28] sm:$0xff]
  %v1734 = vld [vmem:[%s7 + $0x30] sm:$0xff]
  %v1735 = vld [vmem:[%s7 + $0x38] sm:$0xff]
  %v1736 = vld [vmem:[%s7 + $0x40] sm:$0xff]
  %v1737 = vld [vmem:[%s7 + $0x48] sm:$0xff]
  %v1738 = vld [vmem:[%s7 + $0x50] sm:$0xff]
  %v1739 = vld [vmem:[%s7 + $0x58] sm:$0xff]
  %v1740 = vld [vmem:[%s7 + $0x60] sm:$0xff]
  %v1741 = vld [vmem:[%s7 + $0x68] sm:$0xff]
  %v1742 = vld [vmem:[%s7 + $0x70] sm:$0xff]
  %v1743 = vld [vmem:[%s7 + $0x78] sm:$0xff]
  %v1744 = vld [vmem:[#allocation2 + $0x8] sm:$0xff]
  %s1745 = scalar_lea.vmem %s7, 128
  %v1746 = vld [vmem:[%s1745] sm:$0xff]
  %v1747 = vld [vmem:[%s1745 + $0x8] sm:$0xff]
  %v1748 = vld [vmem:[%s1745 + $0x10] sm:$0xff]
  %v1749 = vld [vmem:[%s1745 + $0x18] sm:$0xff]
  %v1750 = vld [vmem:[%s1745 + $0x20] sm:$0xff]
  %v1751 = vld [vmem:[%s1745 + $0x28] sm:$0xff]
  %v1752 = vld [vmem:[%s1745 + $0x30] sm:$0xff]
  %v1753 = vld [vmem:[%s1745 + $0x38] sm:$0xff]
  %v1754 = vld [vmem:[%s1745 + $0x40] sm:$0xff]
  %v1755 = vld [vmem:[%s1745 + $0x48] sm:$0xff]
  %v1756 = vld [vmem:[%s1745 + $0x50] sm:$0xff]
  %v1757 = vld [vmem:[%s1745 + $0x58] sm:$0xff]
  %v1758 = vld [vmem:[%s1745 + $0x60] sm:$0xff]
  %v1759 = vld [vmem:[%s1745 + $0x68] sm:$0xff]
  %v1760 = vld [vmem:[%s1745 + $0x70] sm:$0xff]
  %v1761 = vld [vmem:[%s1745 + $0x78] sm:$0xff]
  %1762 = vmatpush.msra.mxu0 %v1761
  %1763 = vmatpush.msra.mxu0 %v1760
  %1764 = vmatpush.msra.mxu0 %v1759
  %1765 = vmatpush.msra.mxu0 %v1758
  %1766 = vmatpush.msra.mxu0 %v1757
  %1767 = vmatpush.msra.mxu0 %v1756
  %1768 = vmatpush.msra.mxu0 %v1755
  %1769 = vmatpush.msra.mxu0 %v1754
  %1770 = vmatpush.msra.mxu0 %v1753
  %1771 = vmatpush.msra.mxu0 %v1752
  %1772 = vmatpush.msra.mxu0 %v1751
  %1773 = vmatpush.msra.mxu0 %v1750
  %1774 = vmatpush.msra.mxu0 %v1749
  %1775 = vmatpush.msra.mxu0 %v1748
  %1776 = vmatpush.msra.mxu0 %v1747
  %1777 = vmatpush.msra.mxu0 %v1746
  %1778 = vmatmul.f32.gmra.mxu0 %v1744
  %v1779 = vpop.f32.mrf.mxu0
  %v1780 = vadd.f32 0.0, %v1779
  %1781 = vdwg.mxu0
  %1782 = vmatpush.msra.mxu0 %v1743
  %1783 = vmatpush.msra.mxu0 %v1742
  %1784 = vmatpush.msra.mxu0 %v1741
  %1785 = vmatpush.msra.mxu0 %v1740
  %1786 = vmatpush.msra.mxu0 %v1739
  %1787 = vmatpush.msra.mxu0 %v1738
  %1788 = vmatpush.msra.mxu0 %v1737
  %1789 = vmatpush.msra.mxu0 %v1736
  %1790 = vmatpush.msra.mxu0 %v1735
  %1791 = vmatpush.msra.mxu0 %v1734
  %1792 = vmatpush.msra.mxu0 %v1733
  %1793 = vmatpush.msra.mxu0 %v1732
  %1794 = vmatpush.msra.mxu0 %v1731
  %1795 = vmatpush.msra.mxu0 %v1730
  %1796 = vmatpush.msra.mxu0 %v1729
  %1797 = vmatpush.msra.mxu0 %v1728
  %1798 = vmatmul.f32.gmra.mxu0 %v1727
  %v1799 = vpop.f32.mrf.mxu0
  %v1800 = vadd.f32 %v1780, %v1799
  %1801 = vdwg.mxu0
  %v1802 = vld [vmem:[#allocation2 + $0x10] sm:$0xff]
  %s1803 = scalar_lea.vmem %s7, 256
  %v1804 = vld [vmem:[%s1803] sm:$0xff]
  %v1805 = vld [vmem:[%s1803 + $0x8] sm:$0xff]
  %v1806 = vld [vmem:[%s1803 + $0x10] sm:$0xff]
  %v1807 = vld [vmem:[%s1803 + $0x18] sm:$0xff]
  %v1808 = vld [vmem:[%s1803 + $0x20] sm:$0xff]
  %v1809 = vld [vmem:[%s1803 + $0x28] sm:$0xff]
  %v1810 = vld [vmem:[%s1803 + $0x30] sm:$0xff]
  %v1811 = vld [vmem:[%s1803 + $0x38] sm:$0xff]
  %v1812 = vld [vmem:[%s1803 + $0x40] sm:$0xff]
  %v1813 = vld [vmem:[%s1803 + $0x48] sm:$0xff]
  %v1814 = vld [vmem:[%s1803 + $0x50] sm:$0xff]
  %v1815 = vld [vmem:[%s1803 + $0x58] sm:$0xff]
  %v1816 = vld [vmem:[%s1803 + $0x60] sm:$0xff]
  %v1817 = vld [vmem:[%s1803 + $0x68] sm:$0xff]
  %v1818 = vld [vmem:[%s1803 + $0x70] sm:$0xff]
  %v1819 = vld [vmem:[%s1803 + $0x78] sm:$0xff]
  %1820 = vmatpush.msra.mxu0 %v1819
  %1821 = vmatpush.msra.mxu0 %v1818
  %1822 = vmatpush.msra.mxu0 %v1817
  %1823 = vmatpush.msra.mxu0 %v1816
  %1824 = vmatpush.msra.mxu0 %v1815
  %1825 = vmatpush.msra.mxu0 %v1814
  %1826 = vmatpush.msra.mxu0 %v1813
  %1827 = vmatpush.msra.mxu0 %v1812
  %1828 = vmatpush.msra.mxu0 %v1811
  %1829 = vmatpush.msra.mxu0 %v1810
  %1830 = vmatpush.msra.mxu0 %v1809
  %1831 = vmatpush.msra.mxu0 %v1808
  %1832 = vmatpush.msra.mxu0 %v1807
  %1833 = vmatpush.msra.mxu0 %v1806
  %1834 = vmatpush.msra.mxu0 %v1805
  %1835 = vmatpush.msra.mxu0 %v1804
  %1836 = vmatmul.f32.gmra.mxu0 %v1802
  %v1837 = vpop.f32.mrf.mxu0
  %v1838 = vadd.f32 0.0, %v1837
  %1839 = vdwg.mxu0
  %v1840 = vadd.f32 %v1800, %v1838
  %v1841 = vld [vmem:[#allocation2 + $0x18] sm:$0xff]
  %s1842 = scalar_lea.vmem %s7, 384
  %v1843 = vld [vmem:[%s1842] sm:$0xff]
  %v1844 = vld [vmem:[%s1842 + $0x8] sm:$0xff]
  %v1845 = vld [vmem:[%s1842 + $0x10] sm:$0xff]
  %v1846 = vld [vmem:[%s1842 + $0x18] sm:$0xff]
  %v1847 = vld [vmem:[%s1842 + $0x20] sm:$0xff]
  %v1848 = vld [vmem:[%s1842 + $0x28] sm:$0xff]
  %v1849 = vld [vmem:[%s1842 + $0x30] sm:$0xff]
  %v1850 = vld [vmem:[%s1842 + $0x38] sm:$0xff]
  %v1851 = vld [vmem:[%s1842 + $0x40] sm:$0xff]
  %v1852 = vld [vmem:[%s1842 + $0x48] sm:$0xff]
  %v1853 = vld [vmem:[%s1842 + $0x50] sm:$0xff]
  %v1854 = vld [vmem:[%s1842 + $0x58] sm:$0xff]
  %v1855 = vld [vmem:[%s1842 + $0x60] sm:$0xff]
  %v1856 = vld [vmem:[%s1842 + $0x68] sm:$0xff]
  %v1857 = vld [vmem:[%s1842 + $0x70] sm:$0xff]
  %v1858 = vld [vmem:[%s1842 + $0x78] sm:$0xff]
  %1859 = vmatpush.msra.mxu0 %v1858
  %1860 = vmatpush.msra.mxu0 %v1857
  %1861 = vmatpush.msra.mxu0 %v1856
  %1862 = vmatpush.msra.mxu0 %v1855
  %1863 = vmatpush.msra.mxu0 %v1854
  %1864 = vmatpush.msra.mxu0 %v1853
  %1865 = vmatpush.msra.mxu0 %v1852
  %1866 = vmatpush.msra.mxu0 %v1851
  %1867 = vmatpush.msra.mxu0 %v1850
  %1868 = vmatpush.msra.mxu0 %v1849
  %1869 = vmatpush.msra.mxu0 %v1848
  %1870 = vmatpush.msra.mxu0 %v1847
  %1871 = vmatpush.msra.mxu0 %v1846
  %1872 = vmatpush.msra.mxu0 %v1845
  %1873 = vmatpush.msra.mxu0 %v1844
  %1874 = vmatpush.msra.mxu0 %v1843
  %1875 = vmatmul.f32.gmra.mxu0 %v1841
  %v1876 = vpop.f32.mrf.mxu0
  %v1877 = vadd.f32 0.0, %v1876
  %1878 = vdwg.mxu0
  %v1879 = vadd.f32 %v1840, %v1877
  %v1880 = vld [vmem:[#allocation2 + $0x20] sm:$0xff]
  %s1881 = scalar_lea.vmem %s7, 512
  %v1882 = vld [vmem:[%s1881] sm:$0xff]
  %v1883 = vld [vmem:[%s1881 + $0x8] sm:$0xff]
  %v1884 = vld [vmem:[%s1881 + $0x10] sm:$0xff]
  %v1885 = vld [vmem:[%s1881 + $0x18] sm:$0xff]
  %v1886 = vld [vmem:[%s1881 + $0x20] sm:$0xff]
  %v1887 = vld [vmem:[%s1881 + $0x28] sm:$0xff]
  %v1888 = vld [vmem:[%s1881 + $0x30] sm:$0xff]
  %v1889 = vld [vmem:[%s1881 + $0x38] sm:$0xff]
  %v1890 = vld [vmem:[%s1881 + $0x40] sm:$0xff]
  %v1891 = vld [vmem:[%s1881 + $0x48] sm:$0xff]
  %v1892 = vld [vmem:[%s1881 + $0x50] sm:$0xff]
  %v1893 = vld [vmem:[%s1881 + $0x58] sm:$0xff]
  %v1894 = vld [vmem:[%s1881 + $0x60] sm:$0xff]
  %v1895 = vld [vmem:[%s1881 + $0x68] sm:$0xff]
  %v1896 = vld [vmem:[%s1881 + $0x70] sm:$0xff]
  %v1897 = vld [vmem:[%s1881 + $0x78] sm:$0xff]
  %1898 = vmatpush.msra.mxu0 %v1897
  %1899 = vmatpush.msra.mxu0 %v1896
  %1900 = vmatpush.msra.mxu0 %v1895
  %1901 = vmatpush.msra.mxu0 %v1894
  %1902 = vmatpush.msra.mxu0 %v1893
  %1903 = vmatpush.msra.mxu0 %v1892
  %1904 = vmatpush.msra.mxu0 %v1891
  %1905 = vmatpush.msra.mxu0 %v1890
  %1906 = vmatpush.msra.mxu0 %v1889
  %1907 = vmatpush.msra.mxu0 %v1888
  %1908 = vmatpush.msra.mxu0 %v1887
  %1909 = vmatpush.msra.mxu0 %v1886
  %1910 = vmatpush.msra.mxu0 %v1885
  %1911 = vmatpush.msra.mxu0 %v1884
  %1912 = vmatpush.msra.mxu0 %v1883
  %1913 = vmatpush.msra.mxu0 %v1882
  %1914 = vmatmul.f32.gmra.mxu0 %v1880
  %v1915 = vpop.f32.mrf.mxu0
  %v1916 = vadd.f32 0.0, %v1915
  %1917 = vdwg.mxu0
  %v1918 = vadd.f32 %v1879, %v1916
  %v1919 = vld [vmem:[#allocation2 + $0x28] sm:$0xff]
  %s1920 = scalar_lea.vmem %s7, 640
  %v1921 = vld [vmem:[%s1920] sm:$0xff]
  %v1922 = vld [vmem:[%s1920 + $0x8] sm:$0xff]
  %v1923 = vld [vmem:[%s1920 + $0x10] sm:$0xff]
  %v1924 = vld [vmem:[%s1920 + $0x18] sm:$0xff]
  %v1925 = vld [vmem:[%s1920 + $0x20] sm:$0xff]
  %v1926 = vld [vmem:[%s1920 + $0x28] sm:$0xff]
  %v1927 = vld [vmem:[%s1920 + $0x30] sm:$0xff]
  %v1928 = vld [vmem:[%s1920 + $0x38] sm:$0xff]
  %v1929 = vld [vmem:[%s1920 + $0x40] sm:$0xff]
  %v1930 = vld [vmem:[%s1920 + $0x48] sm:$0xff]
  %v1931 = vld [vmem:[%s1920 + $0x50] sm:$0xff]
  %v1932 = vld [vmem:[%s1920 + $0x58] sm:$0xff]
  %v1933 = vld [vmem:[%s1920 + $0x60] sm:$0xff]
  %v1934 = vld [vmem:[%s1920 + $0x68] sm:$0xff]
  %v1935 = vld [vmem:[%s1920 + $0x70] sm:$0xff]
  %v1936 = vld [vmem:[%s1920 + $0x78] sm:$0xff]
  %1937 = vmatpush.msra.mxu0 %v1936
  %1938 = vmatpush.msra.mxu0 %v1935
  %1939 = vmatpush.msra.mxu0 %v1934
  %1940 = vmatpush.msra.mxu0 %v1933
  %1941 = vmatpush.msra.mxu0 %v1932
  %1942 = vmatpush.msra.mxu0 %v1931
  %1943 = vmatpush.msra.mxu0 %v1930
  %1944 = vmatpush.msra.mxu0 %v1929
  %1945 = vmatpush.msra.mxu0 %v1928
  %1946 = vmatpush.msra.mxu0 %v1927
  %1947 = vmatpush.msra.mxu0 %v1926
  %1948 = vmatpush.msra.mxu0 %v1925
  %1949 = vmatpush.msra.mxu0 %v1924
  %1950 = vmatpush.msra.mxu0 %v1923
  %1951 = vmatpush.msra.mxu0 %v1922
  %1952 = vmatpush.msra.mxu0 %v1921
  %1953 = vmatmul.f32.gmra.mxu0 %v1919
  %v1954 = vpop.f32.mrf.mxu0
  %v1955 = vadd.f32 0.0, %v1954
  %1956 = vdwg.mxu0
  %v1957 = vadd.f32 %v1918, %v1955
  %v1958 = vld [vmem:[#allocation2 + $0x30] sm:$0xff]
  %s1959 = scalar_lea.vmem %s7, 768
  %v1960 = vld [vmem:[%s1959] sm:$0xff]
  %v1961 = vld [vmem:[%s1959 + $0x8] sm:$0xff]
  %v1962 = vld [vmem:[%s1959 + $0x10] sm:$0xff]
  %v1963 = vld [vmem:[%s1959 + $0x18] sm:$0xff]
  %v1964 = vld [vmem:[%s1959 + $0x20] sm:$0xff]
  %v1965 = vld [vmem:[%s1959 + $0x28] sm:$0xff]
  %v1966 = vld [vmem:[%s1959 + $0x30] sm:$0xff]
  %v1967 = vld [vmem:[%s1959 + $0x38] sm:$0xff]
  %v1968 = vld [vmem:[%s1959 + $0x40] sm:$0xff]
  %v1969 = vld [vmem:[%s1959 + $0x48] sm:$0xff]
  %v1970 = vld [vmem:[%s1959 + $0x50] sm:$0xff]
  %v1971 = vld [vmem:[%s1959 + $0x58] sm:$0xff]
  %v1972 = vld [vmem:[%s1959 + $0x60] sm:$0xff]
  %v1973 = vld [vmem:[%s1959 + $0x68] sm:$0xff]
  %v1974 = vld [vmem:[%s1959 + $0x70] sm:$0xff]
  %v1975 = vld [vmem:[%s1959 + $0x78] sm:$0xff]
  %1976 = vmatpush.msra.mxu0 %v1975
  %1977 = vmatpush.msra.mxu0 %v1974
  %1978 = vmatpush.msra.mxu0 %v1973
  %1979 = vmatpush.msra.mxu0 %v1972
  %1980 = vmatpush.msra.mxu0 %v1971
  %1981 = vmatpush.msra.mxu0 %v1970
  %1982 = vmatpush.msra.mxu0 %v1969
  %1983 = vmatpush.msra.mxu0 %v1968
  %1984 = vmatpush.msra.mxu0 %v1967
  %1985 = vmatpush.msra.mxu0 %v1966
  %1986 = vmatpush.msra.mxu0 %v1965
  %1987 = vmatpush.msra.mxu0 %v1964
  %1988 = vmatpush.msra.mxu0 %v1963
  %1989 = vmatpush.msra.mxu0 %v1962
  %1990 = vmatpush.msra.mxu0 %v1961
  %1991 = vmatpush.msra.mxu0 %v1960
  %1992 = vmatmul.f32.gmra.mxu0 %v1958
  %v1993 = vpop.f32.mrf.mxu0
  %v1994 = vadd.f32 0.0, %v1993
  %1995 = vdwg.mxu0
  %v1996 = vadd.f32 %v1957, %v1994
  %v1997 = vld [vmem:[#allocation2 + $0x38] sm:$0xff]
  %s1998 = scalar_lea.vmem %s7, 896
  %v1999 = vld [vmem:[%s1998] sm:$0xff]
  %v2000 = vld [vmem:[%s1998 + $0x8] sm:$0xff]
  %v2001 = vld [vmem:[%s1998 + $0x10] sm:$0xff]
  %v2002 = vld [vmem:[%s1998 + $0x18] sm:$0xff]
  %v2003 = vld [vmem:[%s1998 + $0x20] sm:$0xff]
  %v2004 = vld [vmem:[%s1998 + $0x28] sm:$0xff]
  %v2005 = vld [vmem:[%s1998 + $0x30] sm:$0xff]
  %v2006 = vld [vmem:[%s1998 + $0x38] sm:$0xff]
  %v2007 = vld [vmem:[%s1998 + $0x40] sm:$0xff]
  %v2008 = vld [vmem:[%s1998 + $0x48] sm:$0xff]
  %v2009 = vld [vmem:[%s1998 + $0x50] sm:$0xff]
  %v2010 = vld [vmem:[%s1998 + $0x58] sm:$0xff]
  %v2011 = vld [vmem:[%s1998 + $0x60] sm:$0xff]
  %v2012 = vld [vmem:[%s1998 + $0x68] sm:$0xff]
  %v2013 = vld [vmem:[%s1998 + $0x70] sm:$0xff]
  %v2014 = vld [vmem:[%s1998 + $0x78] sm:$0xff]
  %2015 = vmatpush.msra.mxu0 %v2014
  %2016 = vmatpush.msra.mxu0 %v2013
  %2017 = vmatpush.msra.mxu0 %v2012
  %2018 = vmatpush.msra.mxu0 %v2011
  %2019 = vmatpush.msra.mxu0 %v2010
  %2020 = vmatpush.msra.mxu0 %v2009
  %2021 = vmatpush.msra.mxu0 %v2008
  %2022 = vmatpush.msra.mxu0 %v2007
  %2023 = vmatpush.msra.mxu0 %v2006
  %2024 = vmatpush.msra.mxu0 %v2005
  %2025 = vmatpush.msra.mxu0 %v2004
  %2026 = vmatpush.msra.mxu0 %v2003
  %2027 = vmatpush.msra.mxu0 %v2002
  %2028 = vmatpush.msra.mxu0 %v2001
  %2029 = vmatpush.msra.mxu0 %v2000
  %2030 = vmatpush.msra.mxu0 %v1999
  %2031 = vmatmul.f32.gmra.mxu0 %v1997
  %v2032 = vpop.f32.mrf.mxu0
  %v2033 = vadd.f32 0.0, %v2032
  %2034 = vdwg.mxu0
  %v2035 = vadd.f32 %v1996, %v2033
  %v2036 = vld [vmem:[#allocation2 + $0x40] sm:$0xff]
  %s2037 = scalar_lea.vmem %s7, 1024
  %v2038 = vld [vmem:[%s2037] sm:$0xff]
  %v2039 = vld [vmem:[%s2037 + $0x8] sm:$0xff]
  %v2040 = vld [vmem:[%s2037 + $0x10] sm:$0xff]
  %v2041 = vld [vmem:[%s2037 + $0x18] sm:$0xff]
  %v2042 = vld [vmem:[%s2037 + $0x20] sm:$0xff]
  %v2043 = vld [vmem:[%s2037 + $0x28] sm:$0xff]
  %v2044 = vld [vmem:[%s2037 + $0x30] sm:$0xff]
  %v2045 = vld [vmem:[%s2037 + $0x38] sm:$0xff]
  %v2046 = vld [vmem:[%s2037 + $0x40] sm:$0xff]
  %v2047 = vld [vmem:[%s2037 + $0x48] sm:$0xff]
  %v2048 = vld [vmem:[%s2037 + $0x50] sm:$0xff]
  %v2049 = vld [vmem:[%s2037 + $0x58] sm:$0xff]
  %v2050 = vld [vmem:[%s2037 + $0x60] sm:$0xff]
  %v2051 = vld [vmem:[%s2037 + $0x68] sm:$0xff]
  %v2052 = vld [vmem:[%s2037 + $0x70] sm:$0xff]
  %v2053 = vld [vmem:[%s2037 + $0x78] sm:$0xff]
  %v2054 = vld [vmem:[#allocation2 + $0x48] sm:$0xff]
  %s2055 = scalar_lea.vmem %s7, 1152
  %v2056 = vld [vmem:[%s2055] sm:$0xff]
  %v2057 = vld [vmem:[%s2055 + $0x8] sm:$0xff]
  %v2058 = vld [vmem:[%s2055 + $0x10] sm:$0xff]
  %v2059 = vld [vmem:[%s2055 + $0x18] sm:$0xff]
  %v2060 = vld [vmem:[%s2055 + $0x20] sm:$0xff]
  %v2061 = vld [vmem:[%s2055 + $0x28] sm:$0xff]
  %v2062 = vld [vmem:[%s2055 + $0x30] sm:$0xff]
  %v2063 = vld [vmem:[%s2055 + $0x38] sm:$0xff]
  %v2064 = vld [vmem:[%s2055 + $0x40] sm:$0xff]
  %v2065 = vld [vmem:[%s2055 + $0x48] sm:$0xff]
  %v2066 = vld [vmem:[%s2055 + $0x50] sm:$0xff]
  %v2067 = vld [vmem:[%s2055 + $0x58] sm:$0xff]
  %v2068 = vld [vmem:[%s2055 + $0x60] sm:$0xff]
  %v2069 = vld [vmem:[%s2055 + $0x68] sm:$0xff]
  %v2070 = vld [vmem:[%s2055 + $0x70] sm:$0xff]
  %v2071 = vld [vmem:[%s2055 + $0x78] sm:$0xff]
  %2072 = vmatpush.msra.mxu0 %v2071
  %2073 = vmatpush.msra.mxu0 %v2070
  %2074 = vmatpush.msra.mxu0 %v2069
  %2075 = vmatpush.msra.mxu0 %v2068
  %2076 = vmatpush.msra.mxu0 %v2067
  %2077 = vmatpush.msra.mxu0 %v2066
  %2078 = vmatpush.msra.mxu0 %v2065
  %2079 = vmatpush.msra.mxu0 %v2064
  %2080 = vmatpush.msra.mxu0 %v2063
  %2081 = vmatpush.msra.mxu0 %v2062
  %2082 = vmatpush.msra.mxu0 %v2061
  %2083 = vmatpush.msra.mxu0 %v2060
  %2084 = vmatpush.msra.mxu0 %v2059
  %2085 = vmatpush.msra.mxu0 %v2058
  %2086 = vmatpush.msra.mxu0 %v2057
  %2087 = vmatpush.msra.mxu0 %v2056
  %2088 = vmatmul.f32.gmra.mxu0 %v2054
  %v2089 = vpop.f32.mrf.mxu0
  %v2090 = vadd.f32 0.0, %v2089
  %2091 = vdwg.mxu0
  %2092 = vmatpush.msra.mxu0 %v2053
  %2093 = vmatpush.msra.mxu0 %v2052
  %2094 = vmatpush.msra.mxu0 %v2051
  %2095 = vmatpush.msra.mxu0 %v2050
  %2096 = vmatpush.msra.mxu0 %v2049
  %2097 = vmatpush.msra.mxu0 %v2048
  %2098 = vmatpush.msra.mxu0 %v2047
  %2099 = vmatpush.msra.mxu0 %v2046
  %2100 = vmatpush.msra.mxu0 %v2045
  %2101 = vmatpush.msra.mxu0 %v2044
  %2102 = vmatpush.msra.mxu0 %v2043
  %2103 = vmatpush.msra.mxu0 %v2042
  %2104 = vmatpush.msra.mxu0 %v2041
  %2105 = vmatpush.msra.mxu0 %v2040
  %2106 = vmatpush.msra.mxu0 %v2039
  %2107 = vmatpush.msra.mxu0 %v2038
  %2108 = vmatmul.f32.gmra.mxu0 %v2036
  %v2109 = vpop.f32.mrf.mxu0
  %v2110 = vadd.f32 %v2090, %v2109
  %2111 = vdwg.mxu0
  %v2112 = vld [vmem:[#allocation2 + $0x50] sm:$0xff]
  %s2113 = scalar_lea.vmem %s7, 1280
  %v2114 = vld [vmem:[%s2113] sm:$0xff]
  %v2115 = vld [vmem:[%s2113 + $0x8] sm:$0xff]
  %v2116 = vld [vmem:[%s2113 + $0x10] sm:$0xff]
  %v2117 = vld [vmem:[%s2113 + $0x18] sm:$0xff]
  %v2118 = vld [vmem:[%s2113 + $0x20] sm:$0xff]
  %v2119 = vld [vmem:[%s2113 + $0x28] sm:$0xff]
  %v2120 = vld [vmem:[%s2113 + $0x30] sm:$0xff]
  %v2121 = vld [vmem:[%s2113 + $0x38] sm:$0xff]
  %v2122 = vld [vmem:[%s2113 + $0x40] sm:$0xff]
  %v2123 = vld [vmem:[%s2113 + $0x48] sm:$0xff]
  %v2124 = vld [vmem:[%s2113 + $0x50] sm:$0xff]
  %v2125 = vld [vmem:[%s2113 + $0x58] sm:$0xff]
  %v2126 = vld [vmem:[%s2113 + $0x60] sm:$0xff]
  %v2127 = vld [vmem:[%s2113 + $0x68] sm:$0xff]
  %v2128 = vld [vmem:[%s2113 + $0x70] sm:$0xff]
  %v2129 = vld [vmem:[%s2113 + $0x78] sm:$0xff]
  %2130 = vmatpush.msra.mxu0 %v2129
  %2131 = vmatpush.msra.mxu0 %v2128
  %2132 = vmatpush.msra.mxu0 %v2127
  %2133 = vmatpush.msra.mxu0 %v2126
  %2134 = vmatpush.msra.mxu0 %v2125
  %2135 = vmatpush.msra.mxu0 %v2124
  %2136 = vmatpush.msra.mxu0 %v2123
  %2137 = vmatpush.msra.mxu0 %v2122
  %2138 = vmatpush.msra.mxu0 %v2121
  %2139 = vmatpush.msra.mxu0 %v2120
  %2140 = vmatpush.msra.mxu0 %v2119
  %2141 = vmatpush.msra.mxu0 %v2118
  %2142 = vmatpush.msra.mxu0 %v2117
  %2143 = vmatpush.msra.mxu0 %v2116
  %2144 = vmatpush.msra.mxu0 %v2115
  %2145 = vmatpush.msra.mxu0 %v2114
  %2146 = vmatmul.f32.gmra.mxu0 %v2112
  %v2147 = vpop.f32.mrf.mxu0
  %v2148 = vadd.f32 0.0, %v2147
  %2149 = vdwg.mxu0
  %v2150 = vadd.f32 %v2110, %v2148
  %v2151 = vld [vmem:[#allocation2 + $0x58] sm:$0xff]
  %s2152 = scalar_lea.vmem %s7, 1408
  %v2153 = vld [vmem:[%s2152] sm:$0xff]
  %v2154 = vld [vmem:[%s2152 + $0x8] sm:$0xff]
  %v2155 = vld [vmem:[%s2152 + $0x10] sm:$0xff]
  %v2156 = vld [vmem:[%s2152 + $0x18] sm:$0xff]
  %v2157 = vld [vmem:[%s2152 + $0x20] sm:$0xff]
  %v2158 = vld [vmem:[%s2152 + $0x28] sm:$0xff]
  %v2159 = vld [vmem:[%s2152 + $0x30] sm:$0xff]
  %v2160 = vld [vmem:[%s2152 + $0x38] sm:$0xff]
  %v2161 = vld [vmem:[%s2152 + $0x40] sm:$0xff]
  %v2162 = vld [vmem:[%s2152 + $0x48] sm:$0xff]
  %v2163 = vld [vmem:[%s2152 + $0x50] sm:$0xff]
  %v2164 = vld [vmem:[%s2152 + $0x58] sm:$0xff]
  %v2165 = vld [vmem:[%s2152 + $0x60] sm:$0xff]
  %v2166 = vld [vmem:[%s2152 + $0x68] sm:$0xff]
  %v2167 = vld [vmem:[%s2152 + $0x70] sm:$0xff]
  %v2168 = vld [vmem:[%s2152 + $0x78] sm:$0xff]
  %2169 = vmatpush.msra.mxu0 %v2168
  %2170 = vmatpush.msra.mxu0 %v2167
  %2171 = vmatpush.msra.mxu0 %v2166
  %2172 = vmatpush.msra.mxu0 %v2165
  %2173 = vmatpush.msra.mxu0 %v2164
  %2174 = vmatpush.msra.mxu0 %v2163
  %2175 = vmatpush.msra.mxu0 %v2162
  %2176 = vmatpush.msra.mxu0 %v2161
  %2177 = vmatpush.msra.mxu0 %v2160
  %2178 = vmatpush.msra.mxu0 %v2159
  %2179 = vmatpush.msra.mxu0 %v2158
  %2180 = vmatpush.msra.mxu0 %v2157
  %2181 = vmatpush.msra.mxu0 %v2156
  %2182 = vmatpush.msra.mxu0 %v2155
  %2183 = vmatpush.msra.mxu0 %v2154
  %2184 = vmatpush.msra.mxu0 %v2153
  %2185 = vmatmul.f32.gmra.mxu0 %v2151
  %v2186 = vpop.f32.mrf.mxu0
  %v2187 = vadd.f32 0.0, %v2186
  %2188 = vdwg.mxu0
  %v2189 = vadd.f32 %v2150, %v2187
  %v2190 = vld [vmem:[#allocation2 + $0x60] sm:$0xff]
  %s2191 = scalar_lea.vmem %s7, 1536
  %v2192 = vld [vmem:[%s2191] sm:$0xff]
  %v2193 = vld [vmem:[%s2191 + $0x8] sm:$0xff]
  %v2194 = vld [vmem:[%s2191 + $0x10] sm:$0xff]
  %v2195 = vld [vmem:[%s2191 + $0x18] sm:$0xff]
  %v2196 = vld [vmem:[%s2191 + $0x20] sm:$0xff]
  %v2197 = vld [vmem:[%s2191 + $0x28] sm:$0xff]
  %v2198 = vld [vmem:[%s2191 + $0x30] sm:$0xff]
  %v2199 = vld [vmem:[%s2191 + $0x38] sm:$0xff]
  %v2200 = vld [vmem:[%s2191 + $0x40] sm:$0xff]
  %v2201 = vld [vmem:[%s2191 + $0x48] sm:$0xff]
  %v2202 = vld [vmem:[%s2191 + $0x50] sm:$0xff]
  %v2203 = vld [vmem:[%s2191 + $0x58] sm:$0xff]
  %v2204 = vld [vmem:[%s2191 + $0x60] sm:$0xff]
  %v2205 = vld [vmem:[%s2191 + $0x68] sm:$0xff]
  %v2206 = vld [vmem:[%s2191 + $0x70] sm:$0xff]
  %v2207 = vld [vmem:[%s2191 + $0x78] sm:$0xff]
  %2208 = vmatpush.msra.mxu0 %v2207
  %2209 = vmatpush.msra.mxu0 %v2206
  %2210 = vmatpush.msra.mxu0 %v2205
  %2211 = vmatpush.msra.mxu0 %v2204
  %2212 = vmatpush.msra.mxu0 %v2203
  %2213 = vmatpush.msra.mxu0 %v2202
  %2214 = vmatpush.msra.mxu0 %v2201
  %2215 = vmatpush.msra.mxu0 %v2200
  %2216 = vmatpush.msra.mxu0 %v2199
  %2217 = vmatpush.msra.mxu0 %v2198
  %2218 = vmatpush.msra.mxu0 %v2197
  %2219 = vmatpush.msra.mxu0 %v2196
  %2220 = vmatpush.msra.mxu0 %v2195
  %2221 = vmatpush.msra.mxu0 %v2194
  %2222 = vmatpush.msra.mxu0 %v2193
  %2223 = vmatpush.msra.mxu0 %v2192
  %2224 = vmatmul.f32.gmra.mxu0 %v2190
  %v2225 = vpop.f32.mrf.mxu0
  %v2226 = vadd.f32 0.0, %v2225
  %2227 = vdwg.mxu0
  %v2228 = vadd.f32 %v2189, %v2226
  %v2229 = vld [vmem:[#allocation2 + $0x68] sm:$0xff]
  %s2230 = scalar_lea.vmem %s7, 1664
  %v2231 = vld [vmem:[%s2230] sm:$0xff]
  %v2232 = vld [vmem:[%s2230 + $0x8] sm:$0xff]
  %v2233 = vld [vmem:[%s2230 + $0x10] sm:$0xff]
  %v2234 = vld [vmem:[%s2230 + $0x18] sm:$0xff]
  %v2235 = vld [vmem:[%s2230 + $0x20] sm:$0xff]
  %v2236 = vld [vmem:[%s2230 + $0x28] sm:$0xff]
  %v2237 = vld [vmem:[%s2230 + $0x30] sm:$0xff]
  %v2238 = vld [vmem:[%s2230 + $0x38] sm:$0xff]
  %v2239 = vld [vmem:[%s2230 + $0x40] sm:$0xff]
  %v2240 = vld [vmem:[%s2230 + $0x48] sm:$0xff]
  %v2241 = vld [vmem:[%s2230 + $0x50] sm:$0xff]
  %v2242 = vld [vmem:[%s2230 + $0x58] sm:$0xff]
  %v2243 = vld [vmem:[%s2230 + $0x60] sm:$0xff]
  %v2244 = vld [vmem:[%s2230 + $0x68] sm:$0xff]
  %v2245 = vld [vmem:[%s2230 + $0x70] sm:$0xff]
  %v2246 = vld [vmem:[%s2230 + $0x78] sm:$0xff]
  %2247 = vmatpush.msra.mxu0 %v2246
  %2248 = vmatpush.msra.mxu0 %v2245
  %2249 = vmatpush.msra.mxu0 %v2244
  %2250 = vmatpush.msra.mxu0 %v2243
  %2251 = vmatpush.msra.mxu0 %v2242
  %2252 = vmatpush.msra.mxu0 %v2241
  %2253 = vmatpush.msra.mxu0 %v2240
  %2254 = vmatpush.msra.mxu0 %v2239
  %2255 = vmatpush.msra.mxu0 %v2238
  %2256 = vmatpush.msra.mxu0 %v2237
  %2257 = vmatpush.msra.mxu0 %v2236
  %2258 = vmatpush.msra.mxu0 %v2235
  %2259 = vmatpush.msra.mxu0 %v2234
  %2260 = vmatpush.msra.mxu0 %v2233
  %2261 = vmatpush.msra.mxu0 %v2232
  %2262 = vmatpush.msra.mxu0 %v2231
  %2263 = vmatmul.f32.gmra.mxu0 %v2229
  %v2264 = vpop.f32.mrf.mxu0
  %v2265 = vadd.f32 0.0, %v2264
  %2266 = vdwg.mxu0
  %v2267 = vadd.f32 %v2228, %v2265
  %v2268 = vld [vmem:[#allocation2 + $0x70] sm:$0xff]
  %s2269 = scalar_lea.vmem %s7, 1792
  %v2270 = vld [vmem:[%s2269] sm:$0xff]
  %v2271 = vld [vmem:[%s2269 + $0x8] sm:$0xff]
  %v2272 = vld [vmem:[%s2269 + $0x10] sm:$0xff]
  %v2273 = vld [vmem:[%s2269 + $0x18] sm:$0xff]
  %v2274 = vld [vmem:[%s2269 + $0x20] sm:$0xff]
  %v2275 = vld [vmem:[%s2269 + $0x28] sm:$0xff]
  %v2276 = vld [vmem:[%s2269 + $0x30] sm:$0xff]
  %v2277 = vld [vmem:[%s2269 + $0x38] sm:$0xff]
  %v2278 = vld [vmem:[%s2269 + $0x40] sm:$0xff]
  %v2279 = vld [vmem:[%s2269 + $0x48] sm:$0xff]
  %v2280 = vld [vmem:[%s2269 + $0x50] sm:$0xff]
  %v2281 = vld [vmem:[%s2269 + $0x58] sm:$0xff]
  %v2282 = vld [vmem:[%s2269 + $0x60] sm:$0xff]
  %v2283 = vld [vmem:[%s2269 + $0x68] sm:$0xff]
  %v2284 = vld [vmem:[%s2269 + $0x70] sm:$0xff]
  %v2285 = vld [vmem:[%s2269 + $0x78] sm:$0xff]
  %2286 = vmatpush.msra.mxu0 %v2285
  %2287 = vmatpush.msra.mxu0 %v2284
  %2288 = vmatpush.msra.mxu0 %v2283
  %2289 = vmatpush.msra.mxu0 %v2282
  %2290 = vmatpush.msra.mxu0 %v2281
  %2291 = vmatpush.msra.mxu0 %v2280
  %2292 = vmatpush.msra.mxu0 %v2279
  %2293 = vmatpush.msra.mxu0 %v2278
  %2294 = vmatpush.msra.mxu0 %v2277
  %2295 = vmatpush.msra.mxu0 %v2276
  %2296 = vmatpush.msra.mxu0 %v2275
  %2297 = vmatpush.msra.mxu0 %v2274
  %2298 = vmatpush.msra.mxu0 %v2273
  %2299 = vmatpush.msra.mxu0 %v2272
  %2300 = vmatpush.msra.mxu0 %v2271
  %2301 = vmatpush.msra.mxu0 %v2270
  %2302 = vmatmul.f32.gmra.mxu0 %v2268
  %v2303 = vpop.f32.mrf.mxu0
  %v2304 = vadd.f32 0.0, %v2303
  %2305 = vdwg.mxu0
  %v2306 = vadd.f32 %v2267, %v2304
  %v2307 = vld [vmem:[#allocation2 + $0x78] sm:$0xff]
  %s2308 = scalar_lea.vmem %s7, 1920
  %v2309 = vld [vmem:[%s2308] sm:$0xff]
  %v2310 = vld [vmem:[%s2308 + $0x8] sm:$0xff]
  %v2311 = vld [vmem:[%s2308 + $0x10] sm:$0xff]
  %v2312 = vld [vmem:[%s2308 + $0x18] sm:$0xff]
  %v2313 = vld [vmem:[%s2308 + $0x20] sm:$0xff]
  %v2314 = vld [vmem:[%s2308 + $0x28] sm:$0xff]
  %v2315 = vld [vmem:[%s2308 + $0x30] sm:$0xff]
  %v2316 = vld [vmem:[%s2308 + $0x38] sm:$0xff]
  %v2317 = vld [vmem:[%s2308 + $0x40] sm:$0xff]
  %v2318 = vld [vmem:[%s2308 + $0x48] sm:$0xff]
  %v2319 = vld [vmem:[%s2308 + $0x50] sm:$0xff]
  %v2320 = vld [vmem:[%s2308 + $0x58] sm:$0xff]
  %v2321 = vld [vmem:[%s2308 + $0x60] sm:$0xff]
  %v2322 = vld [vmem:[%s2308 + $0x68] sm:$0xff]
  %v2323 = vld [vmem:[%s2308 + $0x70] sm:$0xff]
  %v2324 = vld [vmem:[%s2308 + $0x78] sm:$0xff]
  %2325 = vmatpush.msra.mxu0 %v2324
  %2326 = vmatpush.msra.mxu0 %v2323
  %2327 = vmatpush.msra.mxu0 %v2322
  %2328 = vmatpush.msra.mxu0 %v2321
  %2329 = vmatpush.msra.mxu0 %v2320
  %2330 = vmatpush.msra.mxu0 %v2319
  %2331 = vmatpush.msra.mxu0 %v2318
  %2332 = vmatpush.msra.mxu0 %v2317
  %2333 = vmatpush.msra.mxu0 %v2316
  %2334 = vmatpush.msra.mxu0 %v2315
  %2335 = vmatpush.msra.mxu0 %v2314
  %2336 = vmatpush.msra.mxu0 %v2313
  %2337 = vmatpush.msra.mxu0 %v2312
  %2338 = vmatpush.msra.mxu0 %v2311
  %2339 = vmatpush.msra.mxu0 %v2310
  %2340 = vmatpush.msra.mxu0 %v2309
  %2341 = vmatmul.f32.gmra.mxu0 %v2307
  %v2342 = vpop.f32.mrf.mxu0
  %v2343 = vadd.f32 0.0, %v2342
  %2344 = vdwg.mxu0
  %v2345 = vadd.f32 %v2306, %v2343
  %v2346 = vld [vmem:[#allocation2 + $0x80] sm:$0xff]
  %s2347 = scalar_lea.vmem %s7, 2048
  %v2348 = vld [vmem:[%s2347] sm:$0xff]
  %v2349 = vld [vmem:[%s2347 + $0x8] sm:$0xff]
  %v2350 = vld [vmem:[%s2347 + $0x10] sm:$0xff]
  %v2351 = vld [vmem:[%s2347 + $0x18] sm:$0xff]
  %v2352 = vld [vmem:[%s2347 + $0x20] sm:$0xff]
  %v2353 = vld [vmem:[%s2347 + $0x28] sm:$0xff]
  %v2354 = vld [vmem:[%s2347 + $0x30] sm:$0xff]
  %v2355 = vld [vmem:[%s2347 + $0x38] sm:$0xff]
  %v2356 = vld [vmem:[%s2347 + $0x40] sm:$0xff]
  %v2357 = vld [vmem:[%s2347 + $0x48] sm:$0xff]
  %v2358 = vld [vmem:[%s2347 + $0x50] sm:$0xff]
  %v2359 = vld [vmem:[%s2347 + $0x58] sm:$0xff]
  %v2360 = vld [vmem:[%s2347 + $0x60] sm:$0xff]
  %v2361 = vld [vmem:[%s2347 + $0x68] sm:$0xff]
  %v2362 = vld [vmem:[%s2347 + $0x70] sm:$0xff]
  %v2363 = vld [vmem:[%s2347 + $0x78] sm:$0xff]
  %v2364 = vld [vmem:[#allocation2 + $0x88] sm:$0xff]
  %s2365 = scalar_lea.vmem %s7, 2176
  %v2366 = vld [vmem:[%s2365] sm:$0xff]
  %v2367 = vld [vmem:[%s2365 + $0x8] sm:$0xff]
  %v2368 = vld [vmem:[%s2365 + $0x10] sm:$0xff]
  %v2369 = vld [vmem:[%s2365 + $0x18] sm:$0xff]
  %v2370 = vld [vmem:[%s2365 + $0x20] sm:$0xff]
  %v2371 = vld [vmem:[%s2365 + $0x28] sm:$0xff]
  %v2372 = vld [vmem:[%s2365 + $0x30] sm:$0xff]
  %v2373 = vld [vmem:[%s2365 + $0x38] sm:$0xff]
  %v2374 = vld [vmem:[%s2365 + $0x40] sm:$0xff]
  %v2375 = vld [vmem:[%s2365 + $0x48] sm:$0xff]
  %v2376 = vld [vmem:[%s2365 + $0x50] sm:$0xff]
  %v2377 = vld [vmem:[%s2365 + $0x58] sm:$0xff]
  %v2378 = vld [vmem:[%s2365 + $0x60] sm:$0xff]
  %v2379 = vld [vmem:[%s2365 + $0x68] sm:$0xff]
  %v2380 = vld [vmem:[%s2365 + $0x70] sm:$0xff]
  %v2381 = vld [vmem:[%s2365 + $0x78] sm:$0xff]
  %2382 = vmatpush.msra.mxu0 %v2381
  %2383 = vmatpush.msra.mxu0 %v2380
  %2384 = vmatpush.msra.mxu0 %v2379
  %2385 = vmatpush.msra.mxu0 %v2378
  %2386 = vmatpush.msra.mxu0 %v2377
  %2387 = vmatpush.msra.mxu0 %v2376
  %2388 = vmatpush.msra.mxu0 %v2375
  %2389 = vmatpush.msra.mxu0 %v2374
  %2390 = vmatpush.msra.mxu0 %v2373
  %2391 = vmatpush.msra.mxu0 %v2372
  %2392 = vmatpush.msra.mxu0 %v2371
  %2393 = vmatpush.msra.mxu0 %v2370
  %2394 = vmatpush.msra.mxu0 %v2369
  %2395 = vmatpush.msra.mxu0 %v2368
  %2396 = vmatpush.msra.mxu0 %v2367
  %2397 = vmatpush.msra.mxu0 %v2366
  %2398 = vmatmul.f32.gmra.mxu0 %v2364
  %v2399 = vpop.f32.mrf.mxu0
  %v2400 = vadd.f32 0.0, %v2399
  %2401 = vdwg.mxu0
  %2402 = vmatpush.msra.mxu0 %v2363
  %2403 = vmatpush.msra.mxu0 %v2362
  %2404 = vmatpush.msra.mxu0 %v2361
  %2405 = vmatpush.msra.mxu0 %v2360
  %2406 = vmatpush.msra.mxu0 %v2359
  %2407 = vmatpush.msra.mxu0 %v2358
  %2408 = vmatpush.msra.mxu0 %v2357
  %2409 = vmatpush.msra.mxu0 %v2356
  %2410 = vmatpush.msra.mxu0 %v2355
  %2411 = vmatpush.msra.mxu0 %v2354
  %2412 = vmatpush.msra.mxu0 %v2353
  %2413 = vmatpush.msra.mxu0 %v2352
  %2414 = vmatpush.msra.mxu0 %v2351
  %2415 = vmatpush.msra.mxu0 %v2350
  %2416 = vmatpush.msra.mxu0 %v2349
  %2417 = vmatpush.msra.mxu0 %v2348
  %2418 = vmatmul.f32.gmra.mxu0 %v2346
  %v2419 = vpop.f32.mrf.mxu0
  %v2420 = vadd.f32 %v2400, %v2419
  %2421 = vdwg.mxu0
  %v2422 = vld [vmem:[#allocation2 + $0x90] sm:$0xff]
  %s2423 = scalar_lea.vmem %s7, 2304
  %v2424 = vld [vmem:[%s2423] sm:$0xff]
  %v2425 = vld [vmem:[%s2423 + $0x8] sm:$0xff]
  %v2426 = vld [vmem:[%s2423 + $0x10] sm:$0xff]
  %v2427 = vld [vmem:[%s2423 + $0x18] sm:$0xff]
  %v2428 = vld [vmem:[%s2423 + $0x20] sm:$0xff]
  %v2429 = vld [vmem:[%s2423 + $0x28] sm:$0xff]
  %v2430 = vld [vmem:[%s2423 + $0x30] sm:$0xff]
  %v2431 = vld [vmem:[%s2423 + $0x38] sm:$0xff]
  %v2432 = vld [vmem:[%s2423 + $0x40] sm:$0xff]
  %v2433 = vld [vmem:[%s2423 + $0x48] sm:$0xff]
  %v2434 = vld [vmem:[%s2423 + $0x50] sm:$0xff]
  %v2435 = vld [vmem:[%s2423 + $0x58] sm:$0xff]
  %v2436 = vld [vmem:[%s2423 + $0x60] sm:$0xff]
  %v2437 = vld [vmem:[%s2423 + $0x68] sm:$0xff]
  %v2438 = vld [vmem:[%s2423 + $0x70] sm:$0xff]
  %v2439 = vld [vmem:[%s2423 + $0x78] sm:$0xff]
  %2440 = vmatpush.msra.mxu0 %v2439
  %2441 = vmatpush.msra.mxu0 %v2438
  %2442 = vmatpush.msra.mxu0 %v2437
  %2443 = vmatpush.msra.mxu0 %v2436
  %2444 = vmatpush.msra.mxu0 %v2435
  %2445 = vmatpush.msra.mxu0 %v2434
  %2446 = vmatpush.msra.mxu0 %v2433
  %2447 = vmatpush.msra.mxu0 %v2432
  %2448 = vmatpush.msra.mxu0 %v2431
  %2449 = vmatpush.msra.mxu0 %v2430
  %2450 = vmatpush.msra.mxu0 %v2429
  %2451 = vmatpush.msra.mxu0 %v2428
  %2452 = vmatpush.msra.mxu0 %v2427
  %2453 = vmatpush.msra.mxu0 %v2426
  %2454 = vmatpush.msra.mxu0 %v2425
  %2455 = vmatpush.msra.mxu0 %v2424
  %2456 = vmatmul.f32.gmra.mxu0 %v2422
  %v2457 = vpop.f32.mrf.mxu0
  %v2458 = vadd.f32 0.0, %v2457
  %2459 = vdwg.mxu0
  %v2460 = vadd.f32 %v2420, %v2458
  %v2461 = vld [vmem:[#allocation2 + $0x98] sm:$0xff]
  %s2462 = scalar_lea.vmem %s7, 2432
  %v2463 = vld [vmem:[%s2462] sm:$0xff]
  %v2464 = vld [vmem:[%s2462 + $0x8] sm:$0xff]
  %v2465 = vld [vmem:[%s2462 + $0x10] sm:$0xff]
  %v2466 = vld [vmem:[%s2462 + $0x18] sm:$0xff]
  %v2467 = vld [vmem:[%s2462 + $0x20] sm:$0xff]
  %v2468 = vld [vmem:[%s2462 + $0x28] sm:$0xff]
  %v2469 = vld [vmem:[%s2462 + $0x30] sm:$0xff]
  %v2470 = vld [vmem:[%s2462 + $0x38] sm:$0xff]
  %v2471 = vld [vmem:[%s2462 + $0x40] sm:$0xff]
  %v2472 = vld [vmem:[%s2462 + $0x48] sm:$0xff]
  %v2473 = vld [vmem:[%s2462 + $0x50] sm:$0xff]
  %v2474 = vld [vmem:[%s2462 + $0x58] sm:$0xff]
  %v2475 = vld [vmem:[%s2462 + $0x60] sm:$0xff]
  %v2476 = vld [vmem:[%s2462 + $0x68] sm:$0xff]
  %v2477 = vld [vmem:[%s2462 + $0x70] sm:$0xff]
  %v2478 = vld [vmem:[%s2462 + $0x78] sm:$0xff]
  %2479 = vmatpush.msra.mxu0 %v2478
  %2480 = vmatpush.msra.mxu0 %v2477
  %2481 = vmatpush.msra.mxu0 %v2476
  %2482 = vmatpush.msra.mxu0 %v2475
  %2483 = vmatpush.msra.mxu0 %v2474
  %2484 = vmatpush.msra.mxu0 %v2473
  %2485 = vmatpush.msra.mxu0 %v2472
  %2486 = vmatpush.msra.mxu0 %v2471
  %2487 = vmatpush.msra.mxu0 %v2470
  %2488 = vmatpush.msra.mxu0 %v2469
  %2489 = vmatpush.msra.mxu0 %v2468
  %2490 = vmatpush.msra.mxu0 %v2467
  %2491 = vmatpush.msra.mxu0 %v2466
  %2492 = vmatpush.msra.mxu0 %v2465
  %2493 = vmatpush.msra.mxu0 %v2464
  %2494 = vmatpush.msra.mxu0 %v2463
  %2495 = vmatmul.f32.gmra.mxu0 %v2461
  %v2496 = vpop.f32.mrf.mxu0
  %v2497 = vadd.f32 0.0, %v2496
  %2498 = vdwg.mxu0
  %v2499 = vadd.f32 %v2460, %v2497
  %v2500 = vld [vmem:[#allocation2 + $0xa0] sm:$0xff]
  %s2501 = scalar_lea.vmem %s7, 2560
  %v2502 = vld [vmem:[%s2501] sm:$0xff]
  %v2503 = vld [vmem:[%s2501 + $0x8] sm:$0xff]
  %v2504 = vld [vmem:[%s2501 + $0x10] sm:$0xff]
  %v2505 = vld [vmem:[%s2501 + $0x18] sm:$0xff]
  %v2506 = vld [vmem:[%s2501 + $0x20] sm:$0xff]
  %v2507 = vld [vmem:[%s2501 + $0x28] sm:$0xff]
  %v2508 = vld [vmem:[%s2501 + $0x30] sm:$0xff]
  %v2509 = vld [vmem:[%s2501 + $0x38] sm:$0xff]
  %v2510 = vld [vmem:[%s2501 + $0x40] sm:$0xff]
  %v2511 = vld [vmem:[%s2501 + $0x48] sm:$0xff]
  %v2512 = vld [vmem:[%s2501 + $0x50] sm:$0xff]
  %v2513 = vld [vmem:[%s2501 + $0x58] sm:$0xff]
  %v2514 = vld [vmem:[%s2501 + $0x60] sm:$0xff]
  %v2515 = vld [vmem:[%s2501 + $0x68] sm:$0xff]
  %v2516 = vld [vmem:[%s2501 + $0x70] sm:$0xff]
  %v2517 = vld [vmem:[%s2501 + $0x78] sm:$0xff]
  %2518 = vmatpush.msra.mxu0 %v2517
  %2519 = vmatpush.msra.mxu0 %v2516
  %2520 = vmatpush.msra.mxu0 %v2515
  %2521 = vmatpush.msra.mxu0 %v2514
  %2522 = vmatpush.msra.mxu0 %v2513
  %2523 = vmatpush.msra.mxu0 %v2512
  %2524 = vmatpush.msra.mxu0 %v2511
  %2525 = vmatpush.msra.mxu0 %v2510
  %2526 = vmatpush.msra.mxu0 %v2509
  %2527 = vmatpush.msra.mxu0 %v2508
  %2528 = vmatpush.msra.mxu0 %v2507
  %2529 = vmatpush.msra.mxu0 %v2506
  %2530 = vmatpush.msra.mxu0 %v2505
  %2531 = vmatpush.msra.mxu0 %v2504
  %2532 = vmatpush.msra.mxu0 %v2503
  %2533 = vmatpush.msra.mxu0 %v2502
  %2534 = vmatmul.f32.gmra.mxu0 %v2500
  %v2535 = vpop.f32.mrf.mxu0
  %v2536 = vadd.f32 0.0, %v2535
  %2537 = vdwg.mxu0
  %v2538 = vadd.f32 %v2499, %v2536
  %v2539 = vld [vmem:[#allocation2 + $0xa8] sm:$0xff]
  %s2540 = scalar_lea.vmem %s7, 2688
  %v2541 = vld [vmem:[%s2540] sm:$0xff]
  %v2542 = vld [vmem:[%s2540 + $0x8] sm:$0xff]
  %v2543 = vld [vmem:[%s2540 + $0x10] sm:$0xff]
  %v2544 = vld [vmem:[%s2540 + $0x18] sm:$0xff]
  %v2545 = vld [vmem:[%s2540 + $0x20] sm:$0xff]
  %v2546 = vld [vmem:[%s2540 + $0x28] sm:$0xff]
  %v2547 = vld [vmem:[%s2540 + $0x30] sm:$0xff]
  %v2548 = vld [vmem:[%s2540 + $0x38] sm:$0xff]
  %v2549 = vld [vmem:[%s2540 + $0x40] sm:$0xff]
  %v2550 = vld [vmem:[%s2540 + $0x48] sm:$0xff]
  %v2551 = vld [vmem:[%s2540 + $0x50] sm:$0xff]
  %v2552 = vld [vmem:[%s2540 + $0x58] sm:$0xff]
  %v2553 = vld [vmem:[%s2540 + $0x60] sm:$0xff]
  %v2554 = vld [vmem:[%s2540 + $0x68] sm:$0xff]
  %v2555 = vld [vmem:[%s2540 + $0x70] sm:$0xff]
  %v2556 = vld [vmem:[%s2540 + $0x78] sm:$0xff]
  %2557 = vmatpush.msra.mxu0 %v2556
  %2558 = vmatpush.msra.mxu0 %v2555
  %2559 = vmatpush.msra.mxu0 %v2554
  %2560 = vmatpush.msra.mxu0 %v2553
  %2561 = vmatpush.msra.mxu0 %v2552
  %2562 = vmatpush.msra.mxu0 %v2551
  %2563 = vmatpush.msra.mxu0 %v2550
  %2564 = vmatpush.msra.mxu0 %v2549
  %2565 = vmatpush.msra.mxu0 %v2548
  %2566 = vmatpush.msra.mxu0 %v2547
  %2567 = vmatpush.msra.mxu0 %v2546
  %2568 = vmatpush.msra.mxu0 %v2545
  %2569 = vmatpush.msra.mxu0 %v2544
  %2570 = vmatpush.msra.mxu0 %v2543
  %2571 = vmatpush.msra.mxu0 %v2542
  %2572 = vmatpush.msra.mxu0 %v2541
  %2573 = vmatmul.f32.gmra.mxu0 %v2539
  %v2574 = vpop.f32.mrf.mxu0
  %v2575 = vadd.f32 0.0, %v2574
  %2576 = vdwg.mxu0
  %v2577 = vadd.f32 %v2538, %v2575
  %v2578 = vld [vmem:[#allocation2 + $0xb0] sm:$0xff]
  %s2579 = scalar_lea.vmem %s7, 2816
  %v2580 = vld [vmem:[%s2579] sm:$0xff]
  %v2581 = vld [vmem:[%s2579 + $0x8] sm:$0xff]
  %v2582 = vld [vmem:[%s2579 + $0x10] sm:$0xff]
  %v2583 = vld [vmem:[%s2579 + $0x18] sm:$0xff]
  %v2584 = vld [vmem:[%s2579 + $0x20] sm:$0xff]
  %v2585 = vld [vmem:[%s2579 + $0x28] sm:$0xff]
  %v2586 = vld [vmem:[%s2579 + $0x30] sm:$0xff]
  %v2587 = vld [vmem:[%s2579 + $0x38] sm:$0xff]
  %v2588 = vld [vmem:[%s2579 + $0x40] sm:$0xff]
  %v2589 = vld [vmem:[%s2579 + $0x48] sm:$0xff]
  %v2590 = vld [vmem:[%s2579 + $0x50] sm:$0xff]
  %v2591 = vld [vmem:[%s2579 + $0x58] sm:$0xff]
  %v2592 = vld [vmem:[%s2579 + $0x60] sm:$0xff]
  %v2593 = vld [vmem:[%s2579 + $0x68] sm:$0xff]
  %v2594 = vld [vmem:[%s2579 + $0x70] sm:$0xff]
  %v2595 = vld [vmem:[%s2579 + $0x78] sm:$0xff]
  %2596 = vmatpush.msra.mxu0 %v2595
  %2597 = vmatpush.msra.mxu0 %v2594
  %2598 = vmatpush.msra.mxu0 %v2593
  %2599 = vmatpush.msra.mxu0 %v2592
  %2600 = vmatpush.msra.mxu0 %v2591
  %2601 = vmatpush.msra.mxu0 %v2590
  %2602 = vmatpush.msra.mxu0 %v2589
  %2603 = vmatpush.msra.mxu0 %v2588
  %2604 = vmatpush.msra.mxu0 %v2587
  %2605 = vmatpush.msra.mxu0 %v2586
  %2606 = vmatpush.msra.mxu0 %v2585
  %2607 = vmatpush.msra.mxu0 %v2584
  %2608 = vmatpush.msra.mxu0 %v2583
  %2609 = vmatpush.msra.mxu0 %v2582
  %2610 = vmatpush.msra.mxu0 %v2581
  %2611 = vmatpush.msra.mxu0 %v2580
  %2612 = vmatmul.f32.gmra.mxu0 %v2578
  %v2613 = vpop.f32.mrf.mxu0
  %v2614 = vadd.f32 0.0, %v2613
  %2615 = vdwg.mxu0
  %v2616 = vadd.f32 %v2577, %v2614
  %v2617 = vld [vmem:[#allocation2 + $0xb8] sm:$0xff]
  %s2618 = scalar_lea.vmem %s7, 2944
  %v2619 = vld [vmem:[%s2618] sm:$0xff]
  %v2620 = vld [vmem:[%s2618 + $0x8] sm:$0xff]
  %v2621 = vld [vmem:[%s2618 + $0x10] sm:$0xff]
  %v2622 = vld [vmem:[%s2618 + $0x18] sm:$0xff]
  %v2623 = vld [vmem:[%s2618 + $0x20] sm:$0xff]
  %v2624 = vld [vmem:[%s2618 + $0x28] sm:$0xff]
  %v2625 = vld [vmem:[%s2618 + $0x30] sm:$0xff]
  %v2626 = vld [vmem:[%s2618 + $0x38] sm:$0xff]
  %v2627 = vld [vmem:[%s2618 + $0x40] sm:$0xff]
  %v2628 = vld [vmem:[%s2618 + $0x48] sm:$0xff]
  %v2629 = vld [vmem:[%s2618 + $0x50] sm:$0xff]
  %v2630 = vld [vmem:[%s2618 + $0x58] sm:$0xff]
  %v2631 = vld [vmem:[%s2618 + $0x60] sm:$0xff]
  %v2632 = vld [vmem:[%s2618 + $0x68] sm:$0xff]
  %v2633 = vld [vmem:[%s2618 + $0x70] sm:$0xff]
  %v2634 = vld [vmem:[%s2618 + $0x78] sm:$0xff]
  %2635 = vmatpush.msra.mxu0 %v2634
  %2636 = vmatpush.msra.mxu0 %v2633
  %2637 = vmatpush.msra.mxu0 %v2632
  %2638 = vmatpush.msra.mxu0 %v2631
  %2639 = vmatpush.msra.mxu0 %v2630
  %2640 = vmatpush.msra.mxu0 %v2629
  %2641 = vmatpush.msra.mxu0 %v2628
  %2642 = vmatpush.msra.mxu0 %v2627
  %2643 = vmatpush.msra.mxu0 %v2626
  %2644 = vmatpush.msra.mxu0 %v2625
  %2645 = vmatpush.msra.mxu0 %v2624
  %2646 = vmatpush.msra.mxu0 %v2623
  %2647 = vmatpush.msra.mxu0 %v2622
  %2648 = vmatpush.msra.mxu0 %v2621
  %2649 = vmatpush.msra.mxu0 %v2620
  %2650 = vmatpush.msra.mxu0 %v2619
  %2651 = vmatmul.f32.gmra.mxu0 %v2617
  %v2652 = vpop.f32.mrf.mxu0
  %v2653 = vadd.f32 0.0, %v2652
  %2654 = vdwg.mxu0
  %v2655 = vadd.f32 %v2616, %v2653
  %v2656 = vld [vmem:[#allocation2 + $0xc0] sm:$0xff]
  %s2657 = scalar_lea.vmem %s7, 3072
  %v2658 = vld [vmem:[%s2657] sm:$0xff]
  %v2659 = vld [vmem:[%s2657 + $0x8] sm:$0xff]
  %v2660 = vld [vmem:[%s2657 + $0x10] sm:$0xff]
  %v2661 = vld [vmem:[%s2657 + $0x18] sm:$0xff]
  %v2662 = vld [vmem:[%s2657 + $0x20] sm:$0xff]
  %v2663 = vld [vmem:[%s2657 + $0x28] sm:$0xff]
  %v2664 = vld [vmem:[%s2657 + $0x30] sm:$0xff]
  %v2665 = vld [vmem:[%s2657 + $0x38] sm:$0xff]
  %v2666 = vld [vmem:[%s2657 + $0x40] sm:$0xff]
  %v2667 = vld [vmem:[%s2657 + $0x48] sm:$0xff]
  %v2668 = vld [vmem:[%s2657 + $0x50] sm:$0xff]
  %v2669 = vld [vmem:[%s2657 + $0x58] sm:$0xff]
  %v2670 = vld [vmem:[%s2657 + $0x60] sm:$0xff]
  %v2671 = vld [vmem:[%s2657 + $0x68] sm:$0xff]
  %v2672 = vld [vmem:[%s2657 + $0x70] sm:$0xff]
  %v2673 = vld [vmem:[%s2657 + $0x78] sm:$0xff]
  %v2674 = vld [vmem:[#allocation2 + $0xc8] sm:$0xff]
  %s2675 = scalar_lea.vmem %s7, 3200
  %v2676 = vld [vmem:[%s2675] sm:$0xff]
  %v2677 = vld [vmem:[%s2675 + $0x8] sm:$0xff]
  %v2678 = vld [vmem:[%s2675 + $0x10] sm:$0xff]
  %v2679 = vld [vmem:[%s2675 + $0x18] sm:$0xff]
  %v2680 = vld [vmem:[%s2675 + $0x20] sm:$0xff]
  %v2681 = vld [vmem:[%s2675 + $0x28] sm:$0xff]
  %v2682 = vld [vmem:[%s2675 + $0x30] sm:$0xff]
  %v2683 = vld [vmem:[%s2675 + $0x38] sm:$0xff]
  %v2684 = vld [vmem:[%s2675 + $0x40] sm:$0xff]
  %v2685 = vld [vmem:[%s2675 + $0x48] sm:$0xff]
  %v2686 = vld [vmem:[%s2675 + $0x50] sm:$0xff]
  %v2687 = vld [vmem:[%s2675 + $0x58] sm:$0xff]
  %v2688 = vld [vmem:[%s2675 + $0x60] sm:$0xff]
  %v2689 = vld [vmem:[%s2675 + $0x68] sm:$0xff]
  %v2690 = vld [vmem:[%s2675 + $0x70] sm:$0xff]
  %v2691 = vld [vmem:[%s2675 + $0x78] sm:$0xff]
  %2692 = vmatpush.msra.mxu0 %v2691
  %2693 = vmatpush.msra.mxu0 %v2690
  %2694 = vmatpush.msra.mxu0 %v2689
  %2695 = vmatpush.msra.mxu0 %v2688
  %2696 = vmatpush.msra.mxu0 %v2687
  %2697 = vmatpush.msra.mxu0 %v2686
  %2698 = vmatpush.msra.mxu0 %v2685
  %2699 = vmatpush.msra.mxu0 %v2684
  %2700 = vmatpush.msra.mxu0 %v2683
  %2701 = vmatpush.msra.mxu0 %v2682
  %2702 = vmatpush.msra.mxu0 %v2681
  %2703 = vmatpush.msra.mxu0 %v2680
  %2704 = vmatpush.msra.mxu0 %v2679
  %2705 = vmatpush.msra.mxu0 %v2678
  %2706 = vmatpush.msra.mxu0 %v2677
  %2707 = vmatpush.msra.mxu0 %v2676
  %2708 = vmatmul.f32.gmra.mxu0 %v2674
  %v2709 = vpop.f32.mrf.mxu0
  %v2710 = vadd.f32 0.0, %v2709
  %2711 = vdwg.mxu0
  %2712 = vmatpush.msra.mxu0 %v2673
  %2713 = vmatpush.msra.mxu0 %v2672
  %2714 = vmatpush.msra.mxu0 %v2671
  %2715 = vmatpush.msra.mxu0 %v2670
  %2716 = vmatpush.msra.mxu0 %v2669
  %2717 = vmatpush.msra.mxu0 %v2668
  %2718 = vmatpush.msra.mxu0 %v2667
  %2719 = vmatpush.msra.mxu0 %v2666
  %2720 = vmatpush.msra.mxu0 %v2665
  %2721 = vmatpush.msra.mxu0 %v2664
  %2722 = vmatpush.msra.mxu0 %v2663
  %2723 = vmatpush.msra.mxu0 %v2662
  %2724 = vmatpush.msra.mxu0 %v2661
  %2725 = vmatpush.msra.mxu0 %v2660
  %2726 = vmatpush.msra.mxu0 %v2659
  %2727 = vmatpush.msra.mxu0 %v2658
  %2728 = vmatmul.f32.gmra.mxu0 %v2656
  %v2729 = vpop.f32.mrf.mxu0
  %v2730 = vadd.f32 %v2710, %v2729
  %2731 = vdwg.mxu0
  %v2732 = vld [vmem:[#allocation2 + $0xd0] sm:$0xff]
  %s2733 = scalar_lea.vmem %s7, 3328
  %v2734 = vld [vmem:[%s2733] sm:$0xff]
  %v2735 = vld [vmem:[%s2733 + $0x8] sm:$0xff]
  %v2736 = vld [vmem:[%s2733 + $0x10] sm:$0xff]
  %v2737 = vld [vmem:[%s2733 + $0x18] sm:$0xff]
  %v2738 = vld [vmem:[%s2733 + $0x20] sm:$0xff]
  %v2739 = vld [vmem:[%s2733 + $0x28] sm:$0xff]
  %v2740 = vld [vmem:[%s2733 + $0x30] sm:$0xff]
  %v2741 = vld [vmem:[%s2733 + $0x38] sm:$0xff]
  %v2742 = vld [vmem:[%s2733 + $0x40] sm:$0xff]
  %v2743 = vld [vmem:[%s2733 + $0x48] sm:$0xff]
  %v2744 = vld [vmem:[%s2733 + $0x50] sm:$0xff]
  %v2745 = vld [vmem:[%s2733 + $0x58] sm:$0xff]
  %v2746 = vld [vmem:[%s2733 + $0x60] sm:$0xff]
  %v2747 = vld [vmem:[%s2733 + $0x68] sm:$0xff]
  %v2748 = vld [vmem:[%s2733 + $0x70] sm:$0xff]
  %v2749 = vld [vmem:[%s2733 + $0x78] sm:$0xff]
  %2750 = vmatpush.msra.mxu0 %v2749
  %2751 = vmatpush.msra.mxu0 %v2748
  %2752 = vmatpush.msra.mxu0 %v2747
  %2753 = vmatpush.msra.mxu0 %v2746
  %2754 = vmatpush.msra.mxu0 %v2745
  %2755 = vmatpush.msra.mxu0 %v2744
  %2756 = vmatpush.msra.mxu0 %v2743
  %2757 = vmatpush.msra.mxu0 %v2742
  %2758 = vmatpush.msra.mxu0 %v2741
  %2759 = vmatpush.msra.mxu0 %v2740
  %2760 = vmatpush.msra.mxu0 %v2739
  %2761 = vmatpush.msra.mxu0 %v2738
  %2762 = vmatpush.msra.mxu0 %v2737
  %2763 = vmatpush.msra.mxu0 %v2736
  %2764 = vmatpush.msra.mxu0 %v2735
  %2765 = vmatpush.msra.mxu0 %v2734
  %2766 = vmatmul.f32.gmra.mxu0 %v2732
  %v2767 = vpop.f32.mrf.mxu0
  %v2768 = vadd.f32 0.0, %v2767
  %2769 = vdwg.mxu0
  %v2770 = vadd.f32 %v2730, %v2768
  %v2771 = vld [vmem:[#allocation2 + $0xd8] sm:$0xff]
  %s2772 = scalar_lea.vmem %s7, 3456
  %v2773 = vld [vmem:[%s2772] sm:$0xff]
  %v2774 = vld [vmem:[%s2772 + $0x8] sm:$0xff]
  %v2775 = vld [vmem:[%s2772 + $0x10] sm:$0xff]
  %v2776 = vld [vmem:[%s2772 + $0x18] sm:$0xff]
  %v2777 = vld [vmem:[%s2772 + $0x20] sm:$0xff]
  %v2778 = vld [vmem:[%s2772 + $0x28] sm:$0xff]
  %v2779 = vld [vmem:[%s2772 + $0x30] sm:$0xff]
  %v2780 = vld [vmem:[%s2772 + $0x38] sm:$0xff]
  %v2781 = vld [vmem:[%s2772 + $0x40] sm:$0xff]
  %v2782 = vld [vmem:[%s2772 + $0x48] sm:$0xff]
  %v2783 = vld [vmem:[%s2772 + $0x50] sm:$0xff]
  %v2784 = vld [vmem:[%s2772 + $0x58] sm:$0xff]
  %v2785 = vld [vmem:[%s2772 + $0x60] sm:$0xff]
  %v2786 = vld [vmem:[%s2772 + $0x68] sm:$0xff]
  %v2787 = vld [vmem:[%s2772 + $0x70] sm:$0xff]
  %v2788 = vld [vmem:[%s2772 + $0x78] sm:$0xff]
  %2789 = vmatpush.msra.mxu0 %v2788
  %2790 = vmatpush.msra.mxu0 %v2787
  %2791 = vmatpush.msra.mxu0 %v2786
  %2792 = vmatpush.msra.mxu0 %v2785
  %2793 = vmatpush.msra.mxu0 %v2784
  %2794 = vmatpush.msra.mxu0 %v2783
  %2795 = vmatpush.msra.mxu0 %v2782
  %2796 = vmatpush.msra.mxu0 %v2781
  %2797 = vmatpush.msra.mxu0 %v2780
  %2798 = vmatpush.msra.mxu0 %v2779
  %2799 = vmatpush.msra.mxu0 %v2778
  %2800 = vmatpush.msra.mxu0 %v2777
  %2801 = vmatpush.msra.mxu0 %v2776
  %2802 = vmatpush.msra.mxu0 %v2775
  %2803 = vmatpush.msra.mxu0 %v2774
  %2804 = vmatpush.msra.mxu0 %v2773
  %2805 = vmatmul.f32.gmra.mxu0 %v2771
  %v2806 = vpop.f32.mrf.mxu0
  %v2807 = vadd.f32 0.0, %v2806
  %2808 = vdwg.mxu0
  %v2809 = vadd.f32 %v2770, %v2807
  %v2810 = vld [vmem:[#allocation2 + $0xe0] sm:$0xff]
  %s2811 = scalar_lea.vmem %s7, 3584
  %v2812 = vld [vmem:[%s2811] sm:$0xff]
  %v2813 = vld [vmem:[%s2811 + $0x8] sm:$0xff]
  %v2814 = vld [vmem:[%s2811 + $0x10] sm:$0xff]
  %v2815 = vld [vmem:[%s2811 + $0x18] sm:$0xff]
  %v2816 = vld [vmem:[%s2811 + $0x20] sm:$0xff]
  %v2817 = vld [vmem:[%s2811 + $0x28] sm:$0xff]
  %v2818 = vld [vmem:[%s2811 + $0x30] sm:$0xff]
  %v2819 = vld [vmem:[%s2811 + $0x38] sm:$0xff]
  %v2820 = vld [vmem:[%s2811 + $0x40] sm:$0xff]
  %v2821 = vld [vmem:[%s2811 + $0x48] sm:$0xff]
  %v2822 = vld [vmem:[%s2811 + $0x50] sm:$0xff]
  %v2823 = vld [vmem:[%s2811 + $0x58] sm:$0xff]
  %v2824 = vld [vmem:[%s2811 + $0x60] sm:$0xff]
  %v2825 = vld [vmem:[%s2811 + $0x68] sm:$0xff]
  %v2826 = vld [vmem:[%s2811 + $0x70] sm:$0xff]
  %v2827 = vld [vmem:[%s2811 + $0x78] sm:$0xff]
  %2828 = vmatpush.msra.mxu0 %v2827
  %2829 = vmatpush.msra.mxu0 %v2826
  %2830 = vmatpush.msra.mxu0 %v2825
  %2831 = vmatpush.msra.mxu0 %v2824
  %2832 = vmatpush.msra.mxu0 %v2823
  %2833 = vmatpush.msra.mxu0 %v2822
  %2834 = vmatpush.msra.mxu0 %v2821
  %2835 = vmatpush.msra.mxu0 %v2820
  %2836 = vmatpush.msra.mxu0 %v2819
  %2837 = vmatpush.msra.mxu0 %v2818
  %2838 = vmatpush.msra.mxu0 %v2817
  %2839 = vmatpush.msra.mxu0 %v2816
  %2840 = vmatpush.msra.mxu0 %v2815
  %2841 = vmatpush.msra.mxu0 %v2814
  %2842 = vmatpush.msra.mxu0 %v2813
  %2843 = vmatpush.msra.mxu0 %v2812
  %2844 = vmatmul.f32.gmra.mxu0 %v2810
  %v2845 = vpop.f32.mrf.mxu0
  %v2846 = vadd.f32 0.0, %v2845
  %2847 = vdwg.mxu0
  %v2848 = vadd.f32 %v2809, %v2846
  %v2849 = vld [vmem:[#allocation2 + $0xe8] sm:$0xff]
  %s2850 = scalar_lea.vmem %s7, 3712
  %v2851 = vld [vmem:[%s2850] sm:$0xff]
  %v2852 = vld [vmem:[%s2850 + $0x8] sm:$0xff]
  %v2853 = vld [vmem:[%s2850 + $0x10] sm:$0xff]
  %v2854 = vld [vmem:[%s2850 + $0x18] sm:$0xff]
  %v2855 = vld [vmem:[%s2850 + $0x20] sm:$0xff]
  %v2856 = vld [vmem:[%s2850 + $0x28] sm:$0xff]
  %v2857 = vld [vmem:[%s2850 + $0x30] sm:$0xff]
  %v2858 = vld [vmem:[%s2850 + $0x38] sm:$0xff]
  %v2859 = vld [vmem:[%s2850 + $0x40] sm:$0xff]
  %v2860 = vld [vmem:[%s2850 + $0x48] sm:$0xff]
  %v2861 = vld [vmem:[%s2850 + $0x50] sm:$0xff]
  %v2862 = vld [vmem:[%s2850 + $0x58] sm:$0xff]
  %v2863 = vld [vmem:[%s2850 + $0x60] sm:$0xff]
  %v2864 = vld [vmem:[%s2850 + $0x68] sm:$0xff]
  %v2865 = vld [vmem:[%s2850 + $0x70] sm:$0xff]
  %v2866 = vld [vmem:[%s2850 + $0x78] sm:$0xff]
  %2867 = vmatpush.msra.mxu0 %v2866
  %2868 = vmatpush.msra.mxu0 %v2865
  %2869 = vmatpush.msra.mxu0 %v2864
  %2870 = vmatpush.msra.mxu0 %v2863
  %2871 = vmatpush.msra.mxu0 %v2862
  %2872 = vmatpush.msra.mxu0 %v2861
  %2873 = vmatpush.msra.mxu0 %v2860
  %2874 = vmatpush.msra.mxu0 %v2859
  %2875 = vmatpush.msra.mxu0 %v2858
  %2876 = vmatpush.msra.mxu0 %v2857
  %2877 = vmatpush.msra.mxu0 %v2856
  %2878 = vmatpush.msra.mxu0 %v2855
  %2879 = vmatpush.msra.mxu0 %v2854
  %2880 = vmatpush.msra.mxu0 %v2853
  %2881 = vmatpush.msra.mxu0 %v2852
  %2882 = vmatpush.msra.mxu0 %v2851
  %2883 = vmatmul.f32.gmra.mxu0 %v2849
  %v2884 = vpop.f32.mrf.mxu0
  %v2885 = vadd.f32 0.0, %v2884
  %2886 = vdwg.mxu0
  %v2887 = vadd.f32 %v2848, %v2885
  %v2888 = vld [vmem:[#allocation2 + $0xf0] sm:$0xff]
  %s2889 = scalar_lea.vmem %s7, 3840
  %v2890 = vld [vmem:[%s2889] sm:$0xff]
  %v2891 = vld [vmem:[%s2889 + $0x8] sm:$0xff]
  %v2892 = vld [vmem:[%s2889 + $0x10] sm:$0xff]
  %v2893 = vld [vmem:[%s2889 + $0x18] sm:$0xff]
  %v2894 = vld [vmem:[%s2889 + $0x20] sm:$0xff]
  %v2895 = vld [vmem:[%s2889 + $0x28] sm:$0xff]
  %v2896 = vld [vmem:[%s2889 + $0x30] sm:$0xff]
  %v2897 = vld [vmem:[%s2889 + $0x38] sm:$0xff]
  %v2898 = vld [vmem:[%s2889 + $0x40] sm:$0xff]
  %v2899 = vld [vmem:[%s2889 + $0x48] sm:$0xff]
  %v2900 = vld [vmem:[%s2889 + $0x50] sm:$0xff]
  %v2901 = vld [vmem:[%s2889 + $0x58] sm:$0xff]
  %v2902 = vld [vmem:[%s2889 + $0x60] sm:$0xff]
  %v2903 = vld [vmem:[%s2889 + $0x68] sm:$0xff]
  %v2904 = vld [vmem:[%s2889 + $0x70] sm:$0xff]
  %v2905 = vld [vmem:[%s2889 + $0x78] sm:$0xff]
  %2906 = vmatpush.msra.mxu0 %v2905
  %2907 = vmatpush.msra.mxu0 %v2904
  %2908 = vmatpush.msra.mxu0 %v2903
  %2909 = vmatpush.msra.mxu0 %v2902
  %2910 = vmatpush.msra.mxu0 %v2901
  %2911 = vmatpush.msra.mxu0 %v2900
  %2912 = vmatpush.msra.mxu0 %v2899
  %2913 = vmatpush.msra.mxu0 %v2898
  %2914 = vmatpush.msra.mxu0 %v2897
  %2915 = vmatpush.msra.mxu0 %v2896
  %2916 = vmatpush.msra.mxu0 %v2895
  %2917 = vmatpush.msra.mxu0 %v2894
  %2918 = vmatpush.msra.mxu0 %v2893
  %2919 = vmatpush.msra.mxu0 %v2892
  %2920 = vmatpush.msra.mxu0 %v2891
  %2921 = vmatpush.msra.mxu0 %v2890
  %2922 = vmatmul.f32.gmra.mxu0 %v2888
  %v2923 = vpop.f32.mrf.mxu0
  %v2924 = vadd.f32 0.0, %v2923
  %2925 = vdwg.mxu0
  %v2926 = vadd.f32 %v2887, %v2924
  %v2927 = vld [vmem:[#allocation2 + $0xf8] sm:$0xff]
  %s2928 = scalar_lea.vmem %s7, 3968
  %v2929 = vld [vmem:[%s2928] sm:$0xff]
  %v2930 = vld [vmem:[%s2928 + $0x8] sm:$0xff]
  %v2931 = vld [vmem:[%s2928 + $0x10] sm:$0xff]
  %v2932 = vld [vmem:[%s2928 + $0x18] sm:$0xff]
  %v2933 = vld [vmem:[%s2928 + $0x20] sm:$0xff]
  %v2934 = vld [vmem:[%s2928 + $0x28] sm:$0xff]
  %v2935 = vld [vmem:[%s2928 + $0x30] sm:$0xff]
  %v2936 = vld [vmem:[%s2928 + $0x38] sm:$0xff]
  %v2937 = vld [vmem:[%s2928 + $0x40] sm:$0xff]
  %v2938 = vld [vmem:[%s2928 + $0x48] sm:$0xff]
  %v2939 = vld [vmem:[%s2928 + $0x50] sm:$0xff]
  %v2940 = vld [vmem:[%s2928 + $0x58] sm:$0xff]
  %v2941 = vld [vmem:[%s2928 + $0x60] sm:$0xff]
  %v2942 = vld [vmem:[%s2928 + $0x68] sm:$0xff]
  %v2943 = vld [vmem:[%s2928 + $0x70] sm:$0xff]
  %v2944 = vld [vmem:[%s2928 + $0x78] sm:$0xff]
  %2945 = vmatpush.msra.mxu0 %v2944
  %2946 = vmatpush.msra.mxu0 %v2943
  %2947 = vmatpush.msra.mxu0 %v2942
  %2948 = vmatpush.msra.mxu0 %v2941
  %2949 = vmatpush.msra.mxu0 %v2940
  %2950 = vmatpush.msra.mxu0 %v2939
  %2951 = vmatpush.msra.mxu0 %v2938
  %2952 = vmatpush.msra.mxu0 %v2937
  %2953 = vmatpush.msra.mxu0 %v2936
  %2954 = vmatpush.msra.mxu0 %v2935
  %2955 = vmatpush.msra.mxu0 %v2934
  %2956 = vmatpush.msra.mxu0 %v2933
  %2957 = vmatpush.msra.mxu0 %v2932
  %2958 = vmatpush.msra.mxu0 %v2931
  %2959 = vmatpush.msra.mxu0 %v2930
  %2960 = vmatpush.msra.mxu0 %v2929
  %2961 = vmatmul.f32.gmra.mxu0 %v2927
  %v2962 = vpop.f32.mrf.mxu0
  %v2963 = vadd.f32 0.0, %v2962
  %2964 = vdwg.mxu0
  %v2965 = vadd.f32 %v2926, %v2963
  %v2966 = vadd.f32 %v2035, %v2345
  %v2967 = vadd.f32 %v2966, %v2655
  %v2968 = vadd.f32 %v2967, %v2965
  %v2969 = vld [vmem:[%s8] sm:$0x1]
  %v2971 = vperm.slane %v2969, 0
  %v2973 = vadd.f32 %v2968, %v2971
  %v2974 = vmax.f32 %v2973, 0.0
  %v2975 = vld [vmem:[%s9] sm:$0xff]
  %v2976 = vld [vmem:[%s9 + $0x8] sm:$0xff]
  %v2977 = vld [vmem:[%s9 + $0x10] sm:$0xff]
  %v2978 = vld [vmem:[%s9 + $0x18] sm:$0xff]
  %v2979 = vld [vmem:[%s9 + $0x20] sm:$0xff]
  %v2980 = vld [vmem:[%s10] sm:$0x1]
  %v2982 = vperm.slane %v2980, 0
  %vm2984 = vcmask 326656
  %v2986 = vsel %vm2984, %v2974, 0
  %2988 = vmatpush.msra.mxu0 0.0
  %2989 = vmatpush.msra.mxu0 0.0
  %2990 = vmatpush.msra.mxu0 0.0
  %2991 = vmatpush.msra.mxu0 0.0
  %2992 = vmatpush.msra.mxu0 0.0
  %2993 = vmatpush.msra.mxu0 0.0
  %2994 = vmatpush.msra.mxu0 0.0
  %2995 = vmatpush.msra.mxu0 0.0
  %2996 = vmatpush.msra.mxu0 0.0
  %2997 = vmatpush.msra.mxu0 0.0
  %2998 = vmatpush.msra.mxu0 0.0
  %2999 = vmatpush.msra.mxu0 %v2979
  %3000 = vmatpush.msra.mxu0 %v2978
  %3001 = vmatpush.msra.mxu0 %v2977
  %3002 = vmatpush.msra.mxu0 %v2976
  %3003 = vmatpush.msra.mxu0 %v2975
  %3004 = vmatmul.f32.gmra.mxu0 %v2986
  %v3005 = vpop.f32.mrf.mxu0
  %v3006 = vadd.f32 %v2982, %v3005
  %3007 = vdwg.mxu0
  %vm3008 = vcmask 15360
  %v3009 = vsel %vm3008, %v3006, -inf
  %3010 = vmax.xlane.f32.xlu0 %v3009
  %v3011 = vpop.xlane.xlu0 %3010
  %v3012 = vsub.f32 %v3006, %v3011
  %v3013 = vmul.f32 %v3012, 1.442695
  %v3014 = vpow.pop %v3013
  %v3015 = vsel %vm3008, %v3014, 0.0
  %3016 = vadd.xlane.f32.xlu0 %v3015
  %v3017 = vpop.xlane.xlu0 %3016
  %v3018 = vrcp.pop %v3017
  %v3019 = vmul.f32 %v3017, %v3018
  %v3020 = vsub.f32 1.0, %v3019
  %v3021 = vmul.f32 %v3018, %v3020
  %v3022 = vadd.f32 %v3018, %v3021
  %vm3023 = vweird.f32 %v3017
  %vm3024 = vweird.f32 %v3018
  %vm3025 = vmor %vm3023, %vm3024
  %v3026 = vsel %vm3025, %v3018, %v3022
  %v3027 = vand.u32 2147483647, %v3017
  %vm3028 = vcmp.eq.f32.partialorder %v3027, 8.507059e+37
  %v3029 = vand.u32 %v3017, 2147483648
  %v3030 = vor.u32 1.1754944e-38, %v3029
  %v3031 = vsel %vm3028, %v3030, %v3026
  %v3032 = vmul.f32 %v3014, %v3031
  %3033 = vst.msk [vmem:[%s11] sm:$0xff] %vm3008, %v3032
  // Predicated region
  $region46: #{crnn_cla_forward.1} parent=0 // pred_check
    _
  $region47: #{crnn_cla_forward.1} parent=0 // pred_check_branch
    %3035 = sbr.rel (0) target = $region49
  $region48: #{crnn_cla_forward.1} parent=0 // pred_region
    _
  $region49: #{crnn_cla_forward.1} parent=0 // pred_fallthru
    _
  // Predicated region
  $region50: #{crnn_cla_forward.1} parent=0 // pred_check
    _
  $region51: #{crnn_cla_forward.1} parent=0 // pred_check_branch
    %3037 = sbr.rel (0) target = $region53
  $region52: #{crnn_cla_forward.1} parent=0 // pred_region
    _
  $region53: #{crnn_cla_forward.1} parent=0 // pred_fallthru
    _

</llo_original>
